<compile_context>
chip_gen: v7x
topology: tpu7x:2x2x1
jax: 0.10.0
libtpu: 0.0.40
codegen_flags: <defaults>
</compile_context>

<pallas_src>
import functools

import numpy as np

import jax
import jax.numpy as jnp
from jax.experimental import pallas as pl
from jax.experimental.pallas import tpu as pltpu


# ------------------------- Fused Pallas kernel -------------------------

def _decoder_kernel(x_ref, lw_ref, lb_ref, cw_ref, cb_ref, bg_ref, bb_ref,
                    ow_ref, ob_ref, m_ref, o_ref, hpad, *, W, lpad):
    # x_ref : (B, K)            SMEM (scalars for the linear layer)
    # lw_ref: (K, C, H*W)       linear weight, channel-major planes
    # lb_ref: (C, H*W)          linear bias, channel-major
    # cw_ref: (L, 9, C, C)      per-layer, per-tap conv weights (Cout, Cin)
    # cb_ref/bg_ref/bb_ref: (L, C, 1)
    # ow_ref: (9, OC, C), ob_ref: (OC, 1)
    # m_ref : (9, 1, B*H*W)     per-tap boundary masks (0/1 f32, compile-time constants)
    # o_ref : (OC, B*H*W)       lane-dense output
    # hpad  : (C, lpad + B*H*W + lpad) VMEM scratch; halo outside the interior stays zero.
    B, K = x_ref.shape
    C, HW = lb_ref.shape
    L = cw_ref.shape[0]
    OC = o_ref.shape[0]
    BHW = B * HW

    # Zero the lane-padded scratch once; only the interior [lpad, lpad+BHW) is ever rewritten.
    hpad[...] = jnp.zeros_like(hpad)

    # ---------------- Linear + ReLU, directly channel-major ----------------
    # h[c, b*HW + hw] = relu( sum_k x[b, k] * lw[k, c, hw] + lb[c, hw] )
    lb = lb_ref[...]                                   # (C, HW)
    accs = [lb for _ in range(B)]
    for k in range(K):
        lwk = lw_ref[k]                                # (C, HW)
        for b in range(B):
            accs[b] = accs[b] + lwk * x_ref[b, k]      # scalar (SMEM) * vector FMA
    for b in range(B):
        hpad[:, lpad + b * HW: lpad + (b + 1) * HW] = jnp.maximum(accs[b], 0.0)

    # ---------------- 3x3 "SAME" conv as 9 per-tap matmuls ----------------
    def conv3x3(wget, cout):
        acc = jnp.zeros((cout, BHW), jnp.float32)
        for di in range(3):
            for dj in range(3):
                t = di * 3 + dj
                s = (di - 1) * W + (dj - 1)
                tap = hpad[:, lpad + s: lpad + s + BHW]        # (C, BHW) lane window
                if (di, dj) != (1, 1):
                    tap = tap * m_ref[t]                        # zero invalid halo columns
                acc = acc + jnp.dot(wget(t), tap,
                                    preferred_element_type=jnp.float32)
        return acc

    # -------- num_layers x [Conv -> BatchNorm(train stats) -> ReLU] --------
    for l in range(L):
        y = conv3x3(lambda t, l=l: cw_ref[l, t], C) + cb_ref[l]        # (C, BHW)
        mean = jnp.mean(y, axis=1, keepdims=True)                       # per-channel over B*H*W
        var = jnp.mean(jnp.square(y - mean), axis=1, keepdims=True)
        y = (y - mean) * jax.lax.rsqrt(var + 1e-5) * bg_ref[l] + bb_ref[l]
        y = jnp.maximum(y, 0.0)
        hpad[:, lpad: lpad + BHW] = y                                   # aligned full-lane store

    # ---- final Conv2d(C, out_C, 3, pad=1); output_act='sigmoid' -> Identity branch ----
    o_ref[...] = conv3x3(lambda t: ow_ref[t], OC) + ob_ref[...]         # (OC, BHW) lane-dense


# ------------------------- One-time parameter prep (outside jit) -------------------------

def prepare_params(params, *, num_layers, channels, init_size, out_channels):
    C, S = channels, init_size
    HW = S * S
    prep = {
        # Linear weight as per-k channel-major planes (K, C, HW); bias as (C, HW).
        "lin_w": params["lin_w"].reshape(-1, C, HW),
        "lin_b": params["lin_b"].reshape(C, HW),
        # Conv weights HWIO (3,3,Cin,Cout) -> per-tap (Cout, Cin), tap index t = di*3+dj.
        "convw": jnp.stack([
            jnp.transpose(params[f"conv{l}_w"], (0, 1, 3, 2)).reshape(9, C, C)
            for l in range(num_layers)]),
        "convb": jnp.stack([params[f"conv{l}_b"].reshape(C, 1) for l in range(num_layers)]),
        "bng": jnp.stack([params[f"bn{l}_g"].reshape(C, 1) for l in range(num_layers)]),
        "bnb": jnp.stack([params[f"bn{l}_b"].reshape(C, 1) for l in range(num_layers)]),
        "outw": jnp.transpose(params["out_w"], (0, 1, 3, 2)).reshape(9, out_channels, C),
        "outb": params["out_b"].reshape(out_channels, 1),
    }
    return jax.tree_util.tree_map(lambda a: jnp.asarray(a, jnp.float32), prep)


def _make_tap_masks(B, H, W):
    """0/1 masks (9, 1, B*H*W): 1 where the (di,dj)-shifted source pixel is in-bounds."""
    HW = H * W
    m = np.zeros((9, 1, B * HW), np.float32)
    for di in range(3):
        for dj in range(3):
            t = di * 3 + dj
            for b in range(B):
                for i in range(H):
                    for j in range(W):
                        ii, jj = i + di - 1, j + dj - 1
                        if 0 <= ii < H and 0 <= jj < W:
                            m[t, 0, b * HW + i * W + j] = 1.0
    return m


# ------------------------- Decoder forward (single pallas_call) -------------------------

def decoder_forward(x, prep, *, init_size, out_channels):
    B, K = x.shape
    H = W = init_size
    HW = H * W
    BHW = B * HW
    C = prep["lin_b"].shape[0]
    L = prep["convw"].shape[0]
    OC = out_channels
    LPAD = 128          # >= W+1; 128 keeps the per-layer interior store lane-aligned

    masks = jnp.asarray(_make_tap_masks(B, H, W))      # trace-time constant (4.6 KiB)

    out_cm = pl.pallas_call(
        functools.partial(_decoder_kernel, W=W, lpad=LPAD),
        grid=(1,),
        out_shape=jax.ShapeDtypeStruct((OC, BHW), jnp.float32),
        in_specs=[
            pl.BlockSpec(memory_space=pltpu.MemorySpace.SMEM),       # x (read as scalars)
            pl.BlockSpec((K, C, HW), lambda i: (0, 0, 0)),           # lin_w
            pl.BlockSpec((C, HW), lambda i: (0, 0)),                 # lin_b
            pl.BlockSpec((L, 9, C, C), lambda i: (0, 0, 0, 0)),      # conv weights (per tap)
            pl.BlockSpec((L, C, 1), lambda i: (0, 0, 0)),            # conv biases
            pl.BlockSpec((L, C, 1), lambda i: (0, 0, 0)),            # bn gamma
            pl.BlockSpec((L, C, 1), lambda i: (0, 0, 0)),            # bn beta
            pl.BlockSpec((9, OC, C), lambda i: (0, 0, 0)),           # final conv weight
            pl.BlockSpec((OC, 1), lambda i: (0, 0)),                 # final conv bias
            pl.BlockSpec((9, 1, BHW), lambda i: (0, 0, 0)),          # tap masks
        ],
        out_specs=pl.BlockSpec((OC, BHW), lambda i: (0, 0)),
        scratch_shapes=[pltpu.VMEM((C, 2 * LPAD + BHW), jnp.float32)],
        compiler_params=pltpu.CompilerParams(
            dimension_semantics=("arbitrary",),
            vmem_limit_bytes=32 * 1024 * 1024),   # VMEM guard (v7x has 64 MiB physical)
    )(x, prep["lin_w"], prep["lin_b"], prep["convw"], prep["convb"],
      prep["bng"], prep["bnb"], prep["outw"], prep["outb"], masks)

    # (OC, B*H*W) -> NCHW; 2 KiB wrapper-side transpose (free).
    return out_cm.reshape(OC, B, H, W).transpose(1, 0, 2, 3)


# ------------------------- Pure-JAX reference -------------------------

def decoder_ref(x, params, *, num_layers, channels, init_size, out_channels):
    B = x.shape[0]
    dn = ("NHWC", "HWIO", "NHWC")
    h = jnp.maximum(x @ params["lin_w"] + params["lin_b"], 0.0)
    h = h.reshape(B, channels, init_size, init_size).transpose(0, 2, 3, 1)
    for l in range(num_layers):
        h = jax.lax.conv_general_dilated(h, params[f"conv{l}_w"], (1, 1), "SAME",
                                         dimension_numbers=dn) + params[f"conv{l}_b"]
        mean = jnp.mean(h, axis=(0, 1, 2), keepdims=True)
        var = jnp.mean(jnp.square(h - mean), axis=(0, 1, 2), keepdims=True)
        h = (h - mean) * jax.lax.rsqrt(var + 1e-5) * params[f"bn{l}_g"] + params[f"bn{l}_b"]
        h = jnp.maximum(h, 0.0)
    h = jax.lax.conv_general_dilated(h, params["out_w"], (1, 1), "SAME",
                                     dimension_numbers=dn) + params["out_b"]
    return h.transpose(0, 3, 1, 2)


# ------------------------- Driver -------------------------

if __name__ == "__main__":
    B, in_dim = 2, 32
    num_layers, channels, out_channels, init_size = 2, 16, 4, 8

    key = jax.random.PRNGKey(0)
    ks = jax.random.split(key, 16)

    params = {
        "lin_w": 0.1 * jax.random.normal(ks[0], (in_dim, channels * init_size ** 2), jnp.float32),
        "lin_b": 0.1 * jax.random.normal(ks[1], (channels * init_size ** 2,), jnp.float32),
        "out_w": 0.1 * jax.random.normal(ks[2], (3, 3, channels, out_channels), jnp.float32),
        "out_b": 0.1 * jax.random.normal(ks[3], (out_channels,), jnp.float32),
    }
    for l in range(num_layers):
        params[f"conv{l}_w"] = 0.1 * jax.random.normal(ks[4 + 4 * l], (3, 3, channels, channels), jnp.float32)
        params[f"conv{l}_b"] = 0.1 * jax.random.normal(ks[5 + 4 * l], (channels,), jnp.float32)
        params[f"bn{l}_g"] = jnp.ones((channels,), jnp.float32)   # BatchNorm2d default weight
        params[f"bn{l}_b"] = jnp.zeros((channels,), jnp.float32)  # BatchNorm2d default bias

    x = jax.random.normal(ks[15], (B, in_dim), jnp.float32)

    # One-time parameter preprocessing, hoisted out of the jitted forward.
    prep = prepare_params(params, num_layers=num_layers, channels=channels,
                          init_size=init_size, out_channels=out_channels)

    fwd = jax.jit(functools.partial(decoder_forward, init_size=init_size,
                                    out_channels=out_channels))
    out = jax.block_until_ready(fwd(x, prep))

    ref = decoder_ref(x, params, num_layers=num_layers, channels=channels,
                      init_size=init_size, out_channels=out_channels)
    assert out.shape == (B, out_channels, init_size, init_size), out.shape
    assert jnp.max(jnp.abs(out - ref)) < 1e-3, float(jnp.max(jnp.abs(out - ref)))

    print("KERNEL_OK")
</pallas_src>

<mosaic_0001>
module attributes {stable_mosaic.version = 11 : i64} {
  func.func @_decoder_kernel(%arg0: i32, %arg1: memref<2x32xf32, #tpu.memory_space<smem>>, %arg2: memref<32x16x64xf32, #tpu.memory_space<vmem>>, %arg3: memref<16x64xf32, #tpu.memory_space<vmem>>, %arg4: memref<2x9x16x16xf32, #tpu.memory_space<vmem>>, %arg5: memref<2x16x1xf32, #tpu.memory_space<vmem>>, %arg6: memref<2x16x1xf32, #tpu.memory_space<vmem>>, %arg7: memref<2x16x1xf32, #tpu.memory_space<vmem>>, %arg8: memref<9x4x16xf32, #tpu.memory_space<vmem>>, %arg9: memref<4x1xf32, #tpu.memory_space<vmem>>, %arg10: memref<9x1x128xf32, #tpu.memory_space<vmem>>, %arg11: memref<4x128xf32, #tpu.memory_space<vmem>>, %arg12: memref<16x384xf32, #tpu.memory_space<vmem>>) attributes {dimension_semantics = [#tpu.dimension_semantics<arbitrary>], iteration_bounds = array<i64: 1>, scalar_prefetch = 0 : i64, scratch_operands = 1 : i64, tpu.core_type = #tpu.core_type<tc>, window_params = [{transform_indices = @transform_0, window_bounds = array<i64: 2, 32>}, {pipeline_mode = #tpu.pipeline_mode<synchronous>, transform_indices = @transform_1, window_bounds = array<i64: 32, 16, 64>}, {pipeline_mode = #tpu.pipeline_mode<synchronous>, transform_indices = @transform_2, window_bounds = array<i64: 16, 64>}, {pipeline_mode = #tpu.pipeline_mode<synchronous>, transform_indices = @transform_3, window_bounds = array<i64: 2, 9, 16, 16>}, {pipeline_mode = #tpu.pipeline_mode<synchronous>, transform_indices = @transform_4, window_bounds = array<i64: 2, 16, 1>}, {pipeline_mode = #tpu.pipeline_mode<synchronous>, transform_indices = @transform_5, window_bounds = array<i64: 2, 16, 1>}, {pipeline_mode = #tpu.pipeline_mode<synchronous>, transform_indices = @transform_6, window_bounds = array<i64: 2, 16, 1>}, {pipeline_mode = #tpu.pipeline_mode<synchronous>, transform_indices = @transform_7, window_bounds = array<i64: 9, 4, 16>}, {pipeline_mode = #tpu.pipeline_mode<synchronous>, transform_indices = @transform_8, window_bounds = array<i64: 4, 1>}, {pipeline_mode = #tpu.pipeline_mode<synchronous>, transform_indices = @transform_9, window_bounds = array<i64: 9, 1, 128>}, {pipeline_mode = #tpu.pipeline_mode<synchronous>, transform_indices = @transform_10, window_bounds = array<i64: 4, 128>}]} {
    %cst = arith.constant 0.000000e+00 : f32
    %0 = vector.broadcast %cst : f32 to vector<16x384xf32>
    %c0 = arith.constant 0 : index
    %c0_0 = arith.constant 0 : index
    %1 = vector.load %arg12[%c0, %c0_0] : memref<16x384xf32, #tpu.memory_space<vmem>>, vector<16x384xf32>
    tpu.vector_store %arg12[%c0, %c0_0], %0 {strides = array<i32>} : memref<16x384xf32, #tpu.memory_space<vmem>>, vector<16x384xf32>,
    %c0_1 = arith.constant 0 : index
    %c0_2 = arith.constant 0 : index
    %2 = vector.load %arg3[%c0_1, %c0_2] : memref<16x64xf32, #tpu.memory_space<vmem>>, vector<16x64xf32>
    %c0_3 = arith.constant 0 : index
    %c0_4 = arith.constant 0 : index
    %c0_5 = arith.constant 0 : index
    %3 = vector.load %arg2[%c0_3, %c0_4, %c0_5] : memref<32x16x64xf32, #tpu.memory_space<vmem>>, vector<1x16x64xf32>
    %4 = vector.shape_cast %3 : vector<1x16x64xf32> to vector<16x64xf32>
    %c0_6 = arith.constant 0 : index
    %c0_7 = arith.constant 0 : index
    %5 = memref.load %arg1[%c0_6, %c0_7] : memref<2x32xf32, #tpu.memory_space<smem>>
    %6 = vector.broadcast %5 : f32 to vector<16x64xf32>
    %7 = arith.mulf %4, %6 : vector<16x64xf32>
    %8 = arith.addf %2, %7 : vector<16x64xf32>
    %c1 = arith.constant 1 : index
    %c0_8 = arith.constant 0 : index
    %9 = memref.load %arg1[%c1, %c0_8] : memref<2x32xf32, #tpu.memory_space<smem>>
    %10 = vector.broadcast %9 : f32 to vector<16x64xf32>
    %11 = arith.mulf %4, %10 : vector<16x64xf32>
    %12 = arith.addf %2, %11 : vector<16x64xf32>
    %c1_9 = arith.constant 1 : index
    %c0_10 = arith.constant 0 : index
    %c0_11 = arith.constant 0 : index
    %13 = vector.load %arg2[%c1_9, %c0_10, %c0_11] : memref<32x16x64xf32, #tpu.memory_space<vmem>>, vector<1x16x64xf32>
    %14 = vector.shape_cast %13 : vector<1x16x64xf32> to vector<16x64xf32>
    %c0_12 = arith.constant 0 : index
    %c1_13 = arith.constant 1 : index
    %15 = memref.load %arg1[%c0_12, %c1_13] : memref<2x32xf32, #tpu.memory_space<smem>>
    %16 = vector.broadcast %15 : f32 to vector<16x64xf32>
    %17 = arith.mulf %14, %16 : vector<16x64xf32>
    %18 = arith.addf %8, %17 : vector<16x64xf32>
    %c1_14 = arith.constant 1 : index
    %c1_15 = arith.constant 1 : index
    %19 = memref.load %arg1[%c1_14, %c1_15] : memref<2x32xf32, #tpu.memory_space<smem>>
    %20 = vector.broadcast %19 : f32 to vector<16x64xf32>
    %21 = arith.mulf %14, %20 : vector<16x64xf32>
    %22 = arith.addf %12, %21 : vector<16x64xf32>
    %c2 = arith.constant 2 : index
    %c0_16 = arith.constant 0 : index
    %c0_17 = arith.constant 0 : index
    %23 = vector.load %arg2[%c2, %c0_16, %c0_17] : memref<32x16x64xf32, #tpu.memory_space<vmem>>, vector<1x16x64xf32>
    %24 = vector.shape_cast %23 : vector<1x16x64xf32> to vector<16x64xf32>
    %c0_18 = arith.constant 0 : index
    %c2_19 = arith.constant 2 : index
    %25 = memref.load %arg1[%c0_18, %c2_19] : memref<2x32xf32, #tpu.memory_space<smem>>
    %26 = vector.broadcast %25 : f32 to vector<16x64xf32>
    %27 = arith.mulf %24, %26 : vector<16x64xf32>
    %28 = arith.addf %18, %27 : vector<16x64xf32>
    %c1_20 = arith.constant 1 : index
    %c2_21 = arith.constant 2 : index
    %29 = memref.load %arg1[%c1_20, %c2_21] : memref<2x32xf32, #tpu.memory_space<smem>>
    %30 = vector.broadcast %29 : f32 to vector<16x64xf32>
    %31 = arith.mulf %24, %30 : vector<16x64xf32>
    %32 = arith.addf %22, %31 : vector<16x64xf32>
    %c3 = arith.constant 3 : index
    %c0_22 = arith.constant 0 : index
    %c0_23 = arith.constant 0 : index
    %33 = vector.load %arg2[%c3, %c0_22, %c0_23] : memref<32x16x64xf32, #tpu.memory_space<vmem>>, vector<1x16x64xf32>
    %34 = vector.shape_cast %33 : vector<1x16x64xf32> to vector<16x64xf32>
    %c0_24 = arith.constant 0 : index
    %c3_25 = arith.constant 3 : index
    %35 = memref.load %arg1[%c0_24, %c3_25] : memref<2x32xf32, #tpu.memory_space<smem>>
    %36 = vector.broadcast %35 : f32 to vector<16x64xf32>
    %37 = arith.mulf %34, %36 : vector<16x64xf32>
    %38 = arith.addf %28, %37 : vector<16x64xf32>
    %c1_26 = arith.constant 1 : index
    %c3_27 = arith.constant 3 : index
    %39 = memref.load %arg1[%c1_26, %c3_27] : memref<2x32xf32, #tpu.memory_space<smem>>
    %40 = vector.broadcast %39 : f32 to vector<16x64xf32>
    %41 = arith.mulf %34, %40 : vector<16x64xf32>
    %42 = arith.addf %32, %41 : vector<16x64xf32>
    %c4 = arith.constant 4 : index
    %c0_28 = arith.constant 0 : index
    %c0_29 = arith.constant 0 : index
    %43 = vector.load %arg2[%c4, %c0_28, %c0_29] : memref<32x16x64xf32, #tpu.memory_space<vmem>>, vector<1x16x64xf32>
    %44 = vector.shape_cast %43 : vector<1x16x64xf32> to vector<16x64xf32>
    %c0_30 = arith.constant 0 : index
    %c4_31 = arith.constant 4 : index
    %45 = memref.load %arg1[%c0_30, %c4_31] : memref<2x32xf32, #tpu.memory_space<smem>>
    %46 = vector.broadcast %45 : f32 to vector<16x64xf32>
    %47 = arith.mulf %44, %46 : vector<16x64xf32>
    %48 = arith.addf %38, %47 : vector<16x64xf32>
    %c1_32 = arith.constant 1 : index
    %c4_33 = arith.constant 4 : index
    %49 = memref.load %arg1[%c1_32, %c4_33] : memref<2x32xf32, #tpu.memory_space<smem>>
    %50 = vector.broadcast %49 : f32 to vector<16x64xf32>
    %51 = arith.mulf %44, %50 : vector<16x64xf32>
    %52 = arith.addf %42, %51 : vector<16x64xf32>
    %c5 = arith.constant 5 : index
    %c0_34 = arith.constant 0 : index
    %c0_35 = arith.constant 0 : index
    %53 = vector.load %arg2[%c5, %c0_34, %c0_35] : memref<32x16x64xf32, #tpu.memory_space<vmem>>, vector<1x16x64xf32>
    %54 = vector.shape_cast %53 : vector<1x16x64xf32> to vector<16x64xf32>
    %c0_36 = arith.constant 0 : index
    %c5_37 = arith.constant 5 : index
    %55 = memref.load %arg1[%c0_36, %c5_37] : memref<2x32xf32, #tpu.memory_space<smem>>
    %56 = vector.broadcast %55 : f32 to vector<16x64xf32>
    %57 = arith.mulf %54, %56 : vector<16x64xf32>
    %58 = arith.addf %48, %57 : vector<16x64xf32>
    %c1_38 = arith.constant 1 : index
    %c5_39 = arith.constant 5 : index
    %59 = memref.load %arg1[%c1_38, %c5_39] : memref<2x32xf32, #tpu.memory_space<smem>>
    %60 = vector.broadcast %59 : f32 to vector<16x64xf32>
    %61 = arith.mulf %54, %60 : vector<16x64xf32>
    %62 = arith.addf %52, %61 : vector<16x64xf32>
    %c6 = arith.constant 6 : index
    %c0_40 = arith.constant 0 : index
    %c0_41 = arith.constant 0 : index
    %63 = vector.load %arg2[%c6, %c0_40, %c0_41] : memref<32x16x64xf32, #tpu.memory_space<vmem>>, vector<1x16x64xf32>
    %64 = vector.shape_cast %63 : vector<1x16x64xf32> to vector<16x64xf32>
    %c0_42 = arith.constant 0 : index
    %c6_43 = arith.constant 6 : index
    %65 = memref.load %arg1[%c0_42, %c6_43] : memref<2x32xf32, #tpu.memory_space<smem>>
    %66 = vector.broadcast %65 : f32 to vector<16x64xf32>
    %67 = arith.mulf %64, %66 : vector<16x64xf32>
    %68 = arith.addf %58, %67 : vector<16x64xf32>
    %c1_44 = arith.constant 1 : index
    %c6_45 = arith.constant 6 : index
    %69 = memref.load %arg1[%c1_44, %c6_45] : memref<2x32xf32, #tpu.memory_space<smem>>
    %70 = vector.broadcast %69 : f32 to vector<16x64xf32>
    %71 = arith.mulf %64, %70 : vector<16x64xf32>
    %72 = arith.addf %62, %71 : vector<16x64xf32>
    %c7 = arith.constant 7 : index
    %c0_46 = arith.constant 0 : index
    %c0_47 = arith.constant 0 : index
    %73 = vector.load %arg2[%c7, %c0_46, %c0_47] : memref<32x16x64xf32, #tpu.memory_space<vmem>>, vector<1x16x64xf32>
    %74 = vector.shape_cast %73 : vector<1x16x64xf32> to vector<16x64xf32>
    %c0_48 = arith.constant 0 : index
    %c7_49 = arith.constant 7 : index
    %75 = memref.load %arg1[%c0_48, %c7_49] : memref<2x32xf32, #tpu.memory_space<smem>>
    %76 = vector.broadcast %75 : f32 to vector<16x64xf32>
    %77 = arith.mulf %74, %76 : vector<16x64xf32>
    %78 = arith.addf %68, %77 : vector<16x64xf32>
    %c1_50 = arith.constant 1 : index
    %c7_51 = arith.constant 7 : index
    %79 = memref.load %arg1[%c1_50, %c7_51] : memref<2x32xf32, #tpu.memory_space<smem>>
    %80 = vector.broadcast %79 : f32 to vector<16x64xf32>
    %81 = arith.mulf %74, %80 : vector<16x64xf32>
    %82 = arith.addf %72, %81 : vector<16x64xf32>
    %c8 = arith.constant 8 : index
    %c0_52 = arith.constant 0 : index
    %c0_53 = arith.constant 0 : index
    %83 = vector.load %arg2[%c8, %c0_52, %c0_53] : memref<32x16x64xf32, #tpu.memory_space<vmem>>, vector<1x16x64xf32>
    %84 = vector.shape_cast %83 : vector<1x16x64xf32> to vector<16x64xf32>
    %c0_54 = arith.constant 0 : index
    %c8_55 = arith.constant 8 : index
    %85 = memref.load %arg1[%c0_54, %c8_55] : memref<2x32xf32, #tpu.memory_space<smem>>
    %86 = vector.broadcast %85 : f32 to vector<16x64xf32>
    %87 = arith.mulf %84, %86 : vector<16x64xf32>
    %88 = arith.addf %78, %87 : vector<16x64xf32>
    %c1_56 = arith.constant 1 : index
    %c8_57 = arith.constant 8 : index
    %89 = memref.load %arg1[%c1_56, %c8_57] : memref<2x32xf32, #tpu.memory_space<smem>>
    %90 = vector.broadcast %89 : f32 to vector<16x64xf32>
    %91 = arith.mulf %84, %90 : vector<16x64xf32>
    %92 = arith.addf %82, %91 : vector<16x64xf32>
    %c9 = arith.constant 9 : index
    %c0_58 = arith.constant 0 : index
    %c0_59 = arith.constant 0 : index
    %93 = vector.load %arg2[%c9, %c0_58, %c0_59] : memref<32x16x64xf32, #tpu.memory_space<vmem>>, vector<1x16x64xf32>
    %94 = vector.shape_cast %93 : vector<1x16x64xf32> to vector<16x64xf32>
    %c0_60 = arith.constant 0 : index
    %c9_61 = arith.constant 9 : index
    %95 = memref.load %arg1[%c0_60, %c9_61] : memref<2x32xf32, #tpu.memory_space<smem>>
    %96 = vector.broadcast %95 : f32 to vector<16x64xf32>
    %97 = arith.mulf %94, %96 : vector<16x64xf32>
    %98 = arith.addf %88, %97 : vector<16x64xf32>
    %c1_62 = arith.constant 1 : index
    %c9_63 = arith.constant 9 : index
    %99 = memref.load %arg1[%c1_62, %c9_63] : memref<2x32xf32, #tpu.memory_space<smem>>
    %100 = vector.broadcast %99 : f32 to vector<16x64xf32>
    %101 = arith.mulf %94, %100 : vector<16x64xf32>
    %102 = arith.addf %92, %101 : vector<16x64xf32>
    %c10 = arith.constant 10 : index
    %c0_64 = arith.constant 0 : index
    %c0_65 = arith.constant 0 : index
    %103 = vector.load %arg2[%c10, %c0_64, %c0_65] : memref<32x16x64xf32, #tpu.memory_space<vmem>>, vector<1x16x64xf32>
    %104 = vector.shape_cast %103 : vector<1x16x64xf32> to vector<16x64xf32>
    %c0_66 = arith.constant 0 : index
    %c10_67 = arith.constant 10 : index
    %105 = memref.load %arg1[%c0_66, %c10_67] : memref<2x32xf32, #tpu.memory_space<smem>>
    %106 = vector.broadcast %105 : f32 to vector<16x64xf32>
    %107 = arith.mulf %104, %106 : vector<16x64xf32>
    %108 = arith.addf %98, %107 : vector<16x64xf32>
    %c1_68 = arith.constant 1 : index
    %c10_69 = arith.constant 10 : index
    %109 = memref.load %arg1[%c1_68, %c10_69] : memref<2x32xf32, #tpu.memory_space<smem>>
    %110 = vector.broadcast %109 : f32 to vector<16x64xf32>
    %111 = arith.mulf %104, %110 : vector<16x64xf32>
    %112 = arith.addf %102, %111 : vector<16x64xf32>
    %c11 = arith.constant 11 : index
    %c0_70 = arith.constant 0 : index
    %c0_71 = arith.constant 0 : index
    %113 = vector.load %arg2[%c11, %c0_70, %c0_71] : memref<32x16x64xf32, #tpu.memory_space<vmem>>, vector<1x16x64xf32>
    %114 = vector.shape_cast %113 : vector<1x16x64xf32> to vector<16x64xf32>
    %c0_72 = arith.constant 0 : index
    %c11_73 = arith.constant 11 : index
    %115 = memref.load %arg1[%c0_72, %c11_73] : memref<2x32xf32, #tpu.memory_space<smem>>
    %116 = vector.broadcast %115 : f32 to vector<16x64xf32>
    %117 = arith.mulf %114, %116 : vector<16x64xf32>
    %118 = arith.addf %108, %117 : vector<16x64xf32>
    %c1_74 = arith.constant 1 : index
    %c11_75 = arith.constant 11 : index
    %119 = memref.load %arg1[%c1_74, %c11_75] : memref<2x32xf32, #tpu.memory_space<smem>>
    %120 = vector.broadcast %119 : f32 to vector<16x64xf32>
    %121 = arith.mulf %114, %120 : vector<16x64xf32>
    %122 = arith.addf %112, %121 : vector<16x64xf32>
    %c12 = arith.constant 12 : index
    %c0_76 = arith.constant 0 : index
    %c0_77 = arith.constant 0 : index
    %123 = vector.load %arg2[%c12, %c0_76, %c0_77] : memref<32x16x64xf32, #tpu.memory_space<vmem>>, vector<1x16x64xf32>
    %124 = vector.shape_cast %123 : vector<1x16x64xf32> to vector<16x64xf32>
    %c0_78 = arith.constant 0 : index
    %c12_79 = arith.constant 12 : index
    %125 = memref.load %arg1[%c0_78, %c12_79] : memref<2x32xf32, #tpu.memory_space<smem>>
    %126 = vector.broadcast %125 : f32 to vector<16x64xf32>
    %127 = arith.mulf %124, %126 : vector<16x64xf32>
    %128 = arith.addf %118, %127 : vector<16x64xf32>
    %c1_80 = arith.constant 1 : index
    %c12_81 = arith.constant 12 : index
    %129 = memref.load %arg1[%c1_80, %c12_81] : memref<2x32xf32, #tpu.memory_space<smem>>
    %130 = vector.broadcast %129 : f32 to vector<16x64xf32>
    %131 = arith.mulf %124, %130 : vector<16x64xf32>
    %132 = arith.addf %122, %131 : vector<16x64xf32>
    %c13 = arith.constant 13 : index
    %c0_82 = arith.constant 0 : index
    %c0_83 = arith.constant 0 : index
    %133 = vector.load %arg2[%c13, %c0_82, %c0_83] : memref<32x16x64xf32, #tpu.memory_space<vmem>>, vector<1x16x64xf32>
    %134 = vector.shape_cast %133 : vector<1x16x64xf32> to vector<16x64xf32>
    %c0_84 = arith.constant 0 : index
    %c13_85 = arith.constant 13 : index
    %135 = memref.load %arg1[%c0_84, %c13_85] : memref<2x32xf32, #tpu.memory_space<smem>>
    %136 = vector.broadcast %135 : f32 to vector<16x64xf32>
    %137 = arith.mulf %134, %136 : vector<16x64xf32>
    %138 = arith.addf %128, %137 : vector<16x64xf32>
    %c1_86 = arith.constant 1 : index
    %c13_87 = arith.constant 13 : index
    %139 = memref.load %arg1[%c1_86, %c13_87] : memref<2x32xf32, #tpu.memory_space<smem>>
    %140 = vector.broadcast %139 : f32 to vector<16x64xf32>
    %141 = arith.mulf %134, %140 : vector<16x64xf32>
    %142 = arith.addf %132, %141 : vector<16x64xf32>
    %c14 = arith.constant 14 : index
    %c0_88 = arith.constant 0 : index
    %c0_89 = arith.constant 0 : index
    %143 = vector.load %arg2[%c14, %c0_88, %c0_89] : memref<32x16x64xf32, #tpu.memory_space<vmem>>, vector<1x16x64xf32>
    %144 = vector.shape_cast %143 : vector<1x16x64xf32> to vector<16x64xf32>
    %c0_90 = arith.constant 0 : index
    %c14_91 = arith.constant 14 : index
    %145 = memref.load %arg1[%c0_90, %c14_91] : memref<2x32xf32, #tpu.memory_space<smem>>
    %146 = vector.broadcast %145 : f32 to vector<16x64xf32>
    %147 = arith.mulf %144, %146 : vector<16x64xf32>
    %148 = arith.addf %138, %147 : vector<16x64xf32>
    %c1_92 = arith.constant 1 : index
    %c14_93 = arith.constant 14 : index
    %149 = memref.load %arg1[%c1_92, %c14_93] : memref<2x32xf32, #tpu.memory_space<smem>>
    %150 = vector.broadcast %149 : f32 to vector<16x64xf32>
    %151 = arith.mulf %144, %150 : vector<16x64xf32>
    %152 = arith.addf %142, %151 : vector<16x64xf32>
    %c15 = arith.constant 15 : index
    %c0_94 = arith.constant 0 : index
    %c0_95 = arith.constant 0 : index
    %153 = vector.load %arg2[%c15, %c0_94, %c0_95] : memref<32x16x64xf32, #tpu.memory_space<vmem>>, vector<1x16x64xf32>
    %154 = vector.shape_cast %153 : vector<1x16x64xf32> to vector<16x64xf32>
    %c0_96 = arith.constant 0 : index
    %c15_97 = arith.constant 15 : index
    %155 = memref.load %arg1[%c0_96, %c15_97] : memref<2x32xf32, #tpu.memory_space<smem>>
    %156 = vector.broadcast %155 : f32 to vector<16x64xf32>
    %157 = arith.mulf %154, %156 : vector<16x64xf32>
    %158 = arith.addf %148, %157 : vector<16x64xf32>
    %c1_98 = arith.constant 1 : index
    %c15_99 = arith.constant 15 : index
    %159 = memref.load %arg1[%c1_98, %c15_99] : memref<2x32xf32, #tpu.memory_space<smem>>
    %160 = vector.broadcast %159 : f32 to vector<16x64xf32>
    %161 = arith.mulf %154, %160 : vector<16x64xf32>
    %162 = arith.addf %152, %161 : vector<16x64xf32>
    %c16 = arith.constant 16 : index
    %c0_100 = arith.constant 0 : index
    %c0_101 = arith.constant 0 : index
    %163 = vector.load %arg2[%c16, %c0_100, %c0_101] : memref<32x16x64xf32, #tpu.memory_space<vmem>>, vector<1x16x64xf32>
    %164 = vector.shape_cast %163 : vector<1x16x64xf32> to vector<16x64xf32>
    %c0_102 = arith.constant 0 : index
    %c16_103 = arith.constant 16 : index
    %165 = memref.load %arg1[%c0_102, %c16_103] : memref<2x32xf32, #tpu.memory_space<smem>>
    %166 = vector.broadcast %165 : f32 to vector<16x64xf32>
    %167 = arith.mulf %164, %166 : vector<16x64xf32>
    %168 = arith.addf %158, %167 : vector<16x64xf32>
    %c1_104 = arith.constant 1 : index
    %c16_105 = arith.constant 16 : index
    %169 = memref.load %arg1[%c1_104, %c16_105] : memref<2x32xf32, #tpu.memory_space<smem>>
    %170 = vector.broadcast %169 : f32 to vector<16x64xf32>
    %171 = arith.mulf %164, %170 : vector<16x64xf32>
    %172 = arith.addf %162, %171 : vector<16x64xf32>
    %c17 = arith.constant 17 : index
    %c0_106 = arith.constant 0 : index
    %c0_107 = arith.constant 0 : index
    %173 = vector.load %arg2[%c17, %c0_106, %c0_107] : memref<32x16x64xf32, #tpu.memory_space<vmem>>, vector<1x16x64xf32>
    %174 = vector.shape_cast %173 : vector<1x16x64xf32> to vector<16x64xf32>
    %c0_108 = arith.constant 0 : index
    %c17_109 = arith.constant 17 : index
    %175 = memref.load %arg1[%c0_108, %c17_109] : memref<2x32xf32, #tpu.memory_space<smem>>
    %176 = vector.broadcast %175 : f32 to vector<16x64xf32>
    %177 = arith.mulf %174, %176 : vector<16x64xf32>
    %178 = arith.addf %168, %177 : vector<16x64xf32>
    %c1_110 = arith.constant 1 : index
    %c17_111 = arith.constant 17 : index
    %179 = memref.load %arg1[%c1_110, %c17_111] : memref<2x32xf32, #tpu.memory_space<smem>>
    %180 = vector.broadcast %179 : f32 to vector<16x64xf32>
    %181 = arith.mulf %174, %180 : vector<16x64xf32>
    %182 = arith.addf %172, %181 : vector<16x64xf32>
    %c18 = arith.constant 18 : index
    %c0_112 = arith.constant 0 : index
    %c0_113 = arith.constant 0 : index
    %183 = vector.load %arg2[%c18, %c0_112, %c0_113] : memref<32x16x64xf32, #tpu.memory_space<vmem>>, vector<1x16x64xf32>
    %184 = vector.shape_cast %183 : vector<1x16x64xf32> to vector<16x64xf32>
    %c0_114 = arith.constant 0 : index
    %c18_115 = arith.constant 18 : index
    %185 = memref.load %arg1[%c0_114, %c18_115] : memref<2x32xf32, #tpu.memory_space<smem>>
    %186 = vector.broadcast %185 : f32 to vector<16x64xf32>
    %187 = arith.mulf %184, %186 : vector<16x64xf32>
    %188 = arith.addf %178, %187 : vector<16x64xf32>
    %c1_116 = arith.constant 1 : index
    %c18_117 = arith.constant 18 : index
    %189 = memref.load %arg1[%c1_116, %c18_117] : memref<2x32xf32, #tpu.memory_space<smem>>
    %190 = vector.broadcast %189 : f32 to vector<16x64xf32>
    %191 = arith.mulf %184, %190 : vector<16x64xf32>
    %192 = arith.addf %182, %191 : vector<16x64xf32>
    %c19 = arith.constant 19 : index
    %c0_118 = arith.constant 0 : index
    %c0_119 = arith.constant 0 : index
    %193 = vector.load %arg2[%c19, %c0_118, %c0_119] : memref<32x16x64xf32, #tpu.memory_space<vmem>>, vector<1x16x64xf32>
    %194 = vector.shape_cast %193 : vector<1x16x64xf32> to vector<16x64xf32>
    %c0_120 = arith.constant 0 : index
    %c19_121 = arith.constant 19 : index
    %195 = memref.load %arg1[%c0_120, %c19_121] : memref<2x32xf32, #tpu.memory_space<smem>>
    %196 = vector.broadcast %195 : f32 to vector<16x64xf32>
    %197 = arith.mulf %194, %196 : vector<16x64xf32>
    %198 = arith.addf %188, %197 : vector<16x64xf32>
    %c1_122 = arith.constant 1 : index
    %c19_123 = arith.constant 19 : index
    %199 = memref.load %arg1[%c1_122, %c19_123] : memref<2x32xf32, #tpu.memory_space<smem>>
    %200 = vector.broadcast %199 : f32 to vector<16x64xf32>
    %201 = arith.mulf %194, %200 : vector<16x64xf32>
    %202 = arith.addf %192, %201 : vector<16x64xf32>
    %c20 = arith.constant 20 : index
    %c0_124 = arith.constant 0 : index
    %c0_125 = arith.constant 0 : index
    %203 = vector.load %arg2[%c20, %c0_124, %c0_125] : memref<32x16x64xf32, #tpu.memory_space<vmem>>, vector<1x16x64xf32>
    %204 = vector.shape_cast %203 : vector<1x16x64xf32> to vector<16x64xf32>
    %c0_126 = arith.constant 0 : index
    %c20_127 = arith.constant 20 : index
    %205 = memref.load %arg1[%c0_126, %c20_127] : memref<2x32xf32, #tpu.memory_space<smem>>
    %206 = vector.broadcast %205 : f32 to vector<16x64xf32>
    %207 = arith.mulf %204, %206 : vector<16x64xf32>
    %208 = arith.addf %198, %207 : vector<16x64xf32>
    %c1_128 = arith.constant 1 : index
    %c20_129 = arith.constant 20 : index
    %209 = memref.load %arg1[%c1_128, %c20_129] : memref<2x32xf32, #tpu.memory_space<smem>>
    %210 = vector.broadcast %209 : f32 to vector<16x64xf32>
    %211 = arith.mulf %204, %210 : vector<16x64xf32>
    %212 = arith.addf %202, %211 : vector<16x64xf32>
    %c21 = arith.constant 21 : index
    %c0_130 = arith.constant 0 : index
    %c0_131 = arith.constant 0 : index
    %213 = vector.load %arg2[%c21, %c0_130, %c0_131] : memref<32x16x64xf32, #tpu.memory_space<vmem>>, vector<1x16x64xf32>
    %214 = vector.shape_cast %213 : vector<1x16x64xf32> to vector<16x64xf32>
    %c0_132 = arith.constant 0 : index
    %c21_133 = arith.constant 21 : index
    %215 = memref.load %arg1[%c0_132, %c21_133] : memref<2x32xf32, #tpu.memory_space<smem>>
    %216 = vector.broadcast %215 : f32 to vector<16x64xf32>
    %217 = arith.mulf %214, %216 : vector<16x64xf32>
    %218 = arith.addf %208, %217 : vector<16x64xf32>
    %c1_134 = arith.constant 1 : index
    %c21_135 = arith.constant 21 : index
    %219 = memref.load %arg1[%c1_134, %c21_135] : memref<2x32xf32, #tpu.memory_space<smem>>
    %220 = vector.broadcast %219 : f32 to vector<16x64xf32>
    %221 = arith.mulf %214, %220 : vector<16x64xf32>
    %222 = arith.addf %212, %221 : vector<16x64xf32>
    %c22 = arith.constant 22 : index
    %c0_136 = arith.constant 0 : index
    %c0_137 = arith.constant 0 : index
    %223 = vector.load %arg2[%c22, %c0_136, %c0_137] : memref<32x16x64xf32, #tpu.memory_space<vmem>>, vector<1x16x64xf32>
    %224 = vector.shape_cast %223 : vector<1x16x64xf32> to vector<16x64xf32>
    %c0_138 = arith.constant 0 : index
    %c22_139 = arith.constant 22 : index
    %225 = memref.load %arg1[%c0_138, %c22_139] : memref<2x32xf32, #tpu.memory_space<smem>>
    %226 = vector.broadcast %225 : f32 to vector<16x64xf32>
    %227 = arith.mulf %224, %226 : vector<16x64xf32>
    %228 = arith.addf %218, %227 : vector<16x64xf32>
    %c1_140 = arith.constant 1 : index
    %c22_141 = arith.constant 22 : index
    %229 = memref.load %arg1[%c1_140, %c22_141] : memref<2x32xf32, #tpu.memory_space<smem>>
    %230 = vector.broadcast %229 : f32 to vector<16x64xf32>
    %231 = arith.mulf %224, %230 : vector<16x64xf32>
    %232 = arith.addf %222, %231 : vector<16x64xf32>
    %c23 = arith.constant 23 : index
    %c0_142 = arith.constant 0 : index
    %c0_143 = arith.constant 0 : index
    %233 = vector.load %arg2[%c23, %c0_142, %c0_143] : memref<32x16x64xf32, #tpu.memory_space<vmem>>, vector<1x16x64xf32>
    %234 = vector.shape_cast %233 : vector<1x16x64xf32> to vector<16x64xf32>
    %c0_144 = arith.constant 0 : index
    %c23_145 = arith.constant 23 : index
    %235 = memref.load %arg1[%c0_144, %c23_145] : memref<2x32xf32, #tpu.memory_space<smem>>
    %236 = vector.broadcast %235 : f32 to vector<16x64xf32>
    %237 = arith.mulf %234, %236 : vector<16x64xf32>
    %238 = arith.addf %228, %237 : vector<16x64xf32>
    %c1_146 = arith.constant 1 : index
    %c23_147 = arith.constant 23 : index
    %239 = memref.load %arg1[%c1_146, %c23_147] : memref<2x32xf32, #tpu.memory_space<smem>>
    %240 = vector.broadcast %239 : f32 to vector<16x64xf32>
    %241 = arith.mulf %234, %240 : vector<16x64xf32>
    %242 = arith.addf %232, %241 : vector<16x64xf32>
    %c24 = arith.constant 24 : index
    %c0_148 = arith.constant 0 : index
    %c0_149 = arith.constant 0 : index
    %243 = vector.load %arg2[%c24, %c0_148, %c0_149] : memref<32x16x64xf32, #tpu.memory_space<vmem>>, vector<1x16x64xf32>
    %244 = vector.shape_cast %243 : vector<1x16x64xf32> to vector<16x64xf32>
    %c0_150 = arith.constant 0 : index
    %c24_151 = arith.constant 24 : index
    %245 = memref.load %arg1[%c0_150, %c24_151] : memref<2x32xf32, #tpu.memory_space<smem>>
    %246 = vector.broadcast %245 : f32 to vector<16x64xf32>
    %247 = arith.mulf %244, %246 : vector<16x64xf32>
    %248 = arith.addf %238, %247 : vector<16x64xf32>
    %c1_152 = arith.constant 1 : index
    %c24_153 = arith.constant 24 : index
    %249 = memref.load %arg1[%c1_152, %c24_153] : memref<2x32xf32, #tpu.memory_space<smem>>
    %250 = vector.broadcast %249 : f32 to vector<16x64xf32>
    %251 = arith.mulf %244, %250 : vector<16x64xf32>
    %252 = arith.addf %242, %251 : vector<16x64xf32>
    %c25 = arith.constant 25 : index
    %c0_154 = arith.constant 0 : index
    %c0_155 = arith.constant 0 : index
    %253 = vector.load %arg2[%c25, %c0_154, %c0_155] : memref<32x16x64xf32, #tpu.memory_space<vmem>>, vector<1x16x64xf32>
    %254 = vector.shape_cast %253 : vector<1x16x64xf32> to vector<16x64xf32>
    %c0_156 = arith.constant 0 : index
    %c25_157 = arith.constant 25 : index
    %255 = memref.load %arg1[%c0_156, %c25_157] : memref<2x32xf32, #tpu.memory_space<smem>>
    %256 = vector.broadcast %255 : f32 to vector<16x64xf32>
    %257 = arith.mulf %254, %256 : vector<16x64xf32>
    %258 = arith.addf %248, %257 : vector<16x64xf32>
    %c1_158 = arith.constant 1 : index
    %c25_159 = arith.constant 25 : index
    %259 = memref.load %arg1[%c1_158, %c25_159] : memref<2x32xf32, #tpu.memory_space<smem>>
    %260 = vector.broadcast %259 : f32 to vector<16x64xf32>
    %261 = arith.mulf %254, %260 : vector<16x64xf32>
    %262 = arith.addf %252, %261 : vector<16x64xf32>
    %c26 = arith.constant 26 : index
    %c0_160 = arith.constant 0 : index
    %c0_161 = arith.constant 0 : index
    %263 = vector.load %arg2[%c26, %c0_160, %c0_161] : memref<32x16x64xf32, #tpu.memory_space<vmem>>, vector<1x16x64xf32>
    %264 = vector.shape_cast %263 : vector<1x16x64xf32> to vector<16x64xf32>
    %c0_162 = arith.constant 0 : index
    %c26_163 = arith.constant 26 : index
    %265 = memref.load %arg1[%c0_162, %c26_163] : memref<2x32xf32, #tpu.memory_space<smem>>
    %266 = vector.broadcast %265 : f32 to vector<16x64xf32>
    %267 = arith.mulf %264, %266 : vector<16x64xf32>
    %268 = arith.addf %258, %267 : vector<16x64xf32>
    %c1_164 = arith.constant 1 : index
    %c26_165 = arith.constant 26 : index
    %269 = memref.load %arg1[%c1_164, %c26_165] : memref<2x32xf32, #tpu.memory_space<smem>>
    %270 = vector.broadcast %269 : f32 to vector<16x64xf32>
    %271 = arith.mulf %264, %270 : vector<16x64xf32>
    %272 = arith.addf %262, %271 : vector<16x64xf32>
    %c27 = arith.constant 27 : index
    %c0_166 = arith.constant 0 : index
    %c0_167 = arith.constant 0 : index
    %273 = vector.load %arg2[%c27, %c0_166, %c0_167] : memref<32x16x64xf32, #tpu.memory_space<vmem>>, vector<1x16x64xf32>
    %274 = vector.shape_cast %273 : vector<1x16x64xf32> to vector<16x64xf32>
    %c0_168 = arith.constant 0 : index
    %c27_169 = arith.constant 27 : index
    %275 = memref.load %arg1[%c0_168, %c27_169] : memref<2x32xf32, #tpu.memory_space<smem>>
    %276 = vector.broadcast %275 : f32 to vector<16x64xf32>
    %277 = arith.mulf %274, %276 : vector<16x64xf32>
    %278 = arith.addf %268, %277 : vector<16x64xf32>
    %c1_170 = arith.constant 1 : index
    %c27_171 = arith.constant 27 : index
    %279 = memref.load %arg1[%c1_170, %c27_171] : memref<2x32xf32, #tpu.memory_space<smem>>
    %280 = vector.broadcast %279 : f32 to vector<16x64xf32>
    %281 = arith.mulf %274, %280 : vector<16x64xf32>
    %282 = arith.addf %272, %281 : vector<16x64xf32>
    %c28 = arith.constant 28 : index
    %c0_172 = arith.constant 0 : index
    %c0_173 = arith.constant 0 : index
    %283 = vector.load %arg2[%c28, %c0_172, %c0_173] : memref<32x16x64xf32, #tpu.memory_space<vmem>>, vector<1x16x64xf32>
    %284 = vector.shape_cast %283 : vector<1x16x64xf32> to vector<16x64xf32>
    %c0_174 = arith.constant 0 : index
    %c28_175 = arith.constant 28 : index
    %285 = memref.load %arg1[%c0_174, %c28_175] : memref<2x32xf32, #tpu.memory_space<smem>>
    %286 = vector.broadcast %285 : f32 to vector<16x64xf32>
    %287 = arith.mulf %284, %286 : vector<16x64xf32>
    %288 = arith.addf %278, %287 : vector<16x64xf32>
    %c1_176 = arith.constant 1 : index
    %c28_177 = arith.constant 28 : index
    %289 = memref.load %arg1[%c1_176, %c28_177] : memref<2x32xf32, #tpu.memory_space<smem>>
    %290 = vector.broadcast %289 : f32 to vector<16x64xf32>
    %291 = arith.mulf %284, %290 : vector<16x64xf32>
    %292 = arith.addf %282, %291 : vector<16x64xf32>
    %c29 = arith.constant 29 : index
    %c0_178 = arith.constant 0 : index
    %c0_179 = arith.constant 0 : index
    %293 = vector.load %arg2[%c29, %c0_178, %c0_179] : memref<32x16x64xf32, #tpu.memory_space<vmem>>, vector<1x16x64xf32>
    %294 = vector.shape_cast %293 : vector<1x16x64xf32> to vector<16x64xf32>
    %c0_180 = arith.constant 0 : index
    %c29_181 = arith.constant 29 : index
    %295 = memref.load %arg1[%c0_180, %c29_181] : memref<2x32xf32, #tpu.memory_space<smem>>
    %296 = vector.broadcast %295 : f32 to vector<16x64xf32>
    %297 = arith.mulf %294, %296 : vector<16x64xf32>
    %298 = arith.addf %288, %297 : vector<16x64xf32>
    %c1_182 = arith.constant 1 : index
    %c29_183 = arith.constant 29 : index
    %299 = memref.load %arg1[%c1_182, %c29_183] : memref<2x32xf32, #tpu.memory_space<smem>>
    %300 = vector.broadcast %299 : f32 to vector<16x64xf32>
    %301 = arith.mulf %294, %300 : vector<16x64xf32>
    %302 = arith.addf %292, %301 : vector<16x64xf32>
    %c30 = arith.constant 30 : index
    %c0_184 = arith.constant 0 : index
    %c0_185 = arith.constant 0 : index
    %303 = vector.load %arg2[%c30, %c0_184, %c0_185] : memref<32x16x64xf32, #tpu.memory_space<vmem>>, vector<1x16x64xf32>
    %304 = vector.shape_cast %303 : vector<1x16x64xf32> to vector<16x64xf32>
    %c0_186 = arith.constant 0 : index
    %c30_187 = arith.constant 30 : index
    %305 = memref.load %arg1[%c0_186, %c30_187] : memref<2x32xf32, #tpu.memory_space<smem>>
    %306 = vector.broadcast %305 : f32 to vector<16x64xf32>
    %307 = arith.mulf %304, %306 : vector<16x64xf32>
    %308 = arith.addf %298, %307 : vector<16x64xf32>
    %c1_188 = arith.constant 1 : index
    %c30_189 = arith.constant 30 : index
    %309 = memref.load %arg1[%c1_188, %c30_189] : memref<2x32xf32, #tpu.memory_space<smem>>
    %310 = vector.broadcast %309 : f32 to vector<16x64xf32>
    %311 = arith.mulf %304, %310 : vector<16x64xf32>
    %312 = arith.addf %302, %311 : vector<16x64xf32>
    %c31 = arith.constant 31 : index
    %c0_190 = arith.constant 0 : index
    %c0_191 = arith.constant 0 : index
    %313 = vector.load %arg2[%c31, %c0_190, %c0_191] : memref<32x16x64xf32, #tpu.memory_space<vmem>>, vector<1x16x64xf32>
    %314 = vector.shape_cast %313 : vector<1x16x64xf32> to vector<16x64xf32>
    %c0_192 = arith.constant 0 : index
    %c31_193 = arith.constant 31 : index
    %315 = memref.load %arg1[%c0_192, %c31_193] : memref<2x32xf32, #tpu.memory_space<smem>>
    %316 = vector.broadcast %315 : f32 to vector<16x64xf32>
    %317 = arith.mulf %314, %316 : vector<16x64xf32>
    %318 = arith.addf %308, %317 : vector<16x64xf32>
    %c1_194 = arith.constant 1 : index
    %c31_195 = arith.constant 31 : index
    %319 = memref.load %arg1[%c1_194, %c31_195] : memref<2x32xf32, #tpu.memory_space<smem>>
    %320 = vector.broadcast %319 : f32 to vector<16x64xf32>
    %321 = arith.mulf %314, %320 : vector<16x64xf32>
    %322 = arith.addf %312, %321 : vector<16x64xf32>
    %cst_196 = arith.constant 0.000000e+00 : f32
    %323 = vector.broadcast %cst_196 : f32 to vector<16x64xf32>
    %324 = arith.maximumf %318, %323 : vector<16x64xf32>
    %c0_197 = arith.constant 0 : index
    %c128 = arith.constant 128 : index
    %325 = vector.load %arg12[%c0_197, %c128] : memref<16x384xf32, #tpu.memory_space<vmem>>, vector<16x64xf32>
    tpu.vector_store %arg12[%c0_197, %c128], %324 {strides = array<i32>} : memref<16x384xf32, #tpu.memory_space<vmem>>, vector<16x64xf32>,
    %cst_198 = arith.constant 0.000000e+00 : f32
    %326 = vector.broadcast %cst_198 : f32 to vector<16x64xf32>
    %327 = arith.maximumf %322, %326 : vector<16x64xf32>
    %c0_199 = arith.constant 0 : index
    %c192 = arith.constant 192 : index
    %328 = vector.load %arg12[%c0_199, %c192] : memref<16x384xf32, #tpu.memory_space<vmem>>, vector<16x64xf32>
    tpu.vector_store %arg12[%c0_199, %c192], %327 {strides = array<i32>} : memref<16x384xf32, #tpu.memory_space<vmem>>, vector<16x64xf32>,
    %cst_200 = arith.constant 0.000000e+00 : f32
    %329 = vector.broadcast %cst_200 : f32 to vector<16x128xf32>
    %c0_201 = arith.constant 0 : index
    %c119 = arith.constant 119 : index
    %330 = vector.load %arg12[%c0_201, %c119] : memref<16x384xf32, #tpu.memory_space<vmem>>, vector<16x128xf32>
    %c0_202 = arith.constant 0 : index
    %c0_203 = arith.constant 0 : index
    %c0_204 = arith.constant 0 : index
    %331 = vector.load %arg10[%c0_202, %c0_203, %c0_204] : memref<9x1x128xf32, #tpu.memory_space<vmem>>, vector<1x1x128xf32>
    %332 = vector.shape_cast %331 : vector<1x1x128xf32> to vector<1x128xf32>
    %333 = vector.broadcast %332 : vector<1x128xf32> to vector<16x128xf32>
    %334 = arith.mulf %330, %333 : vector<16x128xf32>
    %c0_205 = arith.constant 0 : index
    %c0_206 = arith.constant 0 : index
    %c0_207 = arith.constant 0 : index
    %c0_208 = arith.constant 0 : index
    %335 = vector.load %arg4[%c0_205, %c0_206, %c0_207, %c0_208] : memref<2x9x16x16xf32, #tpu.memory_space<vmem>>, vector<1x1x16x16xf32>
    %336 = vector.shape_cast %335 : vector<1x1x16x16xf32> to vector<16x16xf32>
    %cst_209 = arith.constant dense<0.000000e+00> : vector<16x128xf32>
    %337 = tpu.matmul %336, %334, %cst_209 {dimension_numbers = #tpu.dot_dimension_numbers<[1], [0], [0], [1], [0, 0, 1, 1], [], []>} : vector<16x16xf32>, vector<16x128xf32>, vector<16x128xf32> -> vector<16x128xf32>
    %338 = arith.addf %329, %337 : vector<16x128xf32>
    %c0_210 = arith.constant 0 : index
    %c120 = arith.constant 120 : index
    %339 = vector.load %arg12[%c0_210, %c120] : memref<16x384xf32, #tpu.memory_space<vmem>>, vector<16x128xf32>
    %c1_211 = arith.constant 1 : index
    %c0_212 = arith.constant 0 : index
    %c0_213 = arith.constant 0 : index
    %340 = vector.load %arg10[%c1_211, %c0_212, %c0_213] : memref<9x1x128xf32, #tpu.memory_space<vmem>>, vector<1x1x128xf32>
    %341 = vector.shape_cast %340 : vector<1x1x128xf32> to vector<1x128xf32>
    %342 = vector.broadcast %341 : vector<1x128xf32> to vector<16x128xf32>
    %343 = arith.mulf %339, %342 : vector<16x128xf32>
    %c0_214 = arith.constant 0 : index
    %c1_215 = arith.constant 1 : index
    %c0_216 = arith.constant 0 : index
    %c0_217 = arith.constant 0 : index
    %344 = vector.load %arg4[%c0_214, %c1_215, %c0_216, %c0_217] : memref<2x9x16x16xf32, #tpu.memory_space<vmem>>, vector<1x1x16x16xf32>
    %345 = vector.shape_cast %344 : vector<1x1x16x16xf32> to vector<16x16xf32>
    %cst_218 = arith.constant dense<0.000000e+00> : vector<16x128xf32>
    %346 = tpu.matmul %345, %343, %cst_218 {dimension_numbers = #tpu.dot_dimension_numbers<[1], [0], [0], [1], [0, 0, 1, 1], [], []>} : vector<16x16xf32>, vector<16x128xf32>, vector<16x128xf32> -> vector<16x128xf32>
    %347 = arith.addf %338, %346 : vector<16x128xf32>
    %c0_219 = arith.constant 0 : index
    %c121 = arith.constant 121 : index
    %348 = vector.load %arg12[%c0_219, %c121] : memref<16x384xf32, #tpu.memory_space<vmem>>, vector<16x128xf32>
    %c2_220 = arith.constant 2 : index
    %c0_221 = arith.constant 0 : index
    %c0_222 = arith.constant 0 : index
    %349 = vector.load %arg10[%c2_220, %c0_221, %c0_222] : memref<9x1x128xf32, #tpu.memory_space<vmem>>, vector<1x1x128xf32>
    %350 = vector.shape_cast %349 : vector<1x1x128xf32> to vector<1x128xf32>
    %351 = vector.broadcast %350 : vector<1x128xf32> to vector<16x128xf32>
    %352 = arith.mulf %348, %351 : vector<16x128xf32>
    %c0_223 = arith.constant 0 : index
    %c2_224 = arith.constant 2 : index
    %c0_225 = arith.constant 0 : index
    %c0_226 = arith.constant 0 : index
    %353 = vector.load %arg4[%c0_223, %c2_224, %c0_225, %c0_226] : memref<2x9x16x16xf32, #tpu.memory_space<vmem>>, vector<1x1x16x16xf32>
    %354 = vector.shape_cast %353 : vector<1x1x16x16xf32> to vector<16x16xf32>
    %cst_227 = arith.constant dense<0.000000e+00> : vector<16x128xf32>
    %355 = tpu.matmul %354, %352, %cst_227 {dimension_numbers = #tpu.dot_dimension_numbers<[1], [0], [0], [1], [0, 0, 1, 1], [], []>} : vector<16x16xf32>, vector<16x128xf32>, vector<16x128xf32> -> vector<16x128xf32>
    %356 = arith.addf %347, %355 : vector<16x128xf32>
    %c0_228 = arith.constant 0 : index
    %c127 = arith.constant 127 : index
    %357 = vector.load %arg12[%c0_228, %c127] : memref<16x384xf32, #tpu.memory_space<vmem>>, vector<16x128xf32>
    %c3_229 = arith.constant 3 : index
    %c0_230 = arith.constant 0 : index
    %c0_231 = arith.constant 0 : index
    %358 = vector.load %arg10[%c3_229, %c0_230, %c0_231] : memref<9x1x128xf32, #tpu.memory_space<vmem>>, vector<1x1x128xf32>
    %359 = vector.shape_cast %358 : vector<1x1x128xf32> to vector<1x128xf32>
    %360 = vector.broadcast %359 : vector<1x128xf32> to vector<16x128xf32>
    %361 = arith.mulf %357, %360 : vector<16x128xf32>
    %c0_232 = arith.constant 0 : index
    %c3_233 = arith.constant 3 : index
    %c0_234 = arith.constant 0 : index
    %c0_235 = arith.constant 0 : index
    %362 = vector.load %arg4[%c0_232, %c3_233, %c0_234, %c0_235] : memref<2x9x16x16xf32, #tpu.memory_space<vmem>>, vector<1x1x16x16xf32>
    %363 = vector.shape_cast %362 : vector<1x1x16x16xf32> to vector<16x16xf32>
    %cst_236 = arith.constant dense<0.000000e+00> : vector<16x128xf32>
    %364 = tpu.matmul %363, %361, %cst_236 {dimension_numbers = #tpu.dot_dimension_numbers<[1], [0], [0], [1], [0, 0, 1, 1], [], []>} : vector<16x16xf32>, vector<16x128xf32>, vector<16x128xf32> -> vector<16x128xf32>
    %365 = arith.addf %356, %364 : vector<16x128xf32>
    %c0_237 = arith.constant 0 : index
    %c128_238 = arith.constant 128 : index
    %366 = vector.load %arg12[%c0_237, %c128_238] : memref<16x384xf32, #tpu.memory_space<vmem>>, vector<16x128xf32>
    %c0_239 = arith.constant 0 : index
    %c4_240 = arith.constant 4 : index
    %c0_241 = arith.constant 0 : index
    %c0_242 = arith.constant 0 : index
    %367 = vector.load %arg4[%c0_239, %c4_240, %c0_241, %c0_242] : memref<2x9x16x16xf32, #tpu.memory_space<vmem>>, vector<1x1x16x16xf32>
    %368 = vector.shape_cast %367 : vector<1x1x16x16xf32> to vector<16x16xf32>
    %cst_243 = arith.constant dense<0.000000e+00> : vector<16x128xf32>
    %369 = tpu.matmul %368, %366, %cst_243 {dimension_numbers = #tpu.dot_dimension_numbers<[1], [0], [0], [1], [0, 0, 1, 1], [], []>} : vector<16x16xf32>, vector<16x128xf32>, vector<16x128xf32> -> vector<16x128xf32>
    %370 = arith.addf %365, %369 : vector<16x128xf32>
    %c0_244 = arith.constant 0 : index
    %c129 = arith.constant 129 : index
    %371 = vector.load %arg12[%c0_244, %c129] : memref<16x384xf32, #tpu.memory_space<vmem>>, vector<16x128xf32>
    %c5_245 = arith.constant 5 : index
    %c0_246 = arith.constant 0 : index
    %c0_247 = arith.constant 0 : index
    %372 = vector.load %arg10[%c5_245, %c0_246, %c0_247] : memref<9x1x128xf32, #tpu.memory_space<vmem>>, vector<1x1x128xf32>
    %373 = vector.shape_cast %372 : vector<1x1x128xf32> to vector<1x128xf32>
    %374 = vector.broadcast %373 : vector<1x128xf32> to vector<16x128xf32>
    %375 = arith.mulf %371, %374 : vector<16x128xf32>
    %c0_248 = arith.constant 0 : index
    %c5_249 = arith.constant 5 : index
    %c0_250 = arith.constant 0 : index
    %c0_251 = arith.constant 0 : index
    %376 = vector.load %arg4[%c0_248, %c5_249, %c0_250, %c0_251] : memref<2x9x16x16xf32, #tpu.memory_space<vmem>>, vector<1x1x16x16xf32>
    %377 = vector.shape_cast %376 : vector<1x1x16x16xf32> to vector<16x16xf32>
    %cst_252 = arith.constant dense<0.000000e+00> : vector<16x128xf32>
    %378 = tpu.matmul %377, %375, %cst_252 {dimension_numbers = #tpu.dot_dimension_numbers<[1], [0], [0], [1], [0, 0, 1, 1], [], []>} : vector<16x16xf32>, vector<16x128xf32>, vector<16x128xf32> -> vector<16x128xf32>
    %379 = arith.addf %370, %378 : vector<16x128xf32>
    %c0_253 = arith.constant 0 : index
    %c135 = arith.constant 135 : index
    %380 = vector.load %arg12[%c0_253, %c135] : memref<16x384xf32, #tpu.memory_space<vmem>>, vector<16x128xf32>
    %c6_254 = arith.constant 6 : index
    %c0_255 = arith.constant 0 : index
    %c0_256 = arith.constant 0 : index
    %381 = vector.load %arg10[%c6_254, %c0_255, %c0_256] : memref<9x1x128xf32, #tpu.memory_space<vmem>>, vector<1x1x128xf32>
    %382 = vector.shape_cast %381 : vector<1x1x128xf32> to vector<1x128xf32>
    %383 = vector.broadcast %382 : vector<1x128xf32> to vector<16x128xf32>
    %384 = arith.mulf %380, %383 : vector<16x128xf32>
    %c0_257 = arith.constant 0 : index
    %c6_258 = arith.constant 6 : index
    %c0_259 = arith.constant 0 : index
    %c0_260 = arith.constant 0 : index
    %385 = vector.load %arg4[%c0_257, %c6_258, %c0_259, %c0_260] : memref<2x9x16x16xf32, #tpu.memory_space<vmem>>, vector<1x1x16x16xf32>
    %386 = vector.shape_cast %385 : vector<1x1x16x16xf32> to vector<16x16xf32>
    %cst_261 = arith.constant dense<0.000000e+00> : vector<16x128xf32>
    %387 = tpu.matmul %386, %384, %cst_261 {dimension_numbers = #tpu.dot_dimension_numbers<[1], [0], [0], [1], [0, 0, 1, 1], [], []>} : vector<16x16xf32>, vector<16x128xf32>, vector<16x128xf32> -> vector<16x128xf32>
    %388 = arith.addf %379, %387 : vector<16x128xf32>
    %c0_262 = arith.constant 0 : index
    %c136 = arith.constant 136 : index
    %389 = vector.load %arg12[%c0_262, %c136] : memref<16x384xf32, #tpu.memory_space<vmem>>, vector<16x128xf32>
    %c7_263 = arith.constant 7 : index
    %c0_264 = arith.constant 0 : index
    %c0_265 = arith.constant 0 : index
    %390 = vector.load %arg10[%c7_263, %c0_264, %c0_265] : memref<9x1x128xf32, #tpu.memory_space<vmem>>, vector<1x1x128xf32>
    %391 = vector.shape_cast %390 : vector<1x1x128xf32> to vector<1x128xf32>
    %392 = vector.broadcast %391 : vector<1x128xf32> to vector<16x128xf32>
    %393 = arith.mulf %389, %392 : vector<16x128xf32>
    %c0_266 = arith.constant 0 : index
    %c7_267 = arith.constant 7 : index
    %c0_268 = arith.constant 0 : index
    %c0_269 = arith.constant 0 : index
    %394 = vector.load %arg4[%c0_266, %c7_267, %c0_268, %c0_269] : memref<2x9x16x16xf32, #tpu.memory_space<vmem>>, vector<1x1x16x16xf32>
    %395 = vector.shape_cast %394 : vector<1x1x16x16xf32> to vector<16x16xf32>
    %cst_270 = arith.constant dense<0.000000e+00> : vector<16x128xf32>
    %396 = tpu.matmul %395, %393, %cst_270 {dimension_numbers = #tpu.dot_dimension_numbers<[1], [0], [0], [1], [0, 0, 1, 1], [], []>} : vector<16x16xf32>, vector<16x128xf32>, vector<16x128xf32> -> vector<16x128xf32>
    %397 = arith.addf %388, %396 : vector<16x128xf32>
    %c0_271 = arith.constant 0 : index
    %c137 = arith.constant 137 : index
    %398 = vector.load %arg12[%c0_271, %c137] : memref<16x384xf32, #tpu.memory_space<vmem>>, vector<16x128xf32>
    %c8_272 = arith.constant 8 : index
    %c0_273 = arith.constant 0 : index
    %c0_274 = arith.constant 0 : index
    %399 = vector.load %arg10[%c8_272, %c0_273, %c0_274] : memref<9x1x128xf32, #tpu.memory_space<vmem>>, vector<1x1x128xf32>
    %400 = vector.shape_cast %399 : vector<1x1x128xf32> to vector<1x128xf32>
    %401 = vector.broadcast %400 : vector<1x128xf32> to vector<16x128xf32>
    %402 = arith.mulf %398, %401 : vector<16x128xf32>
    %c0_275 = arith.constant 0 : index
    %c8_276 = arith.constant 8 : index
    %c0_277 = arith.constant 0 : index
    %c0_278 = arith.constant 0 : index
    %403 = vector.load %arg4[%c0_275, %c8_276, %c0_277, %c0_278] : memref<2x9x16x16xf32, #tpu.memory_space<vmem>>, vector<1x1x16x16xf32>
    %404 = vector.shape_cast %403 : vector<1x1x16x16xf32> to vector<16x16xf32>
    %cst_279 = arith.constant dense<0.000000e+00> : vector<16x128xf32>
    %405 = tpu.matmul %404, %402, %cst_279 {dimension_numbers = #tpu.dot_dimension_numbers<[1], [0], [0], [1], [0, 0, 1, 1], [], []>} : vector<16x16xf32>, vector<16x128xf32>, vector<16x128xf32> -> vector<16x128xf32>
    %406 = arith.addf %397, %405 : vector<16x128xf32>
    %c0_280 = arith.constant 0 : index
    %c0_281 = arith.constant 0 : index
    %c0_282 = arith.constant 0 : index
    %407 = vector.load %arg5[%c0_280, %c0_281, %c0_282] : memref<2x16x1xf32, #tpu.memory_space<vmem>>, vector<1x16x1xf32>
    %408 = vector.shape_cast %407 : vector<1x16x1xf32> to vector<16x1xf32>
    %409 = vector.broadcast %408 : vector<16x1xf32> to vector<16x128xf32>
    %410 = arith.addf %406, %409 : vector<16x128xf32>
    %cst_283 = arith.constant dense<0.000000e+00> : vector<16xf32>
    %411 = vector.multi_reduction <add>, %410, %cst_283 [1] : vector<16x128xf32> to vector<16xf32>
    %412 = vector.shape_cast %411 : vector<16xf32> to vector<16x1xf32>
    %cst_284 = arith.constant 1.280000e+02 : f32
    %413 = vector.broadcast %cst_284 : f32 to vector<16x1xf32>
    %414 = arith.divf %412, %413 : vector<16x1xf32>
    %415 = vector.broadcast %414 : vector<16x1xf32> to vector<16x128xf32>
    %416 = arith.subf %410, %415 : vector<16x128xf32>
    %417 = arith.mulf %416, %416 : vector<16x128xf32>
    %cst_285 = arith.constant dense<0.000000e+00> : vector<16xf32>
    %418 = vector.multi_reduction <add>, %417, %cst_285 [1] : vector<16x128xf32> to vector<16xf32>
    %419 = vector.shape_cast %418 : vector<16xf32> to vector<16x1xf32>
    %cst_286 = arith.constant 1.280000e+02 : f32
    %420 = vector.broadcast %cst_286 : f32 to vector<16x1xf32>
    %421 = arith.divf %419, %420 : vector<16x1xf32>
    %422 = vector.broadcast %414 : vector<16x1xf32> to vector<16x128xf32>
    %423 = arith.subf %410, %422 : vector<16x128xf32>
    %cst_287 = arith.constant 9.99999974E-6 : f32
    %424 = vector.broadcast %cst_287 : f32 to vector<16x1xf32>
    %425 = arith.addf %421, %424 : vector<16x1xf32>
    %426 = math.rsqrt %425 : vector<16x1xf32>
    %427 = vector.broadcast %426 : vector<16x1xf32> to vector<16x128xf32>
    %428 = arith.mulf %423, %427 : vector<16x128xf32>
    %c0_288 = arith.constant 0 : index
    %c0_289 = arith.constant 0 : index
    %c0_290 = arith.constant 0 : index
    %429 = vector.load %arg6[%c0_288, %c0_289, %c0_290] : memref<2x16x1xf32, #tpu.memory_space<vmem>>, vector<1x16x1xf32>
    %430 = vector.shape_cast %429 : vector<1x16x1xf32> to vector<16x1xf32>
    %431 = vector.broadcast %430 : vector<16x1xf32> to vector<16x128xf32>
    %432 = arith.mulf %428, %431 : vector<16x128xf32>
    %c0_291 = arith.constant 0 : index
    %c0_292 = arith.constant 0 : index
    %c0_293 = arith.constant 0 : index
    %433 = vector.load %arg7[%c0_291, %c0_292, %c0_293] : memref<2x16x1xf32, #tpu.memory_space<vmem>>, vector<1x16x1xf32>
    %434 = vector.shape_cast %433 : vector<1x16x1xf32> to vector<16x1xf32>
    %435 = vector.broadcast %434 : vector<16x1xf32> to vector<16x128xf32>
    %436 = arith.addf %432, %435 : vector<16x128xf32>
    %cst_294 = arith.constant 0.000000e+00 : f32
    %437 = vector.broadcast %cst_294 : f32 to vector<16x128xf32>
    %438 = arith.maximumf %436, %437 : vector<16x128xf32>
    %c0_295 = arith.constant 0 : index
    %c128_296 = arith.constant 128 : index
    %439 = vector.load %arg12[%c0_295, %c128_296] : memref<16x384xf32, #tpu.memory_space<vmem>>, vector<16x128xf32>
    tpu.vector_store %arg12[%c0_295, %c128_296], %438 {strides = array<i32>} : memref<16x384xf32, #tpu.memory_space<vmem>>, vector<16x128xf32>,
    %cst_297 = arith.constant 0.000000e+00 : f32
    %440 = vector.broadcast %cst_297 : f32 to vector<16x128xf32>
    %c0_298 = arith.constant 0 : index
    %c119_299 = arith.constant 119 : index
    %441 = vector.load %arg12[%c0_298, %c119_299] : memref<16x384xf32, #tpu.memory_space<vmem>>, vector<16x128xf32>
    %c0_300 = arith.constant 0 : index
    %c0_301 = arith.constant 0 : index
    %c0_302 = arith.constant 0 : index
    %442 = vector.load %arg10[%c0_300, %c0_301, %c0_302] : memref<9x1x128xf32, #tpu.memory_space<vmem>>, vector<1x1x128xf32>
    %443 = vector.shape_cast %442 : vector<1x1x128xf32> to vector<1x128xf32>
    %444 = vector.broadcast %443 : vector<1x128xf32> to vector<16x128xf32>
    %445 = arith.mulf %441, %444 : vector<16x128xf32>
    %c1_303 = arith.constant 1 : index
    %c0_304 = arith.constant 0 : index
    %c0_305 = arith.constant 0 : index
    %c0_306 = arith.constant 0 : index
    %446 = vector.load %arg4[%c1_303, %c0_304, %c0_305, %c0_306] : memref<2x9x16x16xf32, #tpu.memory_space<vmem>>, vector<1x1x16x16xf32>
    %447 = vector.shape_cast %446 : vector<1x1x16x16xf32> to vector<16x16xf32>
    %cst_307 = arith.constant dense<0.000000e+00> : vector<16x128xf32>
    %448 = tpu.matmul %447, %445, %cst_307 {dimension_numbers = #tpu.dot_dimension_numbers<[1], [0], [0], [1], [0, 0, 1, 1], [], []>} : vector<16x16xf32>, vector<16x128xf32>, vector<16x128xf32> -> vector<16x128xf32>
    %449 = arith.addf %440, %448 : vector<16x128xf32>
    %c0_308 = arith.constant 0 : index
    %c120_309 = arith.constant 120 : index
    %450 = vector.load %arg12[%c0_308, %c120_309] : memref<16x384xf32, #tpu.memory_space<vmem>>, vector<16x128xf32>
    %c1_310 = arith.constant 1 : index
    %c0_311 = arith.constant 0 : index
    %c0_312 = arith.constant 0 : index
    %451 = vector.load %arg10[%c1_310, %c0_311, %c0_312] : memref<9x1x128xf32, #tpu.memory_space<vmem>>, vector<1x1x128xf32>
    %452 = vector.shape_cast %451 : vector<1x1x128xf32> to vector<1x128xf32>
    %453 = vector.broadcast %452 : vector<1x128xf32> to vector<16x128xf32>
    %454 = arith.mulf %450, %453 : vector<16x128xf32>
    %c1_313 = arith.constant 1 : index
    %c1_314 = arith.constant 1 : index
    %c0_315 = arith.constant 0 : index
    %c0_316 = arith.constant 0 : index
    %455 = vector.load %arg4[%c1_313, %c1_314, %c0_315, %c0_316] : memref<2x9x16x16xf32, #tpu.memory_space<vmem>>, vector<1x1x16x16xf32>
    %456 = vector.shape_cast %455 : vector<1x1x16x16xf32> to vector<16x16xf32>
    %cst_317 = arith.constant dense<0.000000e+00> : vector<16x128xf32>
    %457 = tpu.matmul %456, %454, %cst_317 {dimension_numbers = #tpu.dot_dimension_numbers<[1], [0], [0], [1], [0, 0, 1, 1], [], []>} : vector<16x16xf32>, vector<16x128xf32>, vector<16x128xf32> -> vector<16x128xf32>
    %458 = arith.addf %449, %457 : vector<16x128xf32>
    %c0_318 = arith.constant 0 : index
    %c121_319 = arith.constant 121 : index
    %459 = vector.load %arg12[%c0_318, %c121_319] : memref<16x384xf32, #tpu.memory_space<vmem>>, vector<16x128xf32>
    %c2_320 = arith.constant 2 : index
    %c0_321 = arith.constant 0 : index
    %c0_322 = arith.constant 0 : index
    %460 = vector.load %arg10[%c2_320, %c0_321, %c0_322] : memref<9x1x128xf32, #tpu.memory_space<vmem>>, vector<1x1x128xf32>
    %461 = vector.shape_cast %460 : vector<1x1x128xf32> to vector<1x128xf32>
    %462 = vector.broadcast %461 : vector<1x128xf32> to vector<16x128xf32>
    %463 = arith.mulf %459, %462 : vector<16x128xf32>
    %c1_323 = arith.constant 1 : index
    %c2_324 = arith.constant 2 : index
    %c0_325 = arith.constant 0 : index
    %c0_326 = arith.constant 0 : index
    %464 = vector.load %arg4[%c1_323, %c2_324, %c0_325, %c0_326] : memref<2x9x16x16xf32, #tpu.memory_space<vmem>>, vector<1x1x16x16xf32>
    %465 = vector.shape_cast %464 : vector<1x1x16x16xf32> to vector<16x16xf32>
    %cst_327 = arith.constant dense<0.000000e+00> : vector<16x128xf32>
    %466 = tpu.matmul %465, %463, %cst_327 {dimension_numbers = #tpu.dot_dimension_numbers<[1], [0], [0], [1], [0, 0, 1, 1], [], []>} : vector<16x16xf32>, vector<16x128xf32>, vector<16x128xf32> -> vector<16x128xf32>
    %467 = arith.addf %458, %466 : vector<16x128xf32>
    %c0_328 = arith.constant 0 : index
    %c127_329 = arith.constant 127 : index
    %468 = vector.load %arg12[%c0_328, %c127_329] : memref<16x384xf32, #tpu.memory_space<vmem>>, vector<16x128xf32>
    %c3_330 = arith.constant 3 : index
    %c0_331 = arith.constant 0 : index
    %c0_332 = arith.constant 0 : index
    %469 = vector.load %arg10[%c3_330, %c0_331, %c0_332] : memref<9x1x128xf32, #tpu.memory_space<vmem>>, vector<1x1x128xf32>
    %470 = vector.shape_cast %469 : vector<1x1x128xf32> to vector<1x128xf32>
    %471 = vector.broadcast %470 : vector<1x128xf32> to vector<16x128xf32>
    %472 = arith.mulf %468, %471 : vector<16x128xf32>
    %c1_333 = arith.constant 1 : index
    %c3_334 = arith.constant 3 : index
    %c0_335 = arith.constant 0 : index
    %c0_336 = arith.constant 0 : index
    %473 = vector.load %arg4[%c1_333, %c3_334, %c0_335, %c0_336] : memref<2x9x16x16xf32, #tpu.memory_space<vmem>>, vector<1x1x16x16xf32>
    %474 = vector.shape_cast %473 : vector<1x1x16x16xf32> to vector<16x16xf32>
    %cst_337 = arith.constant dense<0.000000e+00> : vector<16x128xf32>
    %475 = tpu.matmul %474, %472, %cst_337 {dimension_numbers = #tpu.dot_dimension_numbers<[1], [0], [0], [1], [0, 0, 1, 1], [], []>} : vector<16x16xf32>, vector<16x128xf32>, vector<16x128xf32> -> vector<16x128xf32>
    %476 = arith.addf %467, %475 : vector<16x128xf32>
    %c0_338 = arith.constant 0 : index
    %c128_339 = arith.constant 128 : index
    %477 = vector.load %arg12[%c0_338, %c128_339] : memref<16x384xf32, #tpu.memory_space<vmem>>, vector<16x128xf32>
    %c1_340 = arith.constant 1 : index
    %c4_341 = arith.constant 4 : index
    %c0_342 = arith.constant 0 : index
    %c0_343 = arith.constant 0 : index
    %478 = vector.load %arg4[%c1_340, %c4_341, %c0_342, %c0_343] : memref<2x9x16x16xf32, #tpu.memory_space<vmem>>, vector<1x1x16x16xf32>
    %479 = vector.shape_cast %478 : vector<1x1x16x16xf32> to vector<16x16xf32>
    %cst_344 = arith.constant dense<0.000000e+00> : vector<16x128xf32>
    %480 = tpu.matmul %479, %477, %cst_344 {dimension_numbers = #tpu.dot_dimension_numbers<[1], [0], [0], [1], [0, 0, 1, 1], [], []>} : vector<16x16xf32>, vector<16x128xf32>, vector<16x128xf32> -> vector<16x128xf32>
    %481 = arith.addf %476, %480 : vector<16x128xf32>
    %c0_345 = arith.constant 0 : index
    %c129_346 = arith.constant 129 : index
    %482 = vector.load %arg12[%c0_345, %c129_346] : memref<16x384xf32, #tpu.memory_space<vmem>>, vector<16x128xf32>
    %c5_347 = arith.constant 5 : index
    %c0_348 = arith.constant 0 : index
    %c0_349 = arith.constant 0 : index
    %483 = vector.load %arg10[%c5_347, %c0_348, %c0_349] : memref<9x1x128xf32, #tpu.memory_space<vmem>>, vector<1x1x128xf32>
    %484 = vector.shape_cast %483 : vector<1x1x128xf32> to vector<1x128xf32>
    %485 = vector.broadcast %484 : vector<1x128xf32> to vector<16x128xf32>
    %486 = arith.mulf %482, %485 : vector<16x128xf32>
    %c1_350 = arith.constant 1 : index
    %c5_351 = arith.constant 5 : index
    %c0_352 = arith.constant 0 : index
    %c0_353 = arith.constant 0 : index
    %487 = vector.load %arg4[%c1_350, %c5_351, %c0_352, %c0_353] : memref<2x9x16x16xf32, #tpu.memory_space<vmem>>, vector<1x1x16x16xf32>
    %488 = vector.shape_cast %487 : vector<1x1x16x16xf32> to vector<16x16xf32>
    %cst_354 = arith.constant dense<0.000000e+00> : vector<16x128xf32>
    %489 = tpu.matmul %488, %486, %cst_354 {dimension_numbers = #tpu.dot_dimension_numbers<[1], [0], [0], [1], [0, 0, 1, 1], [], []>} : vector<16x16xf32>, vector<16x128xf32>, vector<16x128xf32> -> vector<16x128xf32>
    %490 = arith.addf %481, %489 : vector<16x128xf32>
    %c0_355 = arith.constant 0 : index
    %c135_356 = arith.constant 135 : index
    %491 = vector.load %arg12[%c0_355, %c135_356] : memref<16x384xf32, #tpu.memory_space<vmem>>, vector<16x128xf32>
    %c6_357 = arith.constant 6 : index
    %c0_358 = arith.constant 0 : index
    %c0_359 = arith.constant 0 : index
    %492 = vector.load %arg10[%c6_357, %c0_358, %c0_359] : memref<9x1x128xf32, #tpu.memory_space<vmem>>, vector<1x1x128xf32>
    %493 = vector.shape_cast %492 : vector<1x1x128xf32> to vector<1x128xf32>
    %494 = vector.broadcast %493 : vector<1x128xf32> to vector<16x128xf32>
    %495 = arith.mulf %491, %494 : vector<16x128xf32>
    %c1_360 = arith.constant 1 : index
    %c6_361 = arith.constant 6 : index
    %c0_362 = arith.constant 0 : index
    %c0_363 = arith.constant 0 : index
    %496 = vector.load %arg4[%c1_360, %c6_361, %c0_362, %c0_363] : memref<2x9x16x16xf32, #tpu.memory_space<vmem>>, vector<1x1x16x16xf32>
    %497 = vector.shape_cast %496 : vector<1x1x16x16xf32> to vector<16x16xf32>
    %cst_364 = arith.constant dense<0.000000e+00> : vector<16x128xf32>
    %498 = tpu.matmul %497, %495, %cst_364 {dimension_numbers = #tpu.dot_dimension_numbers<[1], [0], [0], [1], [0, 0, 1, 1], [], []>} : vector<16x16xf32>, vector<16x128xf32>, vector<16x128xf32> -> vector<16x128xf32>
    %499 = arith.addf %490, %498 : vector<16x128xf32>
    %c0_365 = arith.constant 0 : index
    %c136_366 = arith.constant 136 : index
    %500 = vector.load %arg12[%c0_365, %c136_366] : memref<16x384xf32, #tpu.memory_space<vmem>>, vector<16x128xf32>
    %c7_367 = arith.constant 7 : index
    %c0_368 = arith.constant 0 : index
    %c0_369 = arith.constant 0 : index
    %501 = vector.load %arg10[%c7_367, %c0_368, %c0_369] : memref<9x1x128xf32, #tpu.memory_space<vmem>>, vector<1x1x128xf32>
    %502 = vector.shape_cast %501 : vector<1x1x128xf32> to vector<1x128xf32>
    %503 = vector.broadcast %502 : vector<1x128xf32> to vector<16x128xf32>
    %504 = arith.mulf %500, %503 : vector<16x128xf32>
    %c1_370 = arith.constant 1 : index
    %c7_371 = arith.constant 7 : index
    %c0_372 = arith.constant 0 : index
    %c0_373 = arith.constant 0 : index
    %505 = vector.load %arg4[%c1_370, %c7_371, %c0_372, %c0_373] : memref<2x9x16x16xf32, #tpu.memory_space<vmem>>, vector<1x1x16x16xf32>
    %506 = vector.shape_cast %505 : vector<1x1x16x16xf32> to vector<16x16xf32>
    %cst_374 = arith.constant dense<0.000000e+00> : vector<16x128xf32>
    %507 = tpu.matmul %506, %504, %cst_374 {dimension_numbers = #tpu.dot_dimension_numbers<[1], [0], [0], [1], [0, 0, 1, 1], [], []>} : vector<16x16xf32>, vector<16x128xf32>, vector<16x128xf32> -> vector<16x128xf32>
    %508 = arith.addf %499, %507 : vector<16x128xf32>
    %c0_375 = arith.constant 0 : index
    %c137_376 = arith.constant 137 : index
    %509 = vector.load %arg12[%c0_375, %c137_376] : memref<16x384xf32, #tpu.memory_space<vmem>>, vector<16x128xf32>
    %c8_377 = arith.constant 8 : index
    %c0_378 = arith.constant 0 : index
    %c0_379 = arith.constant 0 : index
    %510 = vector.load %arg10[%c8_377, %c0_378, %c0_379] : memref<9x1x128xf32, #tpu.memory_space<vmem>>, vector<1x1x128xf32>
    %511 = vector.shape_cast %510 : vector<1x1x128xf32> to vector<1x128xf32>
    %512 = vector.broadcast %511 : vector<1x128xf32> to vector<16x128xf32>
    %513 = arith.mulf %509, %512 : vector<16x128xf32>
    %c1_380 = arith.constant 1 : index
    %c8_381 = arith.constant 8 : index
    %c0_382 = arith.constant 0 : index
    %c0_383 = arith.constant 0 : index
    %514 = vector.load %arg4[%c1_380, %c8_381, %c0_382, %c0_383] : memref<2x9x16x16xf32, #tpu.memory_space<vmem>>, vector<1x1x16x16xf32>
    %515 = vector.shape_cast %514 : vector<1x1x16x16xf32> to vector<16x16xf32>
    %cst_384 = arith.constant dense<0.000000e+00> : vector<16x128xf32>
    %516 = tpu.matmul %515, %513, %cst_384 {dimension_numbers = #tpu.dot_dimension_numbers<[1], [0], [0], [1], [0, 0, 1, 1], [], []>} : vector<16x16xf32>, vector<16x128xf32>, vector<16x128xf32> -> vector<16x128xf32>
    %517 = arith.addf %508, %516 : vector<16x128xf32>
    %c1_385 = arith.constant 1 : index
    %c0_386 = arith.constant 0 : index
    %c0_387 = arith.constant 0 : index
    %518 = vector.load %arg5[%c1_385, %c0_386, %c0_387] : memref<2x16x1xf32, #tpu.memory_space<vmem>>, vector<1x16x1xf32>
    %519 = vector.shape_cast %518 : vector<1x16x1xf32> to vector<16x1xf32>
    %520 = vector.broadcast %519 : vector<16x1xf32> to vector<16x128xf32>
    %521 = arith.addf %517, %520 : vector<16x128xf32>
    %cst_388 = arith.constant dense<0.000000e+00> : vector<16xf32>
    %522 = vector.multi_reduction <add>, %521, %cst_388 [1] : vector<16x128xf32> to vector<16xf32>
    %523 = vector.shape_cast %522 : vector<16xf32> to vector<16x1xf32>
    %cst_389 = arith.constant 1.280000e+02 : f32
    %524 = vector.broadcast %cst_389 : f32 to vector<16x1xf32>
    %525 = arith.divf %523, %524 : vector<16x1xf32>
    %526 = vector.broadcast %525 : vector<16x1xf32> to vector<16x128xf32>
    %527 = arith.subf %521, %526 : vector<16x128xf32>
    %528 = arith.mulf %527, %527 : vector<16x128xf32>
    %cst_390 = arith.constant dense<0.000000e+00> : vector<16xf32>
    %529 = vector.multi_reduction <add>, %528, %cst_390 [1] : vector<16x128xf32> to vector<16xf32>
    %530 = vector.shape_cast %529 : vector<16xf32> to vector<16x1xf32>
    %cst_391 = arith.constant 1.280000e+02 : f32
    %531 = vector.broadcast %cst_391 : f32 to vector<16x1xf32>
    %532 = arith.divf %530, %531 : vector<16x1xf32>
    %533 = vector.broadcast %525 : vector<16x1xf32> to vector<16x128xf32>
    %534 = arith.subf %521, %533 : vector<16x128xf32>
    %cst_392 = arith.constant 9.99999974E-6 : f32
    %535 = vector.broadcast %cst_392 : f32 to vector<16x1xf32>
    %536 = arith.addf %532, %535 : vector<16x1xf32>
    %537 = math.rsqrt %536 : vector<16x1xf32>
    %538 = vector.broadcast %537 : vector<16x1xf32> to vector<16x128xf32>
    %539 = arith.mulf %534, %538 : vector<16x128xf32>
    %c1_393 = arith.constant 1 : index
    %c0_394 = arith.constant 0 : index
    %c0_395 = arith.constant 0 : index
    %540 = vector.load %arg6[%c1_393, %c0_394, %c0_395] : memref<2x16x1xf32, #tpu.memory_space<vmem>>, vector<1x16x1xf32>
    %541 = vector.shape_cast %540 : vector<1x16x1xf32> to vector<16x1xf32>
    %542 = vector.broadcast %541 : vector<16x1xf32> to vector<16x128xf32>
    %543 = arith.mulf %539, %542 : vector<16x128xf32>
    %c1_396 = arith.constant 1 : index
    %c0_397 = arith.constant 0 : index
    %c0_398 = arith.constant 0 : index
    %544 = vector.load %arg7[%c1_396, %c0_397, %c0_398] : memref<2x16x1xf32, #tpu.memory_space<vmem>>, vector<1x16x1xf32>
    %545 = vector.shape_cast %544 : vector<1x16x1xf32> to vector<16x1xf32>
    %546 = vector.broadcast %545 : vector<16x1xf32> to vector<16x128xf32>
    %547 = arith.addf %543, %546 : vector<16x128xf32>
    %cst_399 = arith.constant 0.000000e+00 : f32
    %548 = vector.broadcast %cst_399 : f32 to vector<16x128xf32>
    %549 = arith.maximumf %547, %548 : vector<16x128xf32>
    %c0_400 = arith.constant 0 : index
    %c128_401 = arith.constant 128 : index
    %550 = vector.load %arg12[%c0_400, %c128_401] : memref<16x384xf32, #tpu.memory_space<vmem>>, vector<16x128xf32>
    tpu.vector_store %arg12[%c0_400, %c128_401], %549 {strides = array<i32>} : memref<16x384xf32, #tpu.memory_space<vmem>>, vector<16x128xf32>,
    %cst_402 = arith.constant 0.000000e+00 : f32
    %551 = vector.broadcast %cst_402 : f32 to vector<4x128xf32>
    %c0_403 = arith.constant 0 : index
    %c119_404 = arith.constant 119 : index
    %552 = vector.load %arg12[%c0_403, %c119_404] : memref<16x384xf32, #tpu.memory_space<vmem>>, vector<16x128xf32>
    %c0_405 = arith.constant 0 : index
    %c0_406 = arith.constant 0 : index
    %c0_407 = arith.constant 0 : index
    %553 = vector.load %arg10[%c0_405, %c0_406, %c0_407] : memref<9x1x128xf32, #tpu.memory_space<vmem>>, vector<1x1x128xf32>
    %554 = vector.shape_cast %553 : vector<1x1x128xf32> to vector<1x128xf32>
    %555 = vector.broadcast %554 : vector<1x128xf32> to vector<16x128xf32>
    %556 = arith.mulf %552, %555 : vector<16x128xf32>
    %c0_408 = arith.constant 0 : index
    %c0_409 = arith.constant 0 : index
    %c0_410 = arith.constant 0 : index
    %557 = vector.load %arg8[%c0_408, %c0_409, %c0_410] : memref<9x4x16xf32, #tpu.memory_space<vmem>>, vector<1x4x16xf32>
    %558 = vector.shape_cast %557 : vector<1x4x16xf32> to vector<4x16xf32>
    %cst_411 = arith.constant dense<0.000000e+00> : vector<4x128xf32>
    %559 = tpu.matmul %558, %556, %cst_411 {dimension_numbers = #tpu.dot_dimension_numbers<[1], [0], [0], [1], [0, 0, 1, 1], [], []>} : vector<4x16xf32>, vector<16x128xf32>, vector<4x128xf32> -> vector<4x128xf32>
    %560 = arith.addf %551, %559 : vector<4x128xf32>
    %c0_412 = arith.constant 0 : index
    %c120_413 = arith.constant 120 : index
    %561 = vector.load %arg12[%c0_412, %c120_413] : memref<16x384xf32, #tpu.memory_space<vmem>>, vector<16x128xf32>
    %c1_414 = arith.constant 1 : index
    %c0_415 = arith.constant 0 : index
    %c0_416 = arith.constant 0 : index
    %562 = vector.load %arg10[%c1_414, %c0_415, %c0_416] : memref<9x1x128xf32, #tpu.memory_space<vmem>>, vector<1x1x128xf32>
    %563 = vector.shape_cast %562 : vector<1x1x128xf32> to vector<1x128xf32>
    %564 = vector.broadcast %563 : vector<1x128xf32> to vector<16x128xf32>
    %565 = arith.mulf %561, %564 : vector<16x128xf32>
    %c1_417 = arith.constant 1 : index
    %c0_418 = arith.constant 0 : index
    %c0_419 = arith.constant 0 : index
    %566 = vector.load %arg8[%c1_417, %c0_418, %c0_419] : memref<9x4x16xf32, #tpu.memory_space<vmem>>, vector<1x4x16xf32>
    %567 = vector.shape_cast %566 : vector<1x4x16xf32> to vector<4x16xf32>
    %cst_420 = arith.constant dense<0.000000e+00> : vector<4x128xf32>
    %568 = tpu.matmul %567, %565, %cst_420 {dimension_numbers = #tpu.dot_dimension_numbers<[1], [0], [0], [1], [0, 0, 1, 1], [], []>} : vector<4x16xf32>, vector<16x128xf32>, vector<4x128xf32> -> vector<4x128xf32>
    %569 = arith.addf %560, %568 : vector<4x128xf32>
    %c0_421 = arith.constant 0 : index
    %c121_422 = arith.constant 121 : index
    %570 = vector.load %arg12[%c0_421, %c121_422] : memref<16x384xf32, #tpu.memory_space<vmem>>, vector<16x128xf32>
    %c2_423 = arith.constant 2 : index
    %c0_424 = arith.constant 0 : index
    %c0_425 = arith.constant 0 : index
    %571 = vector.load %arg10[%c2_423, %c0_424, %c0_425] : memref<9x1x128xf32, #tpu.memory_space<vmem>>, vector<1x1x128xf32>
    %572 = vector.shape_cast %571 : vector<1x1x128xf32> to vector<1x128xf32>
    %573 = vector.broadcast %572 : vector<1x128xf32> to vector<16x128xf32>
    %574 = arith.mulf %570, %573 : vector<16x128xf32>
    %c2_426 = arith.constant 2 : index
    %c0_427 = arith.constant 0 : index
    %c0_428 = arith.constant 0 : index
    %575 = vector.load %arg8[%c2_426, %c0_427, %c0_428] : memref<9x4x16xf32, #tpu.memory_space<vmem>>, vector<1x4x16xf32>
    %576 = vector.shape_cast %575 : vector<1x4x16xf32> to vector<4x16xf32>
    %cst_429 = arith.constant dense<0.000000e+00> : vector<4x128xf32>
    %577 = tpu.matmul %576, %574, %cst_429 {dimension_numbers = #tpu.dot_dimension_numbers<[1], [0], [0], [1], [0, 0, 1, 1], [], []>} : vector<4x16xf32>, vector<16x128xf32>, vector<4x128xf32> -> vector<4x128xf32>
    %578 = arith.addf %569, %577 : vector<4x128xf32>
    %c0_430 = arith.constant 0 : index
    %c127_431 = arith.constant 127 : index
    %579 = vector.load %arg12[%c0_430, %c127_431] : memref<16x384xf32, #tpu.memory_space<vmem>>, vector<16x128xf32>
    %c3_432 = arith.constant 3 : index
    %c0_433 = arith.constant 0 : index
    %c0_434 = arith.constant 0 : index
    %580 = vector.load %arg10[%c3_432, %c0_433, %c0_434] : memref<9x1x128xf32, #tpu.memory_space<vmem>>, vector<1x1x128xf32>
    %581 = vector.shape_cast %580 : vector<1x1x128xf32> to vector<1x128xf32>
    %582 = vector.broadcast %581 : vector<1x128xf32> to vector<16x128xf32>
    %583 = arith.mulf %579, %582 : vector<16x128xf32>
    %c3_435 = arith.constant 3 : index
    %c0_436 = arith.constant 0 : index
    %c0_437 = arith.constant 0 : index
    %584 = vector.load %arg8[%c3_435, %c0_436, %c0_437] : memref<9x4x16xf32, #tpu.memory_space<vmem>>, vector<1x4x16xf32>
    %585 = vector.shape_cast %584 : vector<1x4x16xf32> to vector<4x16xf32>
    %cst_438 = arith.constant dense<0.000000e+00> : vector<4x128xf32>
    %586 = tpu.matmul %585, %583, %cst_438 {dimension_numbers = #tpu.dot_dimension_numbers<[1], [0], [0], [1], [0, 0, 1, 1], [], []>} : vector<4x16xf32>, vector<16x128xf32>, vector<4x128xf32> -> vector<4x128xf32>
    %587 = arith.addf %578, %586 : vector<4x128xf32>
    %c0_439 = arith.constant 0 : index
    %c128_440 = arith.constant 128 : index
    %588 = vector.load %arg12[%c0_439, %c128_440] : memref<16x384xf32, #tpu.memory_space<vmem>>, vector<16x128xf32>
    %c4_441 = arith.constant 4 : index
    %c0_442 = arith.constant 0 : index
    %c0_443 = arith.constant 0 : index
    %589 = vector.load %arg8[%c4_441, %c0_442, %c0_443] : memref<9x4x16xf32, #tpu.memory_space<vmem>>, vector<1x4x16xf32>
    %590 = vector.shape_cast %589 : vector<1x4x16xf32> to vector<4x16xf32>
    %cst_444 = arith.constant dense<0.000000e+00> : vector<4x128xf32>
    %591 = tpu.matmul %590, %588, %cst_444 {dimension_numbers = #tpu.dot_dimension_numbers<[1], [0], [0], [1], [0, 0, 1, 1], [], []>} : vector<4x16xf32>, vector<16x128xf32>, vector<4x128xf32> -> vector<4x128xf32>
    %592 = arith.addf %587, %591 : vector<4x128xf32>
    %c0_445 = arith.constant 0 : index
    %c129_446 = arith.constant 129 : index
    %593 = vector.load %arg12[%c0_445, %c129_446] : memref<16x384xf32, #tpu.memory_space<vmem>>, vector<16x128xf32>
    %c5_447 = arith.constant 5 : index
    %c0_448 = arith.constant 0 : index
    %c0_449 = arith.constant 0 : index
    %594 = vector.load %arg10[%c5_447, %c0_448, %c0_449] : memref<9x1x128xf32, #tpu.memory_space<vmem>>, vector<1x1x128xf32>
    %595 = vector.shape_cast %594 : vector<1x1x128xf32> to vector<1x128xf32>
    %596 = vector.broadcast %595 : vector<1x128xf32> to vector<16x128xf32>
    %597 = arith.mulf %593, %596 : vector<16x128xf32>
    %c5_450 = arith.constant 5 : index
    %c0_451 = arith.constant 0 : index
    %c0_452 = arith.constant 0 : index
    %598 = vector.load %arg8[%c5_450, %c0_451, %c0_452] : memref<9x4x16xf32, #tpu.memory_space<vmem>>, vector<1x4x16xf32>
    %599 = vector.shape_cast %598 : vector<1x4x16xf32> to vector<4x16xf32>
    %cst_453 = arith.constant dense<0.000000e+00> : vector<4x128xf32>
    %600 = tpu.matmul %599, %597, %cst_453 {dimension_numbers = #tpu.dot_dimension_numbers<[1], [0], [0], [1], [0, 0, 1, 1], [], []>} : vector<4x16xf32>, vector<16x128xf32>, vector<4x128xf32> -> vector<4x128xf32>
    %601 = arith.addf %592, %600 : vector<4x128xf32>
    %c0_454 = arith.constant 0 : index
    %c135_455 = arith.constant 135 : index
    %602 = vector.load %arg12[%c0_454, %c135_455] : memref<16x384xf32, #tpu.memory_space<vmem>>, vector<16x128xf32>
    %c6_456 = arith.constant 6 : index
    %c0_457 = arith.constant 0 : index
    %c0_458 = arith.constant 0 : index
    %603 = vector.load %arg10[%c6_456, %c0_457, %c0_458] : memref<9x1x128xf32, #tpu.memory_space<vmem>>, vector<1x1x128xf32>
    %604 = vector.shape_cast %603 : vector<1x1x128xf32> to vector<1x128xf32>
    %605 = vector.broadcast %604 : vector<1x128xf32> to vector<16x128xf32>
    %606 = arith.mulf %602, %605 : vector<16x128xf32>
    %c6_459 = arith.constant 6 : index
    %c0_460 = arith.constant 0 : index
    %c0_461 = arith.constant 0 : index
    %607 = vector.load %arg8[%c6_459, %c0_460, %c0_461] : memref<9x4x16xf32, #tpu.memory_space<vmem>>, vector<1x4x16xf32>
    %608 = vector.shape_cast %607 : vector<1x4x16xf32> to vector<4x16xf32>
    %cst_462 = arith.constant dense<0.000000e+00> : vector<4x128xf32>
    %609 = tpu.matmul %608, %606, %cst_462 {dimension_numbers = #tpu.dot_dimension_numbers<[1], [0], [0], [1], [0, 0, 1, 1], [], []>} : vector<4x16xf32>, vector<16x128xf32>, vector<4x128xf32> -> vector<4x128xf32>
    %610 = arith.addf %601, %609 : vector<4x128xf32>
    %c0_463 = arith.constant 0 : index
    %c136_464 = arith.constant 136 : index
    %611 = vector.load %arg12[%c0_463, %c136_464] : memref<16x384xf32, #tpu.memory_space<vmem>>, vector<16x128xf32>
    %c7_465 = arith.constant 7 : index
    %c0_466 = arith.constant 0 : index
    %c0_467 = arith.constant 0 : index
    %612 = vector.load %arg10[%c7_465, %c0_466, %c0_467] : memref<9x1x128xf32, #tpu.memory_space<vmem>>, vector<1x1x128xf32>
    %613 = vector.shape_cast %612 : vector<1x1x128xf32> to vector<1x128xf32>
    %614 = vector.broadcast %613 : vector<1x128xf32> to vector<16x128xf32>
    %615 = arith.mulf %611, %614 : vector<16x128xf32>
    %c7_468 = arith.constant 7 : index
    %c0_469 = arith.constant 0 : index
    %c0_470 = arith.constant 0 : index
    %616 = vector.load %arg8[%c7_468, %c0_469, %c0_470] : memref<9x4x16xf32, #tpu.memory_space<vmem>>, vector<1x4x16xf32>
    %617 = vector.shape_cast %616 : vector<1x4x16xf32> to vector<4x16xf32>
    %cst_471 = arith.constant dense<0.000000e+00> : vector<4x128xf32>
    %618 = tpu.matmul %617, %615, %cst_471 {dimension_numbers = #tpu.dot_dimension_numbers<[1], [0], [0], [1], [0, 0, 1, 1], [], []>} : vector<4x16xf32>, vector<16x128xf32>, vector<4x128xf32> -> vector<4x128xf32>
    %619 = arith.addf %610, %618 : vector<4x128xf32>
    %c0_472 = arith.constant 0 : index
    %c137_473 = arith.constant 137 : index
    %620 = vector.load %arg12[%c0_472, %c137_473] : memref<16x384xf32, #tpu.memory_space<vmem>>, vector<16x128xf32>
    %c8_474 = arith.constant 8 : index
    %c0_475 = arith.constant 0 : index
    %c0_476 = arith.constant 0 : index
    %621 = vector.load %arg10[%c8_474, %c0_475, %c0_476] : memref<9x1x128xf32, #tpu.memory_space<vmem>>, vector<1x1x128xf32>
    %622 = vector.shape_cast %621 : vector<1x1x128xf32> to vector<1x128xf32>
    %623 = vector.broadcast %622 : vector<1x128xf32> to vector<16x128xf32>
    %624 = arith.mulf %620, %623 : vector<16x128xf32>
    %c8_477 = arith.constant 8 : index
    %c0_478 = arith.constant 0 : index
    %c0_479 = arith.constant 0 : index
    %625 = vector.load %arg8[%c8_477, %c0_478, %c0_479] : memref<9x4x16xf32, #tpu.memory_space<vmem>>, vector<1x4x16xf32>
    %626 = vector.shape_cast %625 : vector<1x4x16xf32> to vector<4x16xf32>
    %cst_480 = arith.constant dense<0.000000e+00> : vector<4x128xf32>
    %627 = tpu.matmul %626, %624, %cst_480 {dimension_numbers = #tpu.dot_dimension_numbers<[1], [0], [0], [1], [0, 0, 1, 1], [], []>} : vector<4x16xf32>, vector<16x128xf32>, vector<4x128xf32> -> vector<4x128xf32>
    %628 = arith.addf %619, %627 : vector<4x128xf32>
    %c0_481 = arith.constant 0 : index
    %c0_482 = arith.constant 0 : index
    %629 = vector.load %arg9[%c0_481, %c0_482] : memref<4x1xf32, #tpu.memory_space<vmem>>, vector<4x1xf32>
    %630 = vector.broadcast %629 : vector<4x1xf32> to vector<4x128xf32>
    %631 = arith.addf %628, %630 : vector<4x128xf32>
    %c0_483 = arith.constant 0 : index
    %c0_484 = arith.constant 0 : index
    %632 = vector.load %arg11[%c0_483, %c0_484] : memref<4x128xf32, #tpu.memory_space<vmem>>, vector<4x128xf32>
    tpu.vector_store %arg11[%c0_483, %c0_484], %631 {strides = array<i32>} : memref<4x128xf32, #tpu.memory_space<vmem>>, vector<4x128xf32>,
    return
  }
  func.func @transform_0(%arg0: i32) -> (i32, i32) {
    %c0_i32 = arith.constant 0 : i32
    %c0_i32_0 = arith.constant 0 : i32
    %c0_i32_1 = arith.constant 0 : i32
    return %c0_i32, %c0_i32_0 : i32, i32
  }
  func.func @transform_1(%arg0: i32) -> (i32, i32, i32) {
    %c0_i32 = arith.constant 0 : i32
    %c0_i32_0 = arith.constant 0 : i32
    %c0_i32_1 = arith.constant 0 : i32
    %c0_i32_2 = arith.constant 0 : i32
    return %c0_i32, %c0_i32_0, %c0_i32_1 : i32, i32, i32
  }
  func.func @transform_2(%arg0: i32) -> (i32, i32) {
    %c0_i32 = arith.constant 0 : i32
    %c0_i32_0 = arith.constant 0 : i32
    %c0_i32_1 = arith.constant 0 : i32
    return %c0_i32, %c0_i32_0 : i32, i32
  }
  func.func @transform_3(%arg0: i32) -> (i32, i32, i32, i32) {
    %c0_i32 = arith.constant 0 : i32
    %c0_i32_0 = arith.constant 0 : i32
    %c0_i32_1 = arith.constant 0 : i32
    %c0_i32_2 = arith.constant 0 : i32
    %c0_i32_3 = arith.constant 0 : i32
    return %c0_i32, %c0_i32_0, %c0_i32_1, %c0_i32_2 : i32, i32, i32, i32
  }
  func.func @transform_4(%arg0: i32) -> (i32, i32, i32) {
    %c0_i32 = arith.constant 0 : i32
    %c0_i32_0 = arith.constant 0 : i32
    %c0_i32_1 = arith.constant 0 : i32
    %c0_i32_2 = arith.constant 0 : i32
    return %c0_i32, %c0_i32_0, %c0_i32_1 : i32, i32, i32
  }
  func.func @transform_5(%arg0: i32) -> (i32, i32, i32) {
    %c0_i32 = arith.constant 0 : i32
    %c0_i32_0 = arith.constant 0 : i32
    %c0_i32_1 = arith.constant 0 : i32
    %c0_i32_2 = arith.constant 0 : i32
    return %c0_i32, %c0_i32_0, %c0_i32_1 : i32, i32, i32
  }
  func.func @transform_6(%arg0: i32) -> (i32, i32, i32) {
    %c0_i32 = arith.constant 0 : i32
    %c0_i32_0 = arith.constant 0 : i32
    %c0_i32_1 = arith.constant 0 : i32
    %c0_i32_2 = arith.constant 0 : i32
    return %c0_i32, %c0_i32_0, %c0_i32_1 : i32, i32, i32
  }
  func.func @transform_7(%arg0: i32) -> (i32, i32, i32) {
    %c0_i32 = arith.constant 0 : i32
    %c0_i32_0 = arith.constant 0 : i32
    %c0_i32_1 = arith.constant 0 : i32
    %c0_i32_2 = arith.constant 0 : i32
    return %c0_i32, %c0_i32_0, %c0_i32_1 : i32, i32, i32
  }
  func.func @transform_8(%arg0: i32) -> (i32, i32) {
    %c0_i32 = arith.constant 0 : i32
    %c0_i32_0 = arith.constant 0 : i32
    %c0_i32_1 = arith.constant 0 : i32
    return %c0_i32, %c0_i32_0 : i32, i32
  }
  func.func @transform_9(%arg0: i32) -> (i32, i32, i32) {
    %c0_i32 = arith.constant 0 : i32
    %c0_i32_0 = arith.constant 0 : i32
    %c0_i32_1 = arith.constant 0 : i32
    %c0_i32_2 = arith.constant 0 : i32
    return %c0_i32, %c0_i32_0, %c0_i32_1 : i32, i32, i32
  }
  func.func @transform_10(%arg0: i32) -> (i32, i32) {
    %c0_i32 = arith.constant 0 : i32
    %c0_i32_0 = arith.constant 0 : i32
    %c0_i32_1 = arith.constant 0 : i32
    return %c0_i32, %c0_i32_0 : i32, i32
  }
}

</mosaic_0001>

<llo_original>
// kernel: decoder_forward.1
$region0: #{decoder_forward.1}
  #allocation0 [shape = 'u32[]', space=smem, size = 0x4, offset = 0x4, fixed_abs, tag = 'smem constant byte address 0x4 - core index']
  #allocation1 [shape = 'u32[144,128]{1,0:T(1,128)}', space=vmem, size = 0x12000, scoped, tag = 'internal scratch']
  #allocation2 [shape = 'f32[16,384]{1,0:T(8,128)}', space=vmem, size = 0x6000, scoped, tag = 'scratch operand']
  %s0 = inlined_call_operand.vmem [shape: f32[2,32], index: 0, kind: input, shape index: {}]
  %s1 = inlined_call_operand.hbm [shape: f32[32,16,64], index: 1, kind: input, shape index: {}]
  %s2 = inlined_call_operand.vmem [shape: f32[16,64], index: 2, kind: input, shape index: {}]
  %s3 = inlined_call_operand.hbm [shape: f32[2,9,16,16], index: 3, kind: input, shape index: {}]
  %s4 = inlined_call_operand.vmem [shape: f32[2,16,1], index: 4, kind: input, shape index: {}]
  %s5 = inlined_call_operand.vmem [shape: f32[2,16,1], index: 5, kind: input, shape index: {}]
  %s6 = inlined_call_operand.vmem [shape: f32[2,16,1], index: 6, kind: input, shape index: {}]
  %s7 = inlined_call_operand.vmem [shape: f32[9,4,16], index: 7, kind: input, shape index: {}]
  %s8 = inlined_call_operand.vmem [shape: f32[4,1], index: 8, kind: input, shape index: {}]
  %s9 = inlined_call_operand.vmem [shape: f32[9,1,128], index: 9, kind: input, shape index: {}]
  %s10 = inlined_call_operand.vmem [shape: f32[4,128], index: 10, kind: output, shape index: {}]
  %s11 = sld [smem:[#allocation0]]
  $region62: #{decoder_forward.1} parent=0
    _
  %s13 = ssub.s32 1, %s11
  %s14 = scalar_select 0, %s13, %s11
  $region1: #{decoder_forward.1} parent=0
    #allocation3 [shape = 'u8[1024]{0}', space=smem, size = 0x400, scoped, tag = 'input window, operand 0, single buffered']
    #allocation4 [shape = 's32[1]{0}', space=sflag, size = 0x4, scoped, tag = 'scoped memory for decoder_forward.1']
    #allocation5 [shape = 's32[1]{0}', space=sflag, size = 0x4, scoped, tag = 'scoped memory for decoder_forward.1']
    #allocation6 [shape = 'u8[262144]{0}', space=vmem, size = 0x40000, scoped, tag = 'input window, operand 1, single buffered']
    #allocation7 [shape = 'u8[147456]{0}', space=vmem, size = 0x24000, scoped, tag = 'input window, operand 3, single buffered']
    #allocation8 [shape = 's32[1]{0}', space=sflag, size = 0x4, scoped, tag = 'scoped memory for decoder_forward.1']
    %15 = vsyncpa [#allocation5], 0
    %16 = vsyncpa [#allocation4], 0
    %17 = vsyncpa [#allocation8], 0
    // Predicated region
    $region2: #{decoder_forward.1} parent=1 // pred_check
      _
    $region3: #{decoder_forward.1} parent=1 // pred_check_branch
      %19 = sbr.rel (0) target = $region5
    $region4: #{decoder_forward.1} parent=1 // pred_region
      %s21 = ssub.s32 32, 32
      %22 = vsyncadd [#allocation5], %s21
      %s24 = sshll.u32 %s0, 4
      %s25 = int_to_ptr.vmem [resolvable:$true] %s24
      %27 = dma.vmem_to_smem %s25, 32, [#allocation3], [#allocation5]
    $region5: #{decoder_forward.1} parent=1 // pred_fallthru
      _
    // Predicated region
    $region6: #{decoder_forward.1} parent=1 // pred_check
      _
    $region7: #{decoder_forward.1} parent=1 // pred_check_branch
      %29 = sbr.rel (0) target = $region9
    $region8: #{decoder_forward.1} parent=1 // pred_region
      %s31 = ssub.s32 8192, 8192
      %32 = vsyncadd [#allocation4], %s31
      %s33 = sshll.u32 [#allocation6], 4
      %s34 = int_to_ptr.vmem [resolvable:$true] %s33
      %39 = dma.hbm_to_vmem [thread:$0]  %s1, 8192, %s34, [#allocation4], 128, 128, 8
    $region9: #{decoder_forward.1} parent=1 // pred_fallthru
      _
    // Predicated region
    $region10: #{decoder_forward.1} parent=1 // pred_check
      _
    $region11: #{decoder_forward.1} parent=1 // pred_check_branch
      %41 = sbr.rel (0) target = $region13
    $region12: #{decoder_forward.1} parent=1 // pred_region
      _
    $region13: #{decoder_forward.1} parent=1 // pred_fallthru
      _
    // Predicated region
    $region14: #{decoder_forward.1} parent=1 // pred_check
      _
    $region15: #{decoder_forward.1} parent=1 // pred_check_branch
      %43 = sbr.rel (0) target = $region17
    $region16: #{decoder_forward.1} parent=1 // pred_region
      %s45 = ssub.s32 4608, 4608
      %46 = vsyncadd [#allocation8], %s45
      %s47 = sshll.u32 [#allocation7], 4
      %s48 = int_to_ptr.vmem [resolvable:$true] %s47
      %53 = dma.hbm_to_vmem [thread:$0]  %s3, 4608, %s48, [#allocation8], 128, 128, 8
    $region17: #{decoder_forward.1} parent=1 // pred_fallthru
      _
    // Predicated region
    $region18: #{decoder_forward.1} parent=1 // pred_check
      _
    $region19: #{decoder_forward.1} parent=1 // pred_check_branch
      %55 = sbr.rel (0) target = $region21
    $region20: #{decoder_forward.1} parent=1 // pred_region
      _
    $region21: #{decoder_forward.1} parent=1 // pred_fallthru
      _
    // Predicated region
    $region22: #{decoder_forward.1} parent=1 // pred_check
      _
    $region23: #{decoder_forward.1} parent=1 // pred_check_branch
      %57 = sbr.rel (0) target = $region25
    $region24: #{decoder_forward.1} parent=1 // pred_region
      _
    $region25: #{decoder_forward.1} parent=1 // pred_fallthru
      _
    // Predicated region
    $region26: #{decoder_forward.1} parent=1 // pred_check
      _
    $region27: #{decoder_forward.1} parent=1 // pred_check_branch
      %59 = sbr.rel (0) target = $region29
    $region28: #{decoder_forward.1} parent=1 // pred_region
      _
    $region29: #{decoder_forward.1} parent=1 // pred_fallthru
      _
    // Predicated region
    $region30: #{decoder_forward.1} parent=1 // pred_check
      _
    $region31: #{decoder_forward.1} parent=1 // pred_check_branch
      %61 = sbr.rel (0) target = $region33
    $region32: #{decoder_forward.1} parent=1 // pred_region
      _
    $region33: #{decoder_forward.1} parent=1 // pred_fallthru
      _
    // Predicated region
    $region34: #{decoder_forward.1} parent=1 // pred_check
      _
    $region35: #{decoder_forward.1} parent=1 // pred_check_branch
      %63 = sbr.rel (0) target = $region37
    $region36: #{decoder_forward.1} parent=1 // pred_region
      _
    $region37: #{decoder_forward.1} parent=1 // pred_fallthru
      _
    // Predicated region
    $region38: #{decoder_forward.1} parent=1 // pred_check
      _
    $region39: #{decoder_forward.1} parent=1 // pred_check_branch
      %65 = sbr.rel (0) target = $region41
    $region40: #{decoder_forward.1} parent=1 // pred_region
      _
    $region41: #{decoder_forward.1} parent=1 // pred_fallthru
      _
    // Predicated region
    $region42: #{decoder_forward.1} parent=1 // pred_check
      _
    $region43: #{decoder_forward.1} parent=1 // pred_check_branch
      %67 = sbr.rel (0) target = $region45
    $region44: #{decoder_forward.1} parent=1 // pred_region
      %68 = dma.done [#allocation5], 32
    $region45: #{decoder_forward.1} parent=1 // pred_fallthru
      _
    // Predicated region
    $region46: #{decoder_forward.1} parent=1 // pred_check
      _
    $region47: #{decoder_forward.1} parent=1 // pred_check_branch
      %70 = sbr.rel (0) target = $region49
    $region48: #{decoder_forward.1} parent=1 // pred_region
      %71 = dma.done [#allocation4], 8192
    $region49: #{decoder_forward.1} parent=1 // pred_fallthru
      _
    // Predicated region
    $region50: #{decoder_forward.1} parent=1 // pred_check
      _
    $region51: #{decoder_forward.1} parent=1 // pred_check_branch
      %73 = sbr.rel (0) target = $region53
    $region52: #{decoder_forward.1} parent=1 // pred_region
      %74 = dma.done [#allocation8], 4608
    $region53: #{decoder_forward.1} parent=1 // pred_fallthru
      _
    %75 = sfence
    %76 = vst [vmem:[#allocation2] sm:$0xff] 0.0
    %77 = vst [vmem:[#allocation2 + $0x8] sm:$0xff] 0.0
    %78 = vst [vmem:[#allocation2 + $0x10] sm:$0xff] 0.0
    %79 = vst [vmem:[#allocation2 + $0x18] sm:$0xff] 0.0
    %80 = vst [vmem:[#allocation2 + $0x20] sm:$0xff] 0.0
    %81 = vst [vmem:[#allocation2 + $0x28] sm:$0xff] 0.0
    %v82 = vld [vmem:[%s2] sm:$0xff]
    %v83 = vld [vmem:[%s2 + $0x8] sm:$0xff]
    %v84 = vld [vmem:[#allocation6] sm:$0xff]
    %v85 = vld [vmem:[#allocation6 + $0x8] sm:$0xff]
    %s86 = sld [smem:[#allocation3]]
    %v87 = vstv %s86
    %v88 = vmul.f32 %v84, %v87
    %v89 = vmul.f32 %v85, %v87
    %v90 = vadd.f32 %v82, %v88
    %v91 = vadd.f32 %v83, %v89
    %s92 = sld [smem:[#allocation3 + $0x80]]
    %v93 = vstv %s92
    %v94 = vmul.f32 %v84, %v93
    %v95 = vmul.f32 %v85, %v93
    %v96 = vadd.f32 %v82, %v94
    %v97 = vadd.f32 %v83, %v95
    %s98 = scalar_lea.vmem [#allocation6], 16
    %v99 = vld [vmem:[%s98] sm:$0xff]
    %v100 = vld [vmem:[%s98 + $0x8] sm:$0xff]
    %s101 = sld [smem:[#allocation3 + $0x1]]
    %v102 = vstv %s101
    %v103 = vmul.f32 %v99, %v102
    %v104 = vmul.f32 %v100, %v102
    %v105 = vadd.f32 %v90, %v103
    %v106 = vadd.f32 %v91, %v104
    %s107 = sld [smem:[#allocation3 + $0x81]]
    %v108 = vstv %s107
    %v109 = vmul.f32 %v99, %v108
    %v110 = vmul.f32 %v100, %v108
    %v111 = vadd.f32 %v96, %v109
    %v112 = vadd.f32 %v97, %v110
    %s113 = scalar_lea.vmem [#allocation6], 32
    %v114 = vld [vmem:[%s113] sm:$0xff]
    %v115 = vld [vmem:[%s113 + $0x8] sm:$0xff]
    %s116 = sld [smem:[#allocation3 + $0x2]]
    %v117 = vstv %s116
    %v118 = vmul.f32 %v114, %v117
    %v119 = vmul.f32 %v115, %v117
    %v120 = vadd.f32 %v105, %v118
    %v121 = vadd.f32 %v106, %v119
    %s122 = sld [smem:[#allocation3 + $0x82]]
    %v123 = vstv %s122
    %v124 = vmul.f32 %v114, %v123
    %v125 = vmul.f32 %v115, %v123
    %v126 = vadd.f32 %v111, %v124
    %v127 = vadd.f32 %v112, %v125
    %s128 = scalar_lea.vmem [#allocation6], 48
    %v129 = vld [vmem:[%s128] sm:$0xff]
    %v130 = vld [vmem:[%s128 + $0x8] sm:$0xff]
    %s131 = sld [smem:[#allocation3 + $0x3]]
    %v132 = vstv %s131
    %v133 = vmul.f32 %v129, %v132
    %v134 = vmul.f32 %v130, %v132
    %v135 = vadd.f32 %v120, %v133
    %v136 = vadd.f32 %v121, %v134
    %s137 = sld [smem:[#allocation3 + $0x83]]
    %v138 = vstv %s137
    %v139 = vmul.f32 %v129, %v138
    %v140 = vmul.f32 %v130, %v138
    %v141 = vadd.f32 %v126, %v139
    %v142 = vadd.f32 %v127, %v140
    %s143 = scalar_lea.vmem [#allocation6], 64
    %v144 = vld [vmem:[%s143] sm:$0xff]
    %v145 = vld [vmem:[%s143 + $0x8] sm:$0xff]
    %s146 = sld [smem:[#allocation3 + $0x4]]
    %v147 = vstv %s146
    %v148 = vmul.f32 %v144, %v147
    %v149 = vmul.f32 %v145, %v147
    %v150 = vadd.f32 %v135, %v148
    %v151 = vadd.f32 %v136, %v149
    %s152 = sld [smem:[#allocation3 + $0x84]]
    %v153 = vstv %s152
    %v154 = vmul.f32 %v144, %v153
    %v155 = vmul.f32 %v145, %v153
    %v156 = vadd.f32 %v141, %v154
    %v157 = vadd.f32 %v142, %v155
    %s158 = scalar_lea.vmem [#allocation6], 80
    %v159 = vld [vmem:[%s158] sm:$0xff]
    %v160 = vld [vmem:[%s158 + $0x8] sm:$0xff]
    %s161 = sld [smem:[#allocation3 + $0x5]]
    %v162 = vstv %s161
    %v163 = vmul.f32 %v159, %v162
    %v164 = vmul.f32 %v160, %v162
    %v165 = vadd.f32 %v150, %v163
    %v166 = vadd.f32 %v151, %v164
    %s167 = sld [smem:[#allocation3 + $0x85]]
    %v168 = vstv %s167
    %v169 = vmul.f32 %v159, %v168
    %v170 = vmul.f32 %v160, %v168
    %v171 = vadd.f32 %v156, %v169
    %v172 = vadd.f32 %v157, %v170
    %s173 = scalar_lea.vmem [#allocation6], 96
    %v174 = vld [vmem:[%s173] sm:$0xff]
    %v175 = vld [vmem:[%s173 + $0x8] sm:$0xff]
    %s176 = sld [smem:[#allocation3 + $0x6]]
    %v177 = vstv %s176
    %v178 = vmul.f32 %v174, %v177
    %v179 = vmul.f32 %v175, %v177
    %v180 = vadd.f32 %v165, %v178
    %v181 = vadd.f32 %v166, %v179
    %s182 = sld [smem:[#allocation3 + $0x86]]
    %v183 = vstv %s182
    %v184 = vmul.f32 %v174, %v183
    %v185 = vmul.f32 %v175, %v183
    %v186 = vadd.f32 %v171, %v184
    %v187 = vadd.f32 %v172, %v185
    %s188 = scalar_lea.vmem [#allocation6], 112
    %v189 = vld [vmem:[%s188] sm:$0xff]
    %v190 = vld [vmem:[%s188 + $0x8] sm:$0xff]
    %s191 = sld [smem:[#allocation3 + $0x7]]
    %v192 = vstv %s191
    %v193 = vmul.f32 %v189, %v192
    %v194 = vmul.f32 %v190, %v192
    %v195 = vadd.f32 %v180, %v193
    %v196 = vadd.f32 %v181, %v194
    %s197 = sld [smem:[#allocation3 + $0x87]]
    %v198 = vstv %s197
    %v199 = vmul.f32 %v189, %v198
    %v200 = vmul.f32 %v190, %v198
    %v201 = vadd.f32 %v186, %v199
    %v202 = vadd.f32 %v187, %v200
    %s203 = scalar_lea.vmem [#allocation6], 128
    %v204 = vld [vmem:[%s203] sm:$0xff]
    %v205 = vld [vmem:[%s203 + $0x8] sm:$0xff]
    %s206 = sld [smem:[#allocation3 + $0x8]]
    %v207 = vstv %s206
    %v208 = vmul.f32 %v204, %v207
    %v209 = vmul.f32 %v205, %v207
    %v210 = vadd.f32 %v195, %v208
    %v211 = vadd.f32 %v196, %v209
    %s212 = sld [smem:[#allocation3 + $0x88]]
    %v213 = vstv %s212
    %v214 = vmul.f32 %v204, %v213
    %v215 = vmul.f32 %v205, %v213
    %v216 = vadd.f32 %v201, %v214
    %v217 = vadd.f32 %v202, %v215
    %s218 = scalar_lea.vmem [#allocation6], 144
    %v219 = vld [vmem:[%s218] sm:$0xff]
    %v220 = vld [vmem:[%s218 + $0x8] sm:$0xff]
    %s221 = sld [smem:[#allocation3 + $0x9]]
    %v222 = vstv %s221
    %v223 = vmul.f32 %v219, %v222
    %v224 = vmul.f32 %v220, %v222
    %v225 = vadd.f32 %v210, %v223
    %v226 = vadd.f32 %v211, %v224
    %s227 = sld [smem:[#allocation3 + $0x89]]
    %v228 = vstv %s227
    %v229 = vmul.f32 %v219, %v228
    %v230 = vmul.f32 %v220, %v228
    %v231 = vadd.f32 %v216, %v229
    %v232 = vadd.f32 %v217, %v230
    %s233 = scalar_lea.vmem [#allocation6], 160
    %v234 = vld [vmem:[%s233] sm:$0xff]
    %v235 = vld [vmem:[%s233 + $0x8] sm:$0xff]
    %s236 = sld [smem:[#allocation3 + $0xa]]
    %v237 = vstv %s236
    %v238 = vmul.f32 %v234, %v237
    %v239 = vmul.f32 %v235, %v237
    %v240 = vadd.f32 %v225, %v238
    %v241 = vadd.f32 %v226, %v239
    %s242 = sld [smem:[#allocation3 + $0x8a]]
    %v243 = vstv %s242
    %v244 = vmul.f32 %v234, %v243
    %v245 = vmul.f32 %v235, %v243
    %v246 = vadd.f32 %v231, %v244
    %v247 = vadd.f32 %v232, %v245
    %s248 = scalar_lea.vmem [#allocation6], 176
    %v249 = vld [vmem:[%s248] sm:$0xff]
    %v250 = vld [vmem:[%s248 + $0x8] sm:$0xff]
    %s251 = sld [smem:[#allocation3 + $0xb]]
    %v252 = vstv %s251
    %v253 = vmul.f32 %v249, %v252
    %v254 = vmul.f32 %v250, %v252
    %v255 = vadd.f32 %v240, %v253
    %v256 = vadd.f32 %v241, %v254
    %s257 = sld [smem:[#allocation3 + $0x8b]]
    %v258 = vstv %s257
    %v259 = vmul.f32 %v249, %v258
    %v260 = vmul.f32 %v250, %v258
    %v261 = vadd.f32 %v246, %v259
    %v262 = vadd.f32 %v247, %v260
    %s263 = scalar_lea.vmem [#allocation6], 192
    %v264 = vld [vmem:[%s263] sm:$0xff]
    %v265 = vld [vmem:[%s263 + $0x8] sm:$0xff]
    %s266 = sld [smem:[#allocation3 + $0xc]]
    %v267 = vstv %s266
    %v268 = vmul.f32 %v264, %v267
    %v269 = vmul.f32 %v265, %v267
    %v270 = vadd.f32 %v255, %v268
    %v271 = vadd.f32 %v256, %v269
    %s272 = sld [smem:[#allocation3 + $0x8c]]
    %v273 = vstv %s272
    %v274 = vmul.f32 %v264, %v273
    %v275 = vmul.f32 %v265, %v273
    %v276 = vadd.f32 %v261, %v274
    %v277 = vadd.f32 %v262, %v275
    %s278 = scalar_lea.vmem [#allocation6], 208
    %v279 = vld [vmem:[%s278] sm:$0xff]
    %v280 = vld [vmem:[%s278 + $0x8] sm:$0xff]
    %s281 = sld [smem:[#allocation3 + $0xd]]
    %v282 = vstv %s281
    %v283 = vmul.f32 %v279, %v282
    %v284 = vmul.f32 %v280, %v282
    %v285 = vadd.f32 %v270, %v283
    %v286 = vadd.f32 %v271, %v284
    %s287 = sld [smem:[#allocation3 + $0x8d]]
    %v288 = vstv %s287
    %v289 = vmul.f32 %v279, %v288
    %v290 = vmul.f32 %v280, %v288
    %v291 = vadd.f32 %v276, %v289
    %v292 = vadd.f32 %v277, %v290
    %s293 = scalar_lea.vmem [#allocation6], 224
    %v294 = vld [vmem:[%s293] sm:$0xff]
    %v295 = vld [vmem:[%s293 + $0x8] sm:$0xff]
    %s296 = sld [smem:[#allocation3 + $0xe]]
    %v297 = vstv %s296
    %v298 = vmul.f32 %v294, %v297
    %v299 = vmul.f32 %v295, %v297
    %v300 = vadd.f32 %v285, %v298
    %v301 = vadd.f32 %v286, %v299
    %s302 = sld [smem:[#allocation3 + $0x8e]]
    %v303 = vstv %s302
    %v304 = vmul.f32 %v294, %v303
    %v305 = vmul.f32 %v295, %v303
    %v306 = vadd.f32 %v291, %v304
    %v307 = vadd.f32 %v292, %v305
    %s308 = scalar_lea.vmem [#allocation6], 240
    %v309 = vld [vmem:[%s308] sm:$0xff]
    %v310 = vld [vmem:[%s308 + $0x8] sm:$0xff]
    %s311 = sld [smem:[#allocation3 + $0xf]]
    %v312 = vstv %s311
    %v313 = vmul.f32 %v309, %v312
    %v314 = vmul.f32 %v310, %v312
    %v315 = vadd.f32 %v300, %v313
    %v316 = vadd.f32 %v301, %v314
    %s317 = sld [smem:[#allocation3 + $0x8f]]
    %v318 = vstv %s317
    %v319 = vmul.f32 %v309, %v318
    %v320 = vmul.f32 %v310, %v318
    %v321 = vadd.f32 %v306, %v319
    %v322 = vadd.f32 %v307, %v320
    %s323 = scalar_lea.vmem [#allocation6], 256
    %v324 = vld [vmem:[%s323] sm:$0xff]
    %v325 = vld [vmem:[%s323 + $0x8] sm:$0xff]
    %s326 = sld [smem:[#allocation3 + $0x10]]
    %v327 = vstv %s326
    %v328 = vmul.f32 %v324, %v327
    %v329 = vmul.f32 %v325, %v327
    %v330 = vadd.f32 %v315, %v328
    %v331 = vadd.f32 %v316, %v329
    %s332 = sld [smem:[#allocation3 + $0x90]]
    %v333 = vstv %s332
    %v334 = vmul.f32 %v324, %v333
    %v335 = vmul.f32 %v325, %v333
    %v336 = vadd.f32 %v321, %v334
    %v337 = vadd.f32 %v322, %v335
    %s338 = scalar_lea.vmem [#allocation6], 272
    %v339 = vld [vmem:[%s338] sm:$0xff]
    %v340 = vld [vmem:[%s338 + $0x8] sm:$0xff]
    %s341 = sld [smem:[#allocation3 + $0x11]]
    %v342 = vstv %s341
    %v343 = vmul.f32 %v339, %v342
    %v344 = vmul.f32 %v340, %v342
    %v345 = vadd.f32 %v330, %v343
    %v346 = vadd.f32 %v331, %v344
    %s347 = sld [smem:[#allocation3 + $0x91]]
    %v348 = vstv %s347
    %v349 = vmul.f32 %v339, %v348
    %v350 = vmul.f32 %v340, %v348
    %v351 = vadd.f32 %v336, %v349
    %v352 = vadd.f32 %v337, %v350
    %s353 = scalar_lea.vmem [#allocation6], 288
    %v354 = vld [vmem:[%s353] sm:$0xff]
    %v355 = vld [vmem:[%s353 + $0x8] sm:$0xff]
    %s356 = sld [smem:[#allocation3 + $0x12]]
    %v357 = vstv %s356
    %v358 = vmul.f32 %v354, %v357
    %v359 = vmul.f32 %v355, %v357
    %v360 = vadd.f32 %v345, %v358
    %v361 = vadd.f32 %v346, %v359
    %s362 = sld [smem:[#allocation3 + $0x92]]
    %v363 = vstv %s362
    %v364 = vmul.f32 %v354, %v363
    %v365 = vmul.f32 %v355, %v363
    %v366 = vadd.f32 %v351, %v364
    %v367 = vadd.f32 %v352, %v365
    %s368 = scalar_lea.vmem [#allocation6], 304
    %v369 = vld [vmem:[%s368] sm:$0xff]
    %v370 = vld [vmem:[%s368 + $0x8] sm:$0xff]
    %s371 = sld [smem:[#allocation3 + $0x13]]
    %v372 = vstv %s371
    %v373 = vmul.f32 %v369, %v372
    %v374 = vmul.f32 %v370, %v372
    %v375 = vadd.f32 %v360, %v373
    %v376 = vadd.f32 %v361, %v374
    %s377 = sld [smem:[#allocation3 + $0x93]]
    %v378 = vstv %s377
    %v379 = vmul.f32 %v369, %v378
    %v380 = vmul.f32 %v370, %v378
    %v381 = vadd.f32 %v366, %v379
    %v382 = vadd.f32 %v367, %v380
    %s383 = scalar_lea.vmem [#allocation6], 320
    %v384 = vld [vmem:[%s383] sm:$0xff]
    %v385 = vld [vmem:[%s383 + $0x8] sm:$0xff]
    %s386 = sld [smem:[#allocation3 + $0x14]]
    %v387 = vstv %s386
    %v388 = vmul.f32 %v384, %v387
    %v389 = vmul.f32 %v385, %v387
    %v390 = vadd.f32 %v375, %v388
    %v391 = vadd.f32 %v376, %v389
    %s392 = sld [smem:[#allocation3 + $0x94]]
    %v393 = vstv %s392
    %v394 = vmul.f32 %v384, %v393
    %v395 = vmul.f32 %v385, %v393
    %v396 = vadd.f32 %v381, %v394
    %v397 = vadd.f32 %v382, %v395
    %s398 = scalar_lea.vmem [#allocation6], 336
    %v399 = vld [vmem:[%s398] sm:$0xff]
    %v400 = vld [vmem:[%s398 + $0x8] sm:$0xff]
    %s401 = sld [smem:[#allocation3 + $0x15]]
    %v402 = vstv %s401
    %v403 = vmul.f32 %v399, %v402
    %v404 = vmul.f32 %v400, %v402
    %v405 = vadd.f32 %v390, %v403
    %v406 = vadd.f32 %v391, %v404
    %s407 = sld [smem:[#allocation3 + $0x95]]
    %v408 = vstv %s407
    %v409 = vmul.f32 %v399, %v408
    %v410 = vmul.f32 %v400, %v408
    %v411 = vadd.f32 %v396, %v409
    %v412 = vadd.f32 %v397, %v410
    %s413 = scalar_lea.vmem [#allocation6], 352
    %v414 = vld [vmem:[%s413] sm:$0xff]
    %v415 = vld [vmem:[%s413 + $0x8] sm:$0xff]
    %s416 = sld [smem:[#allocation3 + $0x16]]
    %v417 = vstv %s416
    %v418 = vmul.f32 %v414, %v417
    %v419 = vmul.f32 %v415, %v417
    %v420 = vadd.f32 %v405, %v418
    %v421 = vadd.f32 %v406, %v419
    %s422 = sld [smem:[#allocation3 + $0x96]]
    %v423 = vstv %s422
    %v424 = vmul.f32 %v414, %v423
    %v425 = vmul.f32 %v415, %v423
    %v426 = vadd.f32 %v411, %v424
    %v427 = vadd.f32 %v412, %v425
    %s428 = scalar_lea.vmem [#allocation6], 368
    %v429 = vld [vmem:[%s428] sm:$0xff]
    %v430 = vld [vmem:[%s428 + $0x8] sm:$0xff]
    %s431 = sld [smem:[#allocation3 + $0x17]]
    %v432 = vstv %s431
    %v433 = vmul.f32 %v429, %v432
    %v434 = vmul.f32 %v430, %v432
    %v435 = vadd.f32 %v420, %v433
    %v436 = vadd.f32 %v421, %v434
    %s437 = sld [smem:[#allocation3 + $0x97]]
    %v438 = vstv %s437
    %v439 = vmul.f32 %v429, %v438
    %v440 = vmul.f32 %v430, %v438
    %v441 = vadd.f32 %v426, %v439
    %v442 = vadd.f32 %v427, %v440
    %s443 = scalar_lea.vmem [#allocation6], 384
    %v444 = vld [vmem:[%s443] sm:$0xff]
    %v445 = vld [vmem:[%s443 + $0x8] sm:$0xff]
    %s446 = sld [smem:[#allocation3 + $0x18]]
    %v447 = vstv %s446
    %v448 = vmul.f32 %v444, %v447
    %v449 = vmul.f32 %v445, %v447
    %v450 = vadd.f32 %v435, %v448
    %v451 = vadd.f32 %v436, %v449
    %s452 = sld [smem:[#allocation3 + $0x98]]
    %v453 = vstv %s452
    %v454 = vmul.f32 %v444, %v453
    %v455 = vmul.f32 %v445, %v453
    %v456 = vadd.f32 %v441, %v454
    %v457 = vadd.f32 %v442, %v455
    %s458 = scalar_lea.vmem [#allocation6], 400
    %v459 = vld [vmem:[%s458] sm:$0xff]
    %v460 = vld [vmem:[%s458 + $0x8] sm:$0xff]
    %s461 = sld [smem:[#allocation3 + $0x19]]
    %v462 = vstv %s461
    %v463 = vmul.f32 %v459, %v462
    %v464 = vmul.f32 %v460, %v462
    %v465 = vadd.f32 %v450, %v463
    %v466 = vadd.f32 %v451, %v464
    %s467 = sld [smem:[#allocation3 + $0x99]]
    %v468 = vstv %s467
    %v469 = vmul.f32 %v459, %v468
    %v470 = vmul.f32 %v460, %v468
    %v471 = vadd.f32 %v456, %v469
    %v472 = vadd.f32 %v457, %v470
    %s473 = scalar_lea.vmem [#allocation6], 416
    %v474 = vld [vmem:[%s473] sm:$0xff]
    %v475 = vld [vmem:[%s473 + $0x8] sm:$0xff]
    %s476 = sld [smem:[#allocation3 + $0x1a]]
    %v477 = vstv %s476
    %v478 = vmul.f32 %v474, %v477
    %v479 = vmul.f32 %v475, %v477
    %v480 = vadd.f32 %v465, %v478
    %v481 = vadd.f32 %v466, %v479
    %s482 = sld [smem:[#allocation3 + $0x9a]]
    %v483 = vstv %s482
    %v484 = vmul.f32 %v474, %v483
    %v485 = vmul.f32 %v475, %v483
    %v486 = vadd.f32 %v471, %v484
    %v487 = vadd.f32 %v472, %v485
    %s488 = scalar_lea.vmem [#allocation6], 432
    %v489 = vld [vmem:[%s488] sm:$0xff]
    %v490 = vld [vmem:[%s488 + $0x8] sm:$0xff]
    %s491 = sld [smem:[#allocation3 + $0x1b]]
    %v492 = vstv %s491
    %v493 = vmul.f32 %v489, %v492
    %v494 = vmul.f32 %v490, %v492
    %v495 = vadd.f32 %v480, %v493
    %v496 = vadd.f32 %v481, %v494
    %s497 = sld [smem:[#allocation3 + $0x9b]]
    %v498 = vstv %s497
    %v499 = vmul.f32 %v489, %v498
    %v500 = vmul.f32 %v490, %v498
    %v501 = vadd.f32 %v486, %v499
    %v502 = vadd.f32 %v487, %v500
    %s503 = scalar_lea.vmem [#allocation6], 448
    %v504 = vld [vmem:[%s503] sm:$0xff]
    %v505 = vld [vmem:[%s503 + $0x8] sm:$0xff]
    %s506 = sld [smem:[#allocation3 + $0x1c]]
    %v507 = vstv %s506
    %v508 = vmul.f32 %v504, %v507
    %v509 = vmul.f32 %v505, %v507
    %v510 = vadd.f32 %v495, %v508
    %v511 = vadd.f32 %v496, %v509
    %s512 = sld [smem:[#allocation3 + $0x9c]]
    %v513 = vstv %s512
    %v514 = vmul.f32 %v504, %v513
    %v515 = vmul.f32 %v505, %v513
    %v516 = vadd.f32 %v501, %v514
    %v517 = vadd.f32 %v502, %v515
    %s518 = scalar_lea.vmem [#allocation6], 464
    %v519 = vld [vmem:[%s518] sm:$0xff]
    %v520 = vld [vmem:[%s518 + $0x8] sm:$0xff]
    %s521 = sld [smem:[#allocation3 + $0x1d]]
    %v522 = vstv %s521
    %v523 = vmul.f32 %v519, %v522
    %v524 = vmul.f32 %v520, %v522
    %v525 = vadd.f32 %v510, %v523
    %v526 = vadd.f32 %v511, %v524
    %s527 = sld [smem:[#allocation3 + $0x9d]]
    %v528 = vstv %s527
    %v529 = vmul.f32 %v519, %v528
    %v530 = vmul.f32 %v520, %v528
    %v531 = vadd.f32 %v516, %v529
    %v532 = vadd.f32 %v517, %v530
    %s533 = scalar_lea.vmem [#allocation6], 480
    %v534 = vld [vmem:[%s533] sm:$0xff]
    %v535 = vld [vmem:[%s533 + $0x8] sm:$0xff]
    %s536 = sld [smem:[#allocation3 + $0x1e]]
    %v537 = vstv %s536
    %v538 = vmul.f32 %v534, %v537
    %v539 = vmul.f32 %v535, %v537
    %v540 = vadd.f32 %v525, %v538
    %v541 = vadd.f32 %v526, %v539
    %s542 = sld [smem:[#allocation3 + $0x9e]]
    %v543 = vstv %s542
    %v544 = vmul.f32 %v534, %v543
    %v545 = vmul.f32 %v535, %v543
    %v546 = vadd.f32 %v531, %v544
    %v547 = vadd.f32 %v532, %v545
    %s548 = scalar_lea.vmem [#allocation6], 496
    %v549 = vld [vmem:[%s548] sm:$0xff]
    %v550 = vld [vmem:[%s548 + $0x8] sm:$0xff]
    %s551 = sld [smem:[#allocation3 + $0x1f]]
    %v552 = vstv %s551
    %v553 = vmul.f32 %v549, %v552
    %v554 = vmul.f32 %v550, %v552
    %v555 = vadd.f32 %v540, %v553
    %v556 = vadd.f32 %v541, %v554
    %s557 = sld [smem:[#allocation3 + $0x9f]]
    %v558 = vstv %s557
    %v559 = vmul.f32 %v549, %v558
    %v560 = vmul.f32 %v550, %v558
    %v561 = vadd.f32 %v546, %v559
    %v562 = vadd.f32 %v547, %v560
    %v563 = vmax.f32 %v555, 0.0
    %v564 = vmax.f32 %v556, 0.0
    %vm565 = vcmask 523264
    %566 = vst.msk [vmem:[#allocation2 + $0x8] sm:$0xff] %vm565, %v563
    %567 = vst.msk [vmem:[#allocation2 + $0x20] sm:$0xff] %vm565, %v564
    %v568 = vmax.f32 %v561, 0.0
    %v569 = vmax.f32 %v562, 0.0
    %572 = vrot.lane.b32.xlu0 %v568, 64
    %v573 = vpop.permute.xlu0 %572
    %574 = vrot.lane.b32.xlu0 %v569, 64
    %v575 = vpop.permute.xlu0 %574
    %vm578 = vcmask 1048064
    %579 = vst.msk [vmem:[#allocation2 + $0x8] sm:$0xff] %vm578, %v573
    %580 = vst.msk [vmem:[#allocation2 + $0x20] sm:$0xff] %vm578, %v575
    %v581 = vld [vmem:[#allocation2] sm:$0xff]
    %v582 = vld [vmem:[#allocation2 + $0x8] sm:$0xff]
    %v583 = vld [vmem:[#allocation2 + $0x18] sm:$0xff]
    %v584 = vld [vmem:[#allocation2 + $0x20] sm:$0xff]
    %v585 = vld [vmem:[%s9] sm:$0x1]
    %v587 = vlaneseq
    %v588 = vshrl.u32 %v587, 7
    %v589 = vsub.s32 0, %v588
    %v590 = vrot.slane %v585, %v589
    %591 = vrot.lane.b32.xlu0 %v590, 119
    %v592 = vpop.permute.xlu0 %591
    %v594 = vmul.f32 %v581, %v592
    %v595 = vmul.f32 %v582, %v592
    %v596 = vmul.f32 %v583, %v592
    %v597 = vmul.f32 %v584, %v592
    %v598 = vld [vmem:[#allocation7] sm:$0xff]
    %v599 = vld [vmem:[#allocation7 + $0x8] sm:$0xff]
    %s600 = scalar_lea.vmem %s9, 1
    %v601 = vld [vmem:[%s600] sm:$0x1]
    %v603 = vlaneseq
    %v604 = vshrl.u32 %v603, 7
    %v605 = vsub.s32 0, %v604
    %v606 = vrot.slane %v601, %v605
    %607 = vrot.lane.b32.xlu0 %v606, 120
    %v608 = vpop.permute.xlu0 %607
    %v610 = vmul.f32 %v581, %v608
    %v611 = vmul.f32 %v582, %v608
    %v612 = vmul.f32 %v583, %v608
    %v613 = vmul.f32 %v584, %v608
    %s614 = scalar_lea.vmem [#allocation7], 16
    %v615 = vld [vmem:[%s614] sm:$0xff]
    %v616 = vld [vmem:[%s614 + $0x8] sm:$0xff]
    %621 = vrot.lane.b32.xlu0 %v610, 8
    %v622 = vpop.permute.xlu0 %621
    %623 = vrot.lane.b32.xlu0 %v611, 8
    %v624 = vpop.permute.xlu0 %623
    %625 = vrot.lane.b32.xlu0 %v612, 8
    %v626 = vpop.permute.xlu0 %625
    %627 = vrot.lane.b32.xlu0 %v613, 8
    %v628 = vpop.permute.xlu0 %627
    %vm629 = vcmask 64512
    %v630 = vsel %vm629, %v622, %v624
    %v631 = vsel %vm629, %v626, %v628
    %vm634 = vcmask 130048
    %v636 = vsel %vm634, %v615, 0
    %v639 = vsel %vm634, %v616, 0
    %641 = vmatprep.subr.mxu0 0.0
    %642 = vmatpush1.msra.mxu0 %v630
    %643 = vmatprep.subr.mxu0 0.0
    %644 = vmatpush1.msra.mxu0 %v631
    %645 = vmatprep.subr.mxu0 0.0
    %646 = vmatpush1.msra.mxu0 0.0
    %647 = vmatprep.subr.mxu0 0.0
    %648 = vmatpush1.msra.mxu0 0.0
    %649 = vmatprep.subr.mxu0 0.0
    %650 = vmatpush1.msra.mxu0 0.0
    %651 = vmatprep.subr.mxu0 0.0
    %652 = vmatpush1.msra.mxu0 0.0
    %653 = vmatprep.subr.mxu0 0.0
    %654 = vmatpush1.msra.mxu0 0.0
    %655 = vmatprep.subr.mxu0 0.0
    %656 = vmatpush1.msra.mxu0 0.0
    %657 = vmatprep.subr.mxu0 0.0
    %658 = vmatpush1.msra.mxu0 0.0
    %659 = vmatprep.subr.mxu0 0.0
    %660 = vmatpush1.msra.mxu0 0.0
    %661 = vmatprep.subr.mxu0 0.0
    %662 = vmatpush1.msra.mxu0 0.0
    %663 = vmatprep.subr.mxu0 0.0
    %664 = vmatpush1.msra.mxu0 0.0
    %665 = vmatprep.subr.mxu0 0.0
    %666 = vmatpush1.msra.mxu0 0.0
    %667 = vmatprep.subr.mxu0 0.0
    %668 = vmatpush1.msra.mxu0 0.0
    %669 = vmatprep.subr.mxu0 0.0
    %670 = vmatpush1.msra.mxu0 0.0
    %671 = vmatprep.subr.mxu0 0.0
    %672 = vmatpush1.msra.mxu0 0.0
    %673 = vmatprep.subr.mxu0 0.0
    %674 = vmatpush1.msra.mxu0 0.0
    %675 = vmatprep.subr.mxu0 0.0
    %676 = vmatpush1.msra.mxu0 0.0
    %677 = vmatprep.subr.mxu0 0.0
    %678 = vmatpush1.msra.mxu0 0.0
    %679 = vmatprep.subr.mxu0 0.0
    %680 = vmatpush1.msra.mxu0 0.0
    %681 = vmatprep.subr.mxu0 0.0
    %682 = vmatpush1.msra.mxu0 0.0
    %683 = vmatprep.subr.mxu0 0.0
    %684 = vmatpush1.msra.mxu0 0.0
    %685 = vmatprep.subr.mxu0 0.0
    %686 = vmatpush1.msra.mxu0 0.0
    %687 = vmatprep.subr.mxu0 0.0
    %688 = vmatpush1.msra.mxu0 0.0
    %689 = vmatprep.subr.mxu0 0.0
    %690 = vmatpush1.msra.mxu0 0.0
    %691 = vmatprep.subr.mxu0 0.0
    %692 = vmatpush1.msra.mxu0 0.0
    %693 = vmatprep.subr.mxu0 0.0
    %694 = vmatpush1.msra.mxu0 0.0
    %695 = vmatprep.subr.mxu0 0.0
    %696 = vmatpush1.msra.mxu0 0.0
    %697 = vmatprep.subr.mxu0 0.0
    %698 = vmatpush1.msra.mxu0 0.0
    %699 = vmatprep.subr.mxu0 0.0
    %700 = vmatpush1.msra.mxu0 0.0
    %701 = vmatprep.subr.mxu0 0.0
    %702 = vmatpush1.msra.mxu0 0.0
    %703 = vmatprep.subr.mxu0 0.0
    %704 = vmatpush1.msra.mxu0 0.0
    %705 = vmatprep.mubr.f32.mxu0 0.0
    %706 = vmatmul.mubr.f32.gmra.mrb[0].mxu0 %v636
    %v707 = vpop.f32.mrb[0].mxu0
    %v708 = vadd.f32 0.0, %v707
    %v709 = vpop.f32.mrb[0].mxu0
    %710 = vmatprep.mubr.f32.mxu0 0.0
    %711 = vmatmul.mubr.f32.gmra.mrb[0].mxu0 %v639
    %v712 = vpop.f32.mrb[0].mxu0
    %v713 = vadd.f32 0.0, %v712
    %v714 = vpop.f32.mrb[0].mxu0
    %715 = vdwg.mxu0
    %720 = vrot.lane.b32.xlu0 %v594, 9
    %v721 = vpop.permute.xlu0 %720
    %722 = vrot.lane.b32.xlu0 %v595, 9
    %v723 = vpop.permute.xlu0 %722
    %724 = vrot.lane.b32.xlu0 %v596, 9
    %v725 = vpop.permute.xlu0 %724
    %726 = vrot.lane.b32.xlu0 %v597, 9
    %v727 = vpop.permute.xlu0 %726
    %vm728 = vcmask 72704
    %v729 = vsel %vm728, %v721, %v723
    %v730 = vsel %vm728, %v725, %v727
    %v734 = vsel %vm634, %v598, 0
    %v737 = vsel %vm634, %v599, 0
    %739 = vmatprep.subr.mxu0 0.0
    %740 = vmatpush1.msra.mxu0 %v729
    %741 = vmatprep.subr.mxu0 0.0
    %742 = vmatpush1.msra.mxu0 %v730
    %743 = vmatprep.subr.mxu0 0.0
    %744 = vmatpush1.msra.mxu0 0.0
    %745 = vmatprep.subr.mxu0 0.0
    %746 = vmatpush1.msra.mxu0 0.0
    %747 = vmatprep.subr.mxu0 0.0
    %748 = vmatpush1.msra.mxu0 0.0
    %749 = vmatprep.subr.mxu0 0.0
    %750 = vmatpush1.msra.mxu0 0.0
    %751 = vmatprep.subr.mxu0 0.0
    %752 = vmatpush1.msra.mxu0 0.0
    %753 = vmatprep.subr.mxu0 0.0
    %754 = vmatpush1.msra.mxu0 0.0
    %755 = vmatprep.subr.mxu0 0.0
    %756 = vmatpush1.msra.mxu0 0.0
    %757 = vmatprep.subr.mxu0 0.0
    %758 = vmatpush1.msra.mxu0 0.0
    %759 = vmatprep.subr.mxu0 0.0
    %760 = vmatpush1.msra.mxu0 0.0
    %761 = vmatprep.subr.mxu0 0.0
    %762 = vmatpush1.msra.mxu0 0.0
    %763 = vmatprep.subr.mxu0 0.0
    %764 = vmatpush1.msra.mxu0 0.0
    %765 = vmatprep.subr.mxu0 0.0
    %766 = vmatpush1.msra.mxu0 0.0
    %767 = vmatprep.subr.mxu0 0.0
    %768 = vmatpush1.msra.mxu0 0.0
    %769 = vmatprep.subr.mxu0 0.0
    %770 = vmatpush1.msra.mxu0 0.0
    %771 = vmatprep.subr.mxu0 0.0
    %772 = vmatpush1.msra.mxu0 0.0
    %773 = vmatprep.subr.mxu0 0.0
    %774 = vmatpush1.msra.mxu0 0.0
    %775 = vmatprep.subr.mxu0 0.0
    %776 = vmatpush1.msra.mxu0 0.0
    %777 = vmatprep.subr.mxu0 0.0
    %778 = vmatpush1.msra.mxu0 0.0
    %779 = vmatprep.subr.mxu0 0.0
    %780 = vmatpush1.msra.mxu0 0.0
    %781 = vmatprep.subr.mxu0 0.0
    %782 = vmatpush1.msra.mxu0 0.0
    %783 = vmatprep.subr.mxu0 0.0
    %784 = vmatpush1.msra.mxu0 0.0
    %785 = vmatprep.subr.mxu0 0.0
    %786 = vmatpush1.msra.mxu0 0.0
    %787 = vmatprep.subr.mxu0 0.0
    %788 = vmatpush1.msra.mxu0 0.0
    %789 = vmatprep.subr.mxu0 0.0
    %790 = vmatpush1.msra.mxu0 0.0
    %791 = vmatprep.subr.mxu0 0.0
    %792 = vmatpush1.msra.mxu0 0.0
    %793 = vmatprep.subr.mxu0 0.0
    %794 = vmatpush1.msra.mxu0 0.0
    %795 = vmatprep.subr.mxu0 0.0
    %796 = vmatpush1.msra.mxu0 0.0
    %797 = vmatprep.subr.mxu0 0.0
    %798 = vmatpush1.msra.mxu0 0.0
    %799 = vmatprep.subr.mxu0 0.0
    %800 = vmatpush1.msra.mxu0 0.0
    %801 = vmatprep.subr.mxu0 0.0
    %802 = vmatpush1.msra.mxu0 0.0
    %803 = vmatprep.mubr.f32.mxu0 0.0
    %804 = vmatmul.mubr.f32.gmra.mrb[0].mxu0 %v734
    %v805 = vpop.f32.mrb[0].mxu0
    %v806 = vadd.f32 %v708, %v805
    %v807 = vpop.f32.mrb[0].mxu0
    %808 = vmatprep.mubr.f32.mxu0 0.0
    %809 = vmatmul.mubr.f32.gmra.mrb[0].mxu0 %v737
    %v810 = vpop.f32.mrb[0].mxu0
    %v811 = vadd.f32 %v713, %v810
    %v812 = vpop.f32.mrb[0].mxu0
    %813 = vdwg.mxu0
    %s814 = scalar_lea.vmem %s9, 2
    %v815 = vld [vmem:[%s814] sm:$0x1]
    %v817 = vlaneseq
    %v818 = vshrl.u32 %v817, 7
    %v819 = vsub.s32 0, %v818
    %v820 = vrot.slane %v815, %v819
    %821 = vrot.lane.b32.xlu0 %v820, 121
    %v822 = vpop.permute.xlu0 %821
    %v824 = vmul.f32 %v581, %v822
    %v825 = vmul.f32 %v582, %v822
    %v826 = vmul.f32 %v583, %v822
    %v827 = vmul.f32 %v584, %v822
    %s828 = scalar_lea.vmem [#allocation7], 32
    %v829 = vld [vmem:[%s828] sm:$0xff]
    %v830 = vld [vmem:[%s828 + $0x8] sm:$0xff]
    %835 = vrot.lane.b32.xlu0 %v824, 7
    %v836 = vpop.permute.xlu0 %835
    %837 = vrot.lane.b32.xlu0 %v825, 7
    %v838 = vpop.permute.xlu0 %837
    %839 = vrot.lane.b32.xlu0 %v826, 7
    %v840 = vpop.permute.xlu0 %839
    %841 = vrot.lane.b32.xlu0 %v827, 7
    %v842 = vpop.permute.xlu0 %841
    %vm843 = vcmask 56320
    %v844 = vsel %vm843, %v836, %v838
    %v845 = vsel %vm843, %v840, %v842
    %v849 = vsel %vm634, %v829, 0
    %v852 = vsel %vm634, %v830, 0
    %854 = vmatprep.subr.mxu0 0.0
    %855 = vmatpush1.msra.mxu0 %v844
    %856 = vmatprep.subr.mxu0 0.0
    %857 = vmatpush1.msra.mxu0 %v845
    %858 = vmatprep.subr.mxu0 0.0
    %859 = vmatpush1.msra.mxu0 0.0
    %860 = vmatprep.subr.mxu0 0.0
    %861 = vmatpush1.msra.mxu0 0.0
    %862 = vmatprep.subr.mxu0 0.0
    %863 = vmatpush1.msra.mxu0 0.0
    %864 = vmatprep.subr.mxu0 0.0
    %865 = vmatpush1.msra.mxu0 0.0
    %866 = vmatprep.subr.mxu0 0.0
    %867 = vmatpush1.msra.mxu0 0.0
    %868 = vmatprep.subr.mxu0 0.0
    %869 = vmatpush1.msra.mxu0 0.0
    %870 = vmatprep.subr.mxu0 0.0
    %871 = vmatpush1.msra.mxu0 0.0
    %872 = vmatprep.subr.mxu0 0.0
    %873 = vmatpush1.msra.mxu0 0.0
    %874 = vmatprep.subr.mxu0 0.0
    %875 = vmatpush1.msra.mxu0 0.0
    %876 = vmatprep.subr.mxu0 0.0
    %877 = vmatpush1.msra.mxu0 0.0
    %878 = vmatprep.subr.mxu0 0.0
    %879 = vmatpush1.msra.mxu0 0.0
    %880 = vmatprep.subr.mxu0 0.0
    %881 = vmatpush1.msra.mxu0 0.0
    %882 = vmatprep.subr.mxu0 0.0
    %883 = vmatpush1.msra.mxu0 0.0
    %884 = vmatprep.subr.mxu0 0.0
    %885 = vmatpush1.msra.mxu0 0.0
    %886 = vmatprep.subr.mxu0 0.0
    %887 = vmatpush1.msra.mxu0 0.0
    %888 = vmatprep.subr.mxu0 0.0
    %889 = vmatpush1.msra.mxu0 0.0
    %890 = vmatprep.subr.mxu0 0.0
    %891 = vmatpush1.msra.mxu0 0.0
    %892 = vmatprep.subr.mxu0 0.0
    %893 = vmatpush1.msra.mxu0 0.0
    %894 = vmatprep.subr.mxu0 0.0
    %895 = vmatpush1.msra.mxu0 0.0
    %896 = vmatprep.subr.mxu0 0.0
    %897 = vmatpush1.msra.mxu0 0.0
    %898 = vmatprep.subr.mxu0 0.0
    %899 = vmatpush1.msra.mxu0 0.0
    %900 = vmatprep.subr.mxu0 0.0
    %901 = vmatpush1.msra.mxu0 0.0
    %902 = vmatprep.subr.mxu0 0.0
    %903 = vmatpush1.msra.mxu0 0.0
    %904 = vmatprep.subr.mxu0 0.0
    %905 = vmatpush1.msra.mxu0 0.0
    %906 = vmatprep.subr.mxu0 0.0
    %907 = vmatpush1.msra.mxu0 0.0
    %908 = vmatprep.subr.mxu0 0.0
    %909 = vmatpush1.msra.mxu0 0.0
    %910 = vmatprep.subr.mxu0 0.0
    %911 = vmatpush1.msra.mxu0 0.0
    %912 = vmatprep.subr.mxu0 0.0
    %913 = vmatpush1.msra.mxu0 0.0
    %914 = vmatprep.subr.mxu0 0.0
    %915 = vmatpush1.msra.mxu0 0.0
    %916 = vmatprep.subr.mxu0 0.0
    %917 = vmatpush1.msra.mxu0 0.0
    %918 = vmatprep.mubr.f32.mxu0 0.0
    %919 = vmatmul.mubr.f32.gmra.mrb[0].mxu0 %v849
    %v920 = vpop.f32.mrb[0].mxu0
    %v921 = vadd.f32 0.0, %v920
    %v922 = vpop.f32.mrb[0].mxu0
    %923 = vmatprep.mubr.f32.mxu0 0.0
    %924 = vmatmul.mubr.f32.gmra.mrb[0].mxu0 %v852
    %v925 = vpop.f32.mrb[0].mxu0
    %v926 = vadd.f32 0.0, %v925
    %v927 = vpop.f32.mrb[0].mxu0
    %928 = vdwg.mxu0
    %v929 = vadd.f32 %v806, %v921
    %v930 = vadd.f32 %v811, %v926
    %s931 = scalar_lea.vmem %s9, 3
    %v932 = vld [vmem:[%s931] sm:$0x1]
    %v934 = vlaneseq
    %v935 = vshrl.u32 %v934, 7
    %v936 = vsub.s32 0, %v935
    %v937 = vrot.slane %v932, %v936
    %938 = vrot.lane.b32.xlu0 %v937, 127
    %v939 = vpop.permute.xlu0 %938
    %v941 = vmul.f32 %v581, %v939
    %v942 = vmul.f32 %v582, %v939
    %v943 = vmul.f32 %v583, %v939
    %v944 = vmul.f32 %v584, %v939
    %s945 = scalar_lea.vmem [#allocation7], 48
    %v946 = vld [vmem:[%s945] sm:$0xff]
    %v947 = vld [vmem:[%s945 + $0x8] sm:$0xff]
    %952 = vrot.lane.b32.xlu0 %v941, 1
    %v953 = vpop.permute.xlu0 %952
    %954 = vrot.lane.b32.xlu0 %v942, 1
    %v955 = vpop.permute.xlu0 %954
    %956 = vrot.lane.b32.xlu0 %v943, 1
    %v957 = vpop.permute.xlu0 %956
    %958 = vrot.lane.b32.xlu0 %v944, 1
    %v959 = vpop.permute.xlu0 %958
    %vm960 = vcmask 7168
    %v961 = vsel %vm960, %v953, %v955
    %v962 = vsel %vm960, %v957, %v959
    %v966 = vsel %vm634, %v946, 0
    %v969 = vsel %vm634, %v947, 0
    %971 = vmatprep.subr.mxu0 0.0
    %972 = vmatpush1.msra.mxu0 %v961
    %973 = vmatprep.subr.mxu0 0.0
    %974 = vmatpush1.msra.mxu0 %v962
    %975 = vmatprep.subr.mxu0 0.0
    %976 = vmatpush1.msra.mxu0 0.0
    %977 = vmatprep.subr.mxu0 0.0
    %978 = vmatpush1.msra.mxu0 0.0
    %979 = vmatprep.subr.mxu0 0.0
    %980 = vmatpush1.msra.mxu0 0.0
    %981 = vmatprep.subr.mxu0 0.0
    %982 = vmatpush1.msra.mxu0 0.0
    %983 = vmatprep.subr.mxu0 0.0
    %984 = vmatpush1.msra.mxu0 0.0
    %985 = vmatprep.subr.mxu0 0.0
    %986 = vmatpush1.msra.mxu0 0.0
    %987 = vmatprep.subr.mxu0 0.0
    %988 = vmatpush1.msra.mxu0 0.0
    %989 = vmatprep.subr.mxu0 0.0
    %990 = vmatpush1.msra.mxu0 0.0
    %991 = vmatprep.subr.mxu0 0.0
    %992 = vmatpush1.msra.mxu0 0.0
    %993 = vmatprep.subr.mxu0 0.0
    %994 = vmatpush1.msra.mxu0 0.0
    %995 = vmatprep.subr.mxu0 0.0
    %996 = vmatpush1.msra.mxu0 0.0
    %997 = vmatprep.subr.mxu0 0.0
    %998 = vmatpush1.msra.mxu0 0.0
    %999 = vmatprep.subr.mxu0 0.0
    %1000 = vmatpush1.msra.mxu0 0.0
    %1001 = vmatprep.subr.mxu0 0.0
    %1002 = vmatpush1.msra.mxu0 0.0
    %1003 = vmatprep.subr.mxu0 0.0
    %1004 = vmatpush1.msra.mxu0 0.0
    %1005 = vmatprep.subr.mxu0 0.0
    %1006 = vmatpush1.msra.mxu0 0.0
    %1007 = vmatprep.subr.mxu0 0.0
    %1008 = vmatpush1.msra.mxu0 0.0
    %1009 = vmatprep.subr.mxu0 0.0
    %1010 = vmatpush1.msra.mxu0 0.0
    %1011 = vmatprep.subr.mxu0 0.0
    %1012 = vmatpush1.msra.mxu0 0.0
    %1013 = vmatprep.subr.mxu0 0.0
    %1014 = vmatpush1.msra.mxu0 0.0
    %1015 = vmatprep.subr.mxu0 0.0
    %1016 = vmatpush1.msra.mxu0 0.0
    %1017 = vmatprep.subr.mxu0 0.0
    %1018 = vmatpush1.msra.mxu0 0.0
    %1019 = vmatprep.subr.mxu0 0.0
    %1020 = vmatpush1.msra.mxu0 0.0
    %1021 = vmatprep.subr.mxu0 0.0
    %1022 = vmatpush1.msra.mxu0 0.0
    %1023 = vmatprep.subr.mxu0 0.0
    %1024 = vmatpush1.msra.mxu0 0.0
    %1025 = vmatprep.subr.mxu0 0.0
    %1026 = vmatpush1.msra.mxu0 0.0
    %1027 = vmatprep.subr.mxu0 0.0
    %1028 = vmatpush1.msra.mxu0 0.0
    %1029 = vmatprep.subr.mxu0 0.0
    %1030 = vmatpush1.msra.mxu0 0.0
    %1031 = vmatprep.subr.mxu0 0.0
    %1032 = vmatpush1.msra.mxu0 0.0
    %1033 = vmatprep.subr.mxu0 0.0
    %1034 = vmatpush1.msra.mxu0 0.0
    %1035 = vmatprep.mubr.f32.mxu0 0.0
    %1036 = vmatmul.mubr.f32.gmra.mrb[0].mxu0 %v966
    %v1037 = vpop.f32.mrb[0].mxu0
    %v1038 = vadd.f32 0.0, %v1037
    %v1039 = vpop.f32.mrb[0].mxu0
    %1040 = vmatprep.mubr.f32.mxu0 0.0
    %1041 = vmatmul.mubr.f32.gmra.mrb[0].mxu0 %v969
    %v1042 = vpop.f32.mrb[0].mxu0
    %v1043 = vadd.f32 0.0, %v1042
    %v1044 = vpop.f32.mrb[0].mxu0
    %1045 = vdwg.mxu0
    %v1046 = vadd.f32 %v929, %v1038
    %v1047 = vadd.f32 %v930, %v1043
    %s1048 = scalar_lea.vmem [#allocation7], 64
    %v1049 = vld [vmem:[%s1048] sm:$0xff]
    %v1050 = vld [vmem:[%s1048 + $0x8] sm:$0xff]
    %v1052 = vsel %vm634, %v1049, 0
    %v1055 = vsel %vm634, %v1050, 0
    %1057 = vmatprep.subr.mxu0 0.0
    %1058 = vmatpush1.msra.mxu0 %v582
    %1059 = vmatprep.subr.mxu0 0.0
    %1060 = vmatpush1.msra.mxu0 %v584
    %1061 = vmatprep.subr.mxu0 0.0
    %1062 = vmatpush1.msra.mxu0 0.0
    %1063 = vmatprep.subr.mxu0 0.0
    %1064 = vmatpush1.msra.mxu0 0.0
    %1065 = vmatprep.subr.mxu0 0.0
    %1066 = vmatpush1.msra.mxu0 0.0
    %1067 = vmatprep.subr.mxu0 0.0
    %1068 = vmatpush1.msra.mxu0 0.0
    %1069 = vmatprep.subr.mxu0 0.0
    %1070 = vmatpush1.msra.mxu0 0.0
    %1071 = vmatprep.subr.mxu0 0.0
    %1072 = vmatpush1.msra.mxu0 0.0
    %1073 = vmatprep.subr.mxu0 0.0
    %1074 = vmatpush1.msra.mxu0 0.0
    %1075 = vmatprep.subr.mxu0 0.0
    %1076 = vmatpush1.msra.mxu0 0.0
    %1077 = vmatprep.subr.mxu0 0.0
    %1078 = vmatpush1.msra.mxu0 0.0
    %1079 = vmatprep.subr.mxu0 0.0
    %1080 = vmatpush1.msra.mxu0 0.0
    %1081 = vmatprep.subr.mxu0 0.0
    %1082 = vmatpush1.msra.mxu0 0.0
    %1083 = vmatprep.subr.mxu0 0.0
    %1084 = vmatpush1.msra.mxu0 0.0
    %1085 = vmatprep.subr.mxu0 0.0
    %1086 = vmatpush1.msra.mxu0 0.0
    %1087 = vmatprep.subr.mxu0 0.0
    %1088 = vmatpush1.msra.mxu0 0.0
    %1089 = vmatprep.subr.mxu0 0.0
    %1090 = vmatpush1.msra.mxu0 0.0
    %1091 = vmatprep.subr.mxu0 0.0
    %1092 = vmatpush1.msra.mxu0 0.0
    %1093 = vmatprep.subr.mxu0 0.0
    %1094 = vmatpush1.msra.mxu0 0.0
    %1095 = vmatprep.subr.mxu0 0.0
    %1096 = vmatpush1.msra.mxu0 0.0
    %1097 = vmatprep.subr.mxu0 0.0
    %1098 = vmatpush1.msra.mxu0 0.0
    %1099 = vmatprep.subr.mxu0 0.0
    %1100 = vmatpush1.msra.mxu0 0.0
    %1101 = vmatprep.subr.mxu0 0.0
    %1102 = vmatpush1.msra.mxu0 0.0
    %1103 = vmatprep.subr.mxu0 0.0
    %1104 = vmatpush1.msra.mxu0 0.0
    %1105 = vmatprep.subr.mxu0 0.0
    %1106 = vmatpush1.msra.mxu0 0.0
    %1107 = vmatprep.subr.mxu0 0.0
    %1108 = vmatpush1.msra.mxu0 0.0
    %1109 = vmatprep.subr.mxu0 0.0
    %1110 = vmatpush1.msra.mxu0 0.0
    %1111 = vmatprep.subr.mxu0 0.0
    %1112 = vmatpush1.msra.mxu0 0.0
    %1113 = vmatprep.subr.mxu0 0.0
    %1114 = vmatpush1.msra.mxu0 0.0
    %1115 = vmatprep.subr.mxu0 0.0
    %1116 = vmatpush1.msra.mxu0 0.0
    %1117 = vmatprep.subr.mxu0 0.0
    %1118 = vmatpush1.msra.mxu0 0.0
    %1119 = vmatprep.subr.mxu0 0.0
    %1120 = vmatpush1.msra.mxu0 0.0
    %1121 = vmatprep.mubr.f32.mxu0 0.0
    %1122 = vmatmul.mubr.f32.gmra.mrb[0].mxu0 %v1052
    %v1123 = vpop.f32.mrb[0].mxu0
    %v1124 = vadd.f32 0.0, %v1123
    %v1125 = vpop.f32.mrb[0].mxu0
    %1126 = vmatprep.mubr.f32.mxu0 0.0
    %1127 = vmatmul.mubr.f32.gmra.mrb[0].mxu0 %v1055
    %v1128 = vpop.f32.mrb[0].mxu0
    %v1129 = vadd.f32 0.0, %v1128
    %v1130 = vpop.f32.mrb[0].mxu0
    %1131 = vdwg.mxu0
    %v1132 = vadd.f32 %v1046, %v1124
    %v1133 = vadd.f32 %v1047, %v1129
    %v1134 = vld [vmem:[#allocation2 + $0x8] sm:$0xff]
    %v1135 = vld [vmem:[#allocation2 + $0x10] sm:$0xff]
    %v1136 = vld [vmem:[#allocation2 + $0x20] sm:$0xff]
    %v1137 = vld [vmem:[#allocation2 + $0x28] sm:$0xff]
    %s1138 = scalar_lea.vmem %s9, 5
    %v1139 = vld [vmem:[%s1138] sm:$0x1]
    %v1141 = vlaneseq
    %v1142 = vshrl.u32 %v1141, 7
    %v1143 = vsub.s32 0, %v1142
    %v1144 = vrot.slane %v1139, %v1143
    %1145 = vrot.lane.b32.xlu0 %v1144, 1
    %v1146 = vpop.permute.xlu0 %1145
    %v1148 = vmul.f32 %v1134, %v1146
    %v1149 = vmul.f32 %v1135, %v1146
    %v1150 = vmul.f32 %v1136, %v1146
    %v1151 = vmul.f32 %v1137, %v1146
    %s1152 = scalar_lea.vmem [#allocation7], 80
    %v1153 = vld [vmem:[%s1152] sm:$0xff]
    %v1154 = vld [vmem:[%s1152 + $0x8] sm:$0xff]
    %1159 = vrot.lane.b32.xlu0 %v1148, 127
    %v1160 = vpop.permute.xlu0 %1159
    %1161 = vrot.lane.b32.xlu0 %v1149, 127
    %v1162 = vpop.permute.xlu0 %1161
    %1163 = vrot.lane.b32.xlu0 %v1150, 127
    %v1164 = vpop.permute.xlu0 %1163
    %1165 = vrot.lane.b32.xlu0 %v1151, 127
    %v1166 = vpop.permute.xlu0 %1165
    %vm1167 = vcmask 1039360
    %v1168 = vsel %vm1167, %v1160, %v1162
    %v1169 = vsel %vm1167, %v1164, %v1166
    %v1173 = vsel %vm634, %v1153, 0
    %v1176 = vsel %vm634, %v1154, 0
    %1178 = vmatprep.subr.mxu0 0.0
    %1179 = vmatpush1.msra.mxu0 %v1168
    %1180 = vmatprep.subr.mxu0 0.0
    %1181 = vmatpush1.msra.mxu0 %v1169
    %1182 = vmatprep.subr.mxu0 0.0
    %1183 = vmatpush1.msra.mxu0 0.0
    %1184 = vmatprep.subr.mxu0 0.0
    %1185 = vmatpush1.msra.mxu0 0.0
    %1186 = vmatprep.subr.mxu0 0.0
    %1187 = vmatpush1.msra.mxu0 0.0
    %1188 = vmatprep.subr.mxu0 0.0
    %1189 = vmatpush1.msra.mxu0 0.0
    %1190 = vmatprep.subr.mxu0 0.0
    %1191 = vmatpush1.msra.mxu0 0.0
    %1192 = vmatprep.subr.mxu0 0.0
    %1193 = vmatpush1.msra.mxu0 0.0
    %1194 = vmatprep.subr.mxu0 0.0
    %1195 = vmatpush1.msra.mxu0 0.0
    %1196 = vmatprep.subr.mxu0 0.0
    %1197 = vmatpush1.msra.mxu0 0.0
    %1198 = vmatprep.subr.mxu0 0.0
    %1199 = vmatpush1.msra.mxu0 0.0
    %1200 = vmatprep.subr.mxu0 0.0
    %1201 = vmatpush1.msra.mxu0 0.0
    %1202 = vmatprep.subr.mxu0 0.0
    %1203 = vmatpush1.msra.mxu0 0.0
    %1204 = vmatprep.subr.mxu0 0.0
    %1205 = vmatpush1.msra.mxu0 0.0
    %1206 = vmatprep.subr.mxu0 0.0
    %1207 = vmatpush1.msra.mxu0 0.0
    %1208 = vmatprep.subr.mxu0 0.0
    %1209 = vmatpush1.msra.mxu0 0.0
    %1210 = vmatprep.subr.mxu0 0.0
    %1211 = vmatpush1.msra.mxu0 0.0
    %1212 = vmatprep.subr.mxu0 0.0
    %1213 = vmatpush1.msra.mxu0 0.0
    %1214 = vmatprep.subr.mxu0 0.0
    %1215 = vmatpush1.msra.mxu0 0.0
    %1216 = vmatprep.subr.mxu0 0.0
    %1217 = vmatpush1.msra.mxu0 0.0
    %1218 = vmatprep.subr.mxu0 0.0
    %1219 = vmatpush1.msra.mxu0 0.0
    %1220 = vmatprep.subr.mxu0 0.0
    %1221 = vmatpush1.msra.mxu0 0.0
    %1222 = vmatprep.subr.mxu0 0.0
    %1223 = vmatpush1.msra.mxu0 0.0
    %1224 = vmatprep.subr.mxu0 0.0
    %1225 = vmatpush1.msra.mxu0 0.0
    %1226 = vmatprep.subr.mxu0 0.0
    %1227 = vmatpush1.msra.mxu0 0.0
    %1228 = vmatprep.subr.mxu0 0.0
    %1229 = vmatpush1.msra.mxu0 0.0
    %1230 = vmatprep.subr.mxu0 0.0
    %1231 = vmatpush1.msra.mxu0 0.0
    %1232 = vmatprep.subr.mxu0 0.0
    %1233 = vmatpush1.msra.mxu0 0.0
    %1234 = vmatprep.subr.mxu0 0.0
    %1235 = vmatpush1.msra.mxu0 0.0
    %1236 = vmatprep.subr.mxu0 0.0
    %1237 = vmatpush1.msra.mxu0 0.0
    %1238 = vmatprep.subr.mxu0 0.0
    %1239 = vmatpush1.msra.mxu0 0.0
    %1240 = vmatprep.subr.mxu0 0.0
    %1241 = vmatpush1.msra.mxu0 0.0
    %1242 = vmatprep.mubr.f32.mxu0 0.0
    %1243 = vmatmul.mubr.f32.gmra.mrb[0].mxu0 %v1173
    %v1244 = vpop.f32.mrb[0].mxu0
    %v1245 = vadd.f32 0.0, %v1244
    %v1246 = vpop.f32.mrb[0].mxu0
    %1247 = vmatprep.mubr.f32.mxu0 0.0
    %1248 = vmatmul.mubr.f32.gmra.mrb[0].mxu0 %v1176
    %v1249 = vpop.f32.mrb[0].mxu0
    %v1250 = vadd.f32 0.0, %v1249
    %v1251 = vpop.f32.mrb[0].mxu0
    %1252 = vdwg.mxu0
    %v1253 = vadd.f32 %v1132, %v1245
    %v1254 = vadd.f32 %v1133, %v1250
    %s1255 = scalar_lea.vmem %s9, 6
    %v1256 = vld [vmem:[%s1255] sm:$0x1]
    %v1258 = vlaneseq
    %v1259 = vshrl.u32 %v1258, 7
    %v1260 = vsub.s32 0, %v1259
    %v1261 = vrot.slane %v1256, %v1260
    %1262 = vrot.lane.b32.xlu0 %v1261, 7
    %v1263 = vpop.permute.xlu0 %1262
    %v1265 = vmul.f32 %v1134, %v1263
    %v1266 = vmul.f32 %v1135, %v1263
    %v1267 = vmul.f32 %v1136, %v1263
    %v1268 = vmul.f32 %v1137, %v1263
    %s1269 = scalar_lea.vmem [#allocation7], 96
    %v1270 = vld [vmem:[%s1269] sm:$0xff]
    %v1271 = vld [vmem:[%s1269 + $0x8] sm:$0xff]
    %1276 = vrot.lane.b32.xlu0 %v1265, 121
    %v1277 = vpop.permute.xlu0 %1276
    %1278 = vrot.lane.b32.xlu0 %v1266, 121
    %v1279 = vpop.permute.xlu0 %1278
    %1280 = vrot.lane.b32.xlu0 %v1267, 121
    %v1281 = vpop.permute.xlu0 %1280
    %1282 = vrot.lane.b32.xlu0 %v1268, 121
    %v1283 = vpop.permute.xlu0 %1282
    %vm1284 = vcmask 990208
    %v1285 = vsel %vm1284, %v1277, %v1279
    %v1286 = vsel %vm1284, %v1281, %v1283
    %v1290 = vsel %vm634, %v1270, 0
    %v1293 = vsel %vm634, %v1271, 0
    %1295 = vmatprep.subr.mxu0 0.0
    %1296 = vmatpush1.msra.mxu0 %v1285
    %1297 = vmatprep.subr.mxu0 0.0
    %1298 = vmatpush1.msra.mxu0 %v1286
    %1299 = vmatprep.subr.mxu0 0.0
    %1300 = vmatpush1.msra.mxu0 0.0
    %1301 = vmatprep.subr.mxu0 0.0
    %1302 = vmatpush1.msra.mxu0 0.0
    %1303 = vmatprep.subr.mxu0 0.0
    %1304 = vmatpush1.msra.mxu0 0.0
    %1305 = vmatprep.subr.mxu0 0.0
    %1306 = vmatpush1.msra.mxu0 0.0
    %1307 = vmatprep.subr.mxu0 0.0
    %1308 = vmatpush1.msra.mxu0 0.0
    %1309 = vmatprep.subr.mxu0 0.0
    %1310 = vmatpush1.msra.mxu0 0.0
    %1311 = vmatprep.subr.mxu0 0.0
    %1312 = vmatpush1.msra.mxu0 0.0
    %1313 = vmatprep.subr.mxu0 0.0
    %1314 = vmatpush1.msra.mxu0 0.0
    %1315 = vmatprep.subr.mxu0 0.0
    %1316 = vmatpush1.msra.mxu0 0.0
    %1317 = vmatprep.subr.mxu0 0.0
    %1318 = vmatpush1.msra.mxu0 0.0
    %1319 = vmatprep.subr.mxu0 0.0
    %1320 = vmatpush1.msra.mxu0 0.0
    %1321 = vmatprep.subr.mxu0 0.0
    %1322 = vmatpush1.msra.mxu0 0.0
    %1323 = vmatprep.subr.mxu0 0.0
    %1324 = vmatpush1.msra.mxu0 0.0
    %1325 = vmatprep.subr.mxu0 0.0
    %1326 = vmatpush1.msra.mxu0 0.0
    %1327 = vmatprep.subr.mxu0 0.0
    %1328 = vmatpush1.msra.mxu0 0.0
    %1329 = vmatprep.subr.mxu0 0.0
    %1330 = vmatpush1.msra.mxu0 0.0
    %1331 = vmatprep.subr.mxu0 0.0
    %1332 = vmatpush1.msra.mxu0 0.0
    %1333 = vmatprep.subr.mxu0 0.0
    %1334 = vmatpush1.msra.mxu0 0.0
    %1335 = vmatprep.subr.mxu0 0.0
    %1336 = vmatpush1.msra.mxu0 0.0
    %1337 = vmatprep.subr.mxu0 0.0
    %1338 = vmatpush1.msra.mxu0 0.0
    %1339 = vmatprep.subr.mxu0 0.0
    %1340 = vmatpush1.msra.mxu0 0.0
    %1341 = vmatprep.subr.mxu0 0.0
    %1342 = vmatpush1.msra.mxu0 0.0
    %1343 = vmatprep.subr.mxu0 0.0
    %1344 = vmatpush1.msra.mxu0 0.0
    %1345 = vmatprep.subr.mxu0 0.0
    %1346 = vmatpush1.msra.mxu0 0.0
    %1347 = vmatprep.subr.mxu0 0.0
    %1348 = vmatpush1.msra.mxu0 0.0
    %1349 = vmatprep.subr.mxu0 0.0
    %1350 = vmatpush1.msra.mxu0 0.0
    %1351 = vmatprep.subr.mxu0 0.0
    %1352 = vmatpush1.msra.mxu0 0.0
    %1353 = vmatprep.subr.mxu0 0.0
    %1354 = vmatpush1.msra.mxu0 0.0
    %1355 = vmatprep.subr.mxu0 0.0
    %1356 = vmatpush1.msra.mxu0 0.0
    %1357 = vmatprep.subr.mxu0 0.0
    %1358 = vmatpush1.msra.mxu0 0.0
    %1359 = vmatprep.mubr.f32.mxu0 0.0
    %1360 = vmatmul.mubr.f32.gmra.mrb[0].mxu0 %v1290
    %v1361 = vpop.f32.mrb[0].mxu0
    %v1362 = vadd.f32 0.0, %v1361
    %v1363 = vpop.f32.mrb[0].mxu0
    %1364 = vmatprep.mubr.f32.mxu0 0.0
    %1365 = vmatmul.mubr.f32.gmra.mrb[0].mxu0 %v1293
    %v1366 = vpop.f32.mrb[0].mxu0
    %v1367 = vadd.f32 0.0, %v1366
    %v1368 = vpop.f32.mrb[0].mxu0
    %1369 = vdwg.mxu0
    %v1370 = vadd.f32 %v1253, %v1362
    %v1371 = vadd.f32 %v1254, %v1367
    %s1372 = scalar_lea.vmem %s9, 7
    %v1373 = vld [vmem:[%s1372] sm:$0x1]
    %v1375 = vlaneseq
    %v1376 = vshrl.u32 %v1375, 7
    %v1377 = vsub.s32 0, %v1376
    %v1378 = vrot.slane %v1373, %v1377
    %1379 = vrot.lane.b32.xlu0 %v1378, 8
    %v1380 = vpop.permute.xlu0 %1379
    %v1382 = vmul.f32 %v1134, %v1380
    %v1383 = vmul.f32 %v1135, %v1380
    %v1384 = vmul.f32 %v1136, %v1380
    %v1385 = vmul.f32 %v1137, %v1380
    %s1386 = scalar_lea.vmem [#allocation7], 112
    %v1387 = vld [vmem:[%s1386] sm:$0xff]
    %v1388 = vld [vmem:[%s1386 + $0x8] sm:$0xff]
    %1393 = vrot.lane.b32.xlu0 %v1382, 120
    %v1394 = vpop.permute.xlu0 %1393
    %1395 = vrot.lane.b32.xlu0 %v1383, 120
    %v1396 = vpop.permute.xlu0 %1395
    %1397 = vrot.lane.b32.xlu0 %v1384, 120
    %v1398 = vpop.permute.xlu0 %1397
    %1399 = vrot.lane.b32.xlu0 %v1385, 120
    %v1400 = vpop.permute.xlu0 %1399
    %vm1401 = vcmask 982016
    %v1402 = vsel %vm1401, %v1394, %v1396
    %v1403 = vsel %vm1401, %v1398, %v1400
    %v1407 = vsel %vm634, %v1387, 0
    %v1410 = vsel %vm634, %v1388, 0
    %1412 = vmatprep.subr.mxu0 0.0
    %1413 = vmatpush1.msra.mxu0 %v1402
    %1414 = vmatprep.subr.mxu0 0.0
    %1415 = vmatpush1.msra.mxu0 %v1403
    %1416 = vmatprep.subr.mxu0 0.0
    %1417 = vmatpush1.msra.mxu0 0.0
    %1418 = vmatprep.subr.mxu0 0.0
    %1419 = vmatpush1.msra.mxu0 0.0
    %1420 = vmatprep.subr.mxu0 0.0
    %1421 = vmatpush1.msra.mxu0 0.0
    %1422 = vmatprep.subr.mxu0 0.0
    %1423 = vmatpush1.msra.mxu0 0.0
    %1424 = vmatprep.subr.mxu0 0.0
    %1425 = vmatpush1.msra.mxu0 0.0
    %1426 = vmatprep.subr.mxu0 0.0
    %1427 = vmatpush1.msra.mxu0 0.0
    %1428 = vmatprep.subr.mxu0 0.0
    %1429 = vmatpush1.msra.mxu0 0.0
    %1430 = vmatprep.subr.mxu0 0.0
    %1431 = vmatpush1.msra.mxu0 0.0
    %1432 = vmatprep.subr.mxu0 0.0
    %1433 = vmatpush1.msra.mxu0 0.0
    %1434 = vmatprep.subr.mxu0 0.0
    %1435 = vmatpush1.msra.mxu0 0.0
    %1436 = vmatprep.subr.mxu0 0.0
    %1437 = vmatpush1.msra.mxu0 0.0
    %1438 = vmatprep.subr.mxu0 0.0
    %1439 = vmatpush1.msra.mxu0 0.0
    %1440 = vmatprep.subr.mxu0 0.0
    %1441 = vmatpush1.msra.mxu0 0.0
    %1442 = vmatprep.subr.mxu0 0.0
    %1443 = vmatpush1.msra.mxu0 0.0
    %1444 = vmatprep.subr.mxu0 0.0
    %1445 = vmatpush1.msra.mxu0 0.0
    %1446 = vmatprep.subr.mxu0 0.0
    %1447 = vmatpush1.msra.mxu0 0.0
    %1448 = vmatprep.subr.mxu0 0.0
    %1449 = vmatpush1.msra.mxu0 0.0
    %1450 = vmatprep.subr.mxu0 0.0
    %1451 = vmatpush1.msra.mxu0 0.0
    %1452 = vmatprep.subr.mxu0 0.0
    %1453 = vmatpush1.msra.mxu0 0.0
    %1454 = vmatprep.subr.mxu0 0.0
    %1455 = vmatpush1.msra.mxu0 0.0
    %1456 = vmatprep.subr.mxu0 0.0
    %1457 = vmatpush1.msra.mxu0 0.0
    %1458 = vmatprep.subr.mxu0 0.0
    %1459 = vmatpush1.msra.mxu0 0.0
    %1460 = vmatprep.subr.mxu0 0.0
    %1461 = vmatpush1.msra.mxu0 0.0
    %1462 = vmatprep.subr.mxu0 0.0
    %1463 = vmatpush1.msra.mxu0 0.0
    %1464 = vmatprep.subr.mxu0 0.0
    %1465 = vmatpush1.msra.mxu0 0.0
    %1466 = vmatprep.subr.mxu0 0.0
    %1467 = vmatpush1.msra.mxu0 0.0
    %1468 = vmatprep.subr.mxu0 0.0
    %1469 = vmatpush1.msra.mxu0 0.0
    %1470 = vmatprep.subr.mxu0 0.0
    %1471 = vmatpush1.msra.mxu0 0.0
    %1472 = vmatprep.subr.mxu0 0.0
    %1473 = vmatpush1.msra.mxu0 0.0
    %1474 = vmatprep.subr.mxu0 0.0
    %1475 = vmatpush1.msra.mxu0 0.0
    %1476 = vmatprep.mubr.f32.mxu0 0.0
    %1477 = vmatmul.mubr.f32.gmra.mrb[0].mxu0 %v1407
    %v1478 = vpop.f32.mrb[0].mxu0
    %v1479 = vadd.f32 0.0, %v1478
    %v1480 = vpop.f32.mrb[0].mxu0
    %1481 = vmatprep.mubr.f32.mxu0 0.0
    %1482 = vmatmul.mubr.f32.gmra.mrb[0].mxu0 %v1410
    %v1483 = vpop.f32.mrb[0].mxu0
    %v1484 = vadd.f32 0.0, %v1483
    %v1485 = vpop.f32.mrb[0].mxu0
    %1486 = vdwg.mxu0
    %v1487 = vadd.f32 %v1370, %v1479
    %v1488 = vadd.f32 %v1371, %v1484
    %s1489 = scalar_lea.vmem %s9, 8
    %v1490 = vld [vmem:[%s1489] sm:$0x1]
    %v1492 = vlaneseq
    %v1493 = vshrl.u32 %v1492, 7
    %v1494 = vsub.s32 0, %v1493
    %v1495 = vrot.slane %v1490, %v1494
    %1496 = vrot.lane.b32.xlu0 %v1495, 9
    %v1497 = vpop.permute.xlu0 %1496
    %v1499 = vmul.f32 %v1134, %v1497
    %v1500 = vmul.f32 %v1135, %v1497
    %v1501 = vmul.f32 %v1136, %v1497
    %v1502 = vmul.f32 %v1137, %v1497
    %s1503 = scalar_lea.vmem [#allocation7], 128
    %v1504 = vld [vmem:[%s1503] sm:$0xff]
    %v1505 = vld [vmem:[%s1503 + $0x8] sm:$0xff]
    %1510 = vrot.lane.b32.xlu0 %v1499, 119
    %v1511 = vpop.permute.xlu0 %1510
    %1512 = vrot.lane.b32.xlu0 %v1500, 119
    %v1513 = vpop.permute.xlu0 %1512
    %1514 = vrot.lane.b32.xlu0 %v1501, 119
    %v1515 = vpop.permute.xlu0 %1514
    %1516 = vrot.lane.b32.xlu0 %v1502, 119
    %v1517 = vpop.permute.xlu0 %1516
    %vm1518 = vcmask 973824
    %v1519 = vsel %vm1518, %v1511, %v1513
    %v1520 = vsel %vm1518, %v1515, %v1517
    %v1524 = vsel %vm634, %v1504, 0
    %v1527 = vsel %vm634, %v1505, 0
    %1529 = vmatprep.subr.mxu0 0.0
    %1530 = vmatpush1.msra.mxu0 %v1519
    %1531 = vmatprep.subr.mxu0 0.0
    %1532 = vmatpush1.msra.mxu0 %v1520
    %1533 = vmatprep.subr.mxu0 0.0
    %1534 = vmatpush1.msra.mxu0 0.0
    %1535 = vmatprep.subr.mxu0 0.0
    %1536 = vmatpush1.msra.mxu0 0.0
    %1537 = vmatprep.subr.mxu0 0.0
    %1538 = vmatpush1.msra.mxu0 0.0
    %1539 = vmatprep.subr.mxu0 0.0
    %1540 = vmatpush1.msra.mxu0 0.0
    %1541 = vmatprep.subr.mxu0 0.0
    %1542 = vmatpush1.msra.mxu0 0.0
    %1543 = vmatprep.subr.mxu0 0.0
    %1544 = vmatpush1.msra.mxu0 0.0
    %1545 = vmatprep.subr.mxu0 0.0
    %1546 = vmatpush1.msra.mxu0 0.0
    %1547 = vmatprep.subr.mxu0 0.0
    %1548 = vmatpush1.msra.mxu0 0.0
    %1549 = vmatprep.subr.mxu0 0.0
    %1550 = vmatpush1.msra.mxu0 0.0
    %1551 = vmatprep.subr.mxu0 0.0
    %1552 = vmatpush1.msra.mxu0 0.0
    %1553 = vmatprep.subr.mxu0 0.0
    %1554 = vmatpush1.msra.mxu0 0.0
    %1555 = vmatprep.subr.mxu0 0.0
    %1556 = vmatpush1.msra.mxu0 0.0
    %1557 = vmatprep.subr.mxu0 0.0
    %1558 = vmatpush1.msra.mxu0 0.0
    %1559 = vmatprep.subr.mxu0 0.0
    %1560 = vmatpush1.msra.mxu0 0.0
    %1561 = vmatprep.subr.mxu0 0.0
    %1562 = vmatpush1.msra.mxu0 0.0
    %1563 = vmatprep.subr.mxu0 0.0
    %1564 = vmatpush1.msra.mxu0 0.0
    %1565 = vmatprep.subr.mxu0 0.0
    %1566 = vmatpush1.msra.mxu0 0.0
    %1567 = vmatprep.subr.mxu0 0.0
    %1568 = vmatpush1.msra.mxu0 0.0
    %1569 = vmatprep.subr.mxu0 0.0
    %1570 = vmatpush1.msra.mxu0 0.0
    %1571 = vmatprep.subr.mxu0 0.0
    %1572 = vmatpush1.msra.mxu0 0.0
    %1573 = vmatprep.subr.mxu0 0.0
    %1574 = vmatpush1.msra.mxu0 0.0
    %1575 = vmatprep.subr.mxu0 0.0
    %1576 = vmatpush1.msra.mxu0 0.0
    %1577 = vmatprep.subr.mxu0 0.0
    %1578 = vmatpush1.msra.mxu0 0.0
    %1579 = vmatprep.subr.mxu0 0.0
    %1580 = vmatpush1.msra.mxu0 0.0
    %1581 = vmatprep.subr.mxu0 0.0
    %1582 = vmatpush1.msra.mxu0 0.0
    %1583 = vmatprep.subr.mxu0 0.0
    %1584 = vmatpush1.msra.mxu0 0.0
    %1585 = vmatprep.subr.mxu0 0.0
    %1586 = vmatpush1.msra.mxu0 0.0
    %1587 = vmatprep.subr.mxu0 0.0
    %1588 = vmatpush1.msra.mxu0 0.0
    %1589 = vmatprep.subr.mxu0 0.0
    %1590 = vmatpush1.msra.mxu0 0.0
    %1591 = vmatprep.subr.mxu0 0.0
    %1592 = vmatpush1.msra.mxu0 0.0
    %1593 = vmatprep.mubr.f32.mxu0 0.0
    %1594 = vmatmul.mubr.f32.gmra.mrb[0].mxu0 %v1524
    %v1595 = vpop.f32.mrb[0].mxu0
    %v1596 = vadd.f32 0.0, %v1595
    %v1597 = vpop.f32.mrb[0].mxu0
    %1598 = vmatprep.mubr.f32.mxu0 0.0
    %1599 = vmatmul.mubr.f32.gmra.mrb[0].mxu0 %v1527
    %v1600 = vpop.f32.mrb[0].mxu0
    %v1601 = vadd.f32 0.0, %v1600
    %v1602 = vpop.f32.mrb[0].mxu0
    %1603 = vdwg.mxu0
    %v1604 = vadd.f32 %v1487, %v1596
    %v1605 = vadd.f32 %v1488, %v1601
    %v1606 = vld [vmem:[%s4] sm:$0xff]
    %v1607 = vld [vmem:[%s4 + $0x8] sm:$0xff]
    %1609 = vset.pattern.permute.xlu0 0
    %1610 = vperm.xlu0 %1609, %v1606
    %v1611 = vpop.permute.xlu0 %1610
    %1614 = vset.pattern.permute.xlu0 0
    %1615 = vperm.xlu0 %1614, %v1607
    %v1616 = vpop.permute.xlu0 %1615
    %v1618 = vadd.f32 %v1604, %v1611
    %v1619 = vadd.f32 %v1605, %v1616
    %1620 = vadd.xlane.f32.xlu0 %v1618
    %v1621 = vpop.xlane.xlu0 %1620
    %1622 = vadd.xlane.f32.xlu0 %v1619
    %v1623 = vpop.xlane.xlu0 %1622
    %v1624 = vrcp.pop 128.0
    %v1625 = vmul.f32 %v1621, %v1624
    %v1626 = vmul.f32 %v1623, %v1624
    %v1627 = vsub.f32 %v1618, %v1625
    %v1628 = vsub.f32 %v1619, %v1626
    %v1629 = vmul.f32 %v1627, %v1627
    %v1630 = vmul.f32 %v1628, %v1628
    %1631 = vadd.xlane.f32.xlu0 %v1629
    %v1632 = vpop.xlane.xlu0 %1631
    %1633 = vadd.xlane.f32.xlu0 %v1630
    %v1634 = vpop.xlane.xlu0 %1633
    %v1635 = vmul.f32 %v1632, %v1624
    %v1636 = vmul.f32 %v1634, %v1624
    %v1637 = vadd.f32 %v1635, 1e-05
    %v1638 = vadd.f32 %v1636, 1e-05
    %v1639 = vrsqrt.pop %v1637
    %v1640 = vrsqrt.pop %v1638
    %v1641 = vmul.f32 %v1627, %v1639
    %v1642 = vmul.f32 %v1628, %v1640
    %v1643 = vld [vmem:[%s5] sm:$0xff]
    %v1644 = vld [vmem:[%s5 + $0x8] sm:$0xff]
    %1646 = vset.pattern.permute.xlu0 0
    %1647 = vperm.xlu0 %1646, %v1643
    %v1648 = vpop.permute.xlu0 %1647
    %1651 = vset.pattern.permute.xlu0 0
    %1652 = vperm.xlu0 %1651, %v1644
    %v1653 = vpop.permute.xlu0 %1652
    %v1655 = vmul.f32 %v1641, %v1648
    %v1656 = vmul.f32 %v1642, %v1653
    %v1657 = vld [vmem:[%s6] sm:$0xff]
    %v1658 = vld [vmem:[%s6 + $0x8] sm:$0xff]
    %1660 = vset.pattern.permute.xlu0 0
    %1661 = vperm.xlu0 %1660, %v1657
    %v1662 = vpop.permute.xlu0 %1661
    %1665 = vset.pattern.permute.xlu0 0
    %1666 = vperm.xlu0 %1665, %v1658
    %v1667 = vpop.permute.xlu0 %1666
    %v1669 = vadd.f32 %v1655, %v1662
    %v1670 = vadd.f32 %v1656, %v1667
    %v1671 = vmax.f32 %v1669, 0.0
    %v1672 = vmax.f32 %v1670, 0.0
    %1673 = vst [vmem:[#allocation2 + $0x8] sm:$0xff] %v1671
    %1674 = vst [vmem:[#allocation2 + $0x20] sm:$0xff] %v1672
    %v1675 = vld [vmem:[#allocation2] sm:$0xff]
    %v1676 = vld [vmem:[#allocation2 + $0x8] sm:$0xff]
    %v1677 = vld [vmem:[#allocation2 + $0x18] sm:$0xff]
    %v1678 = vld [vmem:[#allocation2 + $0x20] sm:$0xff]
    %v1679 = vld [vmem:[%s9] sm:$0x1]
    %v1681 = vlaneseq
    %v1682 = vshrl.u32 %v1681, 7
    %v1683 = vsub.s32 0, %v1682
    %v1684 = vrot.slane %v1679, %v1683
    %1685 = vrot.lane.b32.xlu0 %v1684, 119
    %v1686 = vpop.permute.xlu0 %1685
    %v1688 = vmul.f32 %v1675, %v1686
    %v1689 = vmul.f32 %v1676, %v1686
    %v1690 = vmul.f32 %v1677, %v1686
    %v1691 = vmul.f32 %v1678, %v1686
    %s1692 = scalar_lea.vmem [#allocation7], 144
    %v1693 = vld [vmem:[%s1692] sm:$0xff]
    %v1694 = vld [vmem:[%s1692 + $0x8] sm:$0xff]
    %v1695 = vld [vmem:[%s600] sm:$0x1]
    %v1697 = vlaneseq
    %v1698 = vshrl.u32 %v1697, 7
    %v1699 = vsub.s32 0, %v1698
    %v1700 = vrot.slane %v1695, %v1699
    %1701 = vrot.lane.b32.xlu0 %v1700, 120
    %v1702 = vpop.permute.xlu0 %1701
    %v1704 = vmul.f32 %v1675, %v1702
    %v1705 = vmul.f32 %v1676, %v1702
    %v1706 = vmul.f32 %v1677, %v1702
    %v1707 = vmul.f32 %v1678, %v1702
    %s1708 = scalar_lea.vmem [#allocation7], 160
    %v1709 = vld [vmem:[%s1708] sm:$0xff]
    %v1710 = vld [vmem:[%s1708 + $0x8] sm:$0xff]
    %1715 = vrot.lane.b32.xlu0 %v1704, 8
    %v1716 = vpop.permute.xlu0 %1715
    %1717 = vrot.lane.b32.xlu0 %v1705, 8
    %v1718 = vpop.permute.xlu0 %1717
    %1719 = vrot.lane.b32.xlu0 %v1706, 8
    %v1720 = vpop.permute.xlu0 %1719
    %1721 = vrot.lane.b32.xlu0 %v1707, 8
    %v1722 = vpop.permute.xlu0 %1721
    %v1723 = vsel %vm629, %v1716, %v1718
    %v1724 = vsel %vm629, %v1720, %v1722
    %v1728 = vsel %vm634, %v1709, 0
    %v1731 = vsel %vm634, %v1710, 0
    %1733 = vmatprep.subr.mxu0 0.0
    %1734 = vmatpush1.msra.mxu0 %v1723
    %1735 = vmatprep.subr.mxu0 0.0
    %1736 = vmatpush1.msra.mxu0 %v1724
    %1737 = vmatprep.subr.mxu0 0.0
    %1738 = vmatpush1.msra.mxu0 0.0
    %1739 = vmatprep.subr.mxu0 0.0
    %1740 = vmatpush1.msra.mxu0 0.0
    %1741 = vmatprep.subr.mxu0 0.0
    %1742 = vmatpush1.msra.mxu0 0.0
    %1743 = vmatprep.subr.mxu0 0.0
    %1744 = vmatpush1.msra.mxu0 0.0
    %1745 = vmatprep.subr.mxu0 0.0
    %1746 = vmatpush1.msra.mxu0 0.0
    %1747 = vmatprep.subr.mxu0 0.0
    %1748 = vmatpush1.msra.mxu0 0.0
    %1749 = vmatprep.subr.mxu0 0.0
    %1750 = vmatpush1.msra.mxu0 0.0
    %1751 = vmatprep.subr.mxu0 0.0
    %1752 = vmatpush1.msra.mxu0 0.0
    %1753 = vmatprep.subr.mxu0 0.0
    %1754 = vmatpush1.msra.mxu0 0.0
    %1755 = vmatprep.subr.mxu0 0.0
    %1756 = vmatpush1.msra.mxu0 0.0
    %1757 = vmatprep.subr.mxu0 0.0
    %1758 = vmatpush1.msra.mxu0 0.0
    %1759 = vmatprep.subr.mxu0 0.0
    %1760 = vmatpush1.msra.mxu0 0.0
    %1761 = vmatprep.subr.mxu0 0.0
    %1762 = vmatpush1.msra.mxu0 0.0
    %1763 = vmatprep.subr.mxu0 0.0
    %1764 = vmatpush1.msra.mxu0 0.0
    %1765 = vmatprep.subr.mxu0 0.0
    %1766 = vmatpush1.msra.mxu0 0.0
    %1767 = vmatprep.subr.mxu0 0.0
    %1768 = vmatpush1.msra.mxu0 0.0
    %1769 = vmatprep.subr.mxu0 0.0
    %1770 = vmatpush1.msra.mxu0 0.0
    %1771 = vmatprep.subr.mxu0 0.0
    %1772 = vmatpush1.msra.mxu0 0.0
    %1773 = vmatprep.subr.mxu0 0.0
    %1774 = vmatpush1.msra.mxu0 0.0
    %1775 = vmatprep.subr.mxu0 0.0
    %1776 = vmatpush1.msra.mxu0 0.0
    %1777 = vmatprep.subr.mxu0 0.0
    %1778 = vmatpush1.msra.mxu0 0.0
    %1779 = vmatprep.subr.mxu0 0.0
    %1780 = vmatpush1.msra.mxu0 0.0
    %1781 = vmatprep.subr.mxu0 0.0
    %1782 = vmatpush1.msra.mxu0 0.0
    %1783 = vmatprep.subr.mxu0 0.0
    %1784 = vmatpush1.msra.mxu0 0.0
    %1785 = vmatprep.subr.mxu0 0.0
    %1786 = vmatpush1.msra.mxu0 0.0
    %1787 = vmatprep.subr.mxu0 0.0
    %1788 = vmatpush1.msra.mxu0 0.0
    %1789 = vmatprep.subr.mxu0 0.0
    %1790 = vmatpush1.msra.mxu0 0.0
    %1791 = vmatprep.subr.mxu0 0.0
    %1792 = vmatpush1.msra.mxu0 0.0
    %1793 = vmatprep.subr.mxu0 0.0
    %1794 = vmatpush1.msra.mxu0 0.0
    %1795 = vmatprep.subr.mxu0 0.0
    %1796 = vmatpush1.msra.mxu0 0.0
    %1797 = vmatprep.mubr.f32.mxu0 0.0
    %1798 = vmatmul.mubr.f32.gmra.mrb[0].mxu0 %v1728
    %v1799 = vpop.f32.mrb[0].mxu0
    %v1800 = vadd.f32 0.0, %v1799
    %v1801 = vpop.f32.mrb[0].mxu0
    %1802 = vmatprep.mubr.f32.mxu0 0.0
    %1803 = vmatmul.mubr.f32.gmra.mrb[0].mxu0 %v1731
    %v1804 = vpop.f32.mrb[0].mxu0
    %v1805 = vadd.f32 0.0, %v1804
    %v1806 = vpop.f32.mrb[0].mxu0
    %1807 = vdwg.mxu0
    %1812 = vrot.lane.b32.xlu0 %v1688, 9
    %v1813 = vpop.permute.xlu0 %1812
    %1814 = vrot.lane.b32.xlu0 %v1689, 9
    %v1815 = vpop.permute.xlu0 %1814
    %1816 = vrot.lane.b32.xlu0 %v1690, 9
    %v1817 = vpop.permute.xlu0 %1816
    %1818 = vrot.lane.b32.xlu0 %v1691, 9
    %v1819 = vpop.permute.xlu0 %1818
    %v1820 = vsel %vm728, %v1813, %v1815
    %v1821 = vsel %vm728, %v1817, %v1819
    %v1825 = vsel %vm634, %v1693, 0
    %v1828 = vsel %vm634, %v1694, 0
    %1830 = vmatprep.subr.mxu0 0.0
    %1831 = vmatpush1.msra.mxu0 %v1820
    %1832 = vmatprep.subr.mxu0 0.0
    %1833 = vmatpush1.msra.mxu0 %v1821
    %1834 = vmatprep.subr.mxu0 0.0
    %1835 = vmatpush1.msra.mxu0 0.0
    %1836 = vmatprep.subr.mxu0 0.0
    %1837 = vmatpush1.msra.mxu0 0.0
    %1838 = vmatprep.subr.mxu0 0.0
    %1839 = vmatpush1.msra.mxu0 0.0
    %1840 = vmatprep.subr.mxu0 0.0
    %1841 = vmatpush1.msra.mxu0 0.0
    %1842 = vmatprep.subr.mxu0 0.0
    %1843 = vmatpush1.msra.mxu0 0.0
    %1844 = vmatprep.subr.mxu0 0.0
    %1845 = vmatpush1.msra.mxu0 0.0
    %1846 = vmatprep.subr.mxu0 0.0
    %1847 = vmatpush1.msra.mxu0 0.0
    %1848 = vmatprep.subr.mxu0 0.0
    %1849 = vmatpush1.msra.mxu0 0.0
    %1850 = vmatprep.subr.mxu0 0.0
    %1851 = vmatpush1.msra.mxu0 0.0
    %1852 = vmatprep.subr.mxu0 0.0
    %1853 = vmatpush1.msra.mxu0 0.0
    %1854 = vmatprep.subr.mxu0 0.0
    %1855 = vmatpush1.msra.mxu0 0.0
    %1856 = vmatprep.subr.mxu0 0.0
    %1857 = vmatpush1.msra.mxu0 0.0
    %1858 = vmatprep.subr.mxu0 0.0
    %1859 = vmatpush1.msra.mxu0 0.0
    %1860 = vmatprep.subr.mxu0 0.0
    %1861 = vmatpush1.msra.mxu0 0.0
    %1862 = vmatprep.subr.mxu0 0.0
    %1863 = vmatpush1.msra.mxu0 0.0
    %1864 = vmatprep.subr.mxu0 0.0
    %1865 = vmatpush1.msra.mxu0 0.0
    %1866 = vmatprep.subr.mxu0 0.0
    %1867 = vmatpush1.msra.mxu0 0.0
    %1868 = vmatprep.subr.mxu0 0.0
    %1869 = vmatpush1.msra.mxu0 0.0
    %1870 = vmatprep.subr.mxu0 0.0
    %1871 = vmatpush1.msra.mxu0 0.0
    %1872 = vmatprep.subr.mxu0 0.0
    %1873 = vmatpush1.msra.mxu0 0.0
    %1874 = vmatprep.subr.mxu0 0.0
    %1875 = vmatpush1.msra.mxu0 0.0
    %1876 = vmatprep.subr.mxu0 0.0
    %1877 = vmatpush1.msra.mxu0 0.0
    %1878 = vmatprep.subr.mxu0 0.0
    %1879 = vmatpush1.msra.mxu0 0.0
    %1880 = vmatprep.subr.mxu0 0.0
    %1881 = vmatpush1.msra.mxu0 0.0
    %1882 = vmatprep.subr.mxu0 0.0
    %1883 = vmatpush1.msra.mxu0 0.0
    %1884 = vmatprep.subr.mxu0 0.0
    %1885 = vmatpush1.msra.mxu0 0.0
    %1886 = vmatprep.subr.mxu0 0.0
    %1887 = vmatpush1.msra.mxu0 0.0
    %1888 = vmatprep.subr.mxu0 0.0
    %1889 = vmatpush1.msra.mxu0 0.0
    %1890 = vmatprep.subr.mxu0 0.0
    %1891 = vmatpush1.msra.mxu0 0.0
    %1892 = vmatprep.subr.mxu0 0.0
    %1893 = vmatpush1.msra.mxu0 0.0
    %1894 = vmatprep.mubr.f32.mxu0 0.0
    %1895 = vmatmul.mubr.f32.gmra.mrb[0].mxu0 %v1825
    %v1896 = vpop.f32.mrb[0].mxu0
    %v1897 = vadd.f32 %v1800, %v1896
    %v1898 = vpop.f32.mrb[0].mxu0
    %1899 = vmatprep.mubr.f32.mxu0 0.0
    %1900 = vmatmul.mubr.f32.gmra.mrb[0].mxu0 %v1828
    %v1901 = vpop.f32.mrb[0].mxu0
    %v1902 = vadd.f32 %v1805, %v1901
    %v1903 = vpop.f32.mrb[0].mxu0
    %1904 = vdwg.mxu0
    %v1905 = vld [vmem:[%s814] sm:$0x1]
    %v1907 = vlaneseq
    %v1908 = vshrl.u32 %v1907, 7
    %v1909 = vsub.s32 0, %v1908
    %v1910 = vrot.slane %v1905, %v1909
    %1911 = vrot.lane.b32.xlu0 %v1910, 121
    %v1912 = vpop.permute.xlu0 %1911
    %v1914 = vmul.f32 %v1675, %v1912
    %v1915 = vmul.f32 %v1676, %v1912
    %v1916 = vmul.f32 %v1677, %v1912
    %v1917 = vmul.f32 %v1678, %v1912
    %s1918 = scalar_lea.vmem [#allocation7], 176
    %v1919 = vld [vmem:[%s1918] sm:$0xff]
    %v1920 = vld [vmem:[%s1918 + $0x8] sm:$0xff]
    %1925 = vrot.lane.b32.xlu0 %v1914, 7
    %v1926 = vpop.permute.xlu0 %1925
    %1927 = vrot.lane.b32.xlu0 %v1915, 7
    %v1928 = vpop.permute.xlu0 %1927
    %1929 = vrot.lane.b32.xlu0 %v1916, 7
    %v1930 = vpop.permute.xlu0 %1929
    %1931 = vrot.lane.b32.xlu0 %v1917, 7
    %v1932 = vpop.permute.xlu0 %1931
    %v1933 = vsel %vm843, %v1926, %v1928
    %v1934 = vsel %vm843, %v1930, %v1932
    %v1938 = vsel %vm634, %v1919, 0
    %v1941 = vsel %vm634, %v1920, 0
    %1943 = vmatprep.subr.mxu0 0.0
    %1944 = vmatpush1.msra.mxu0 %v1933
    %1945 = vmatprep.subr.mxu0 0.0
    %1946 = vmatpush1.msra.mxu0 %v1934
    %1947 = vmatprep.subr.mxu0 0.0
    %1948 = vmatpush1.msra.mxu0 0.0
    %1949 = vmatprep.subr.mxu0 0.0
    %1950 = vmatpush1.msra.mxu0 0.0
    %1951 = vmatprep.subr.mxu0 0.0
    %1952 = vmatpush1.msra.mxu0 0.0
    %1953 = vmatprep.subr.mxu0 0.0
    %1954 = vmatpush1.msra.mxu0 0.0
    %1955 = vmatprep.subr.mxu0 0.0
    %1956 = vmatpush1.msra.mxu0 0.0
    %1957 = vmatprep.subr.mxu0 0.0
    %1958 = vmatpush1.msra.mxu0 0.0
    %1959 = vmatprep.subr.mxu0 0.0
    %1960 = vmatpush1.msra.mxu0 0.0
    %1961 = vmatprep.subr.mxu0 0.0
    %1962 = vmatpush1.msra.mxu0 0.0
    %1963 = vmatprep.subr.mxu0 0.0
    %1964 = vmatpush1.msra.mxu0 0.0
    %1965 = vmatprep.subr.mxu0 0.0
    %1966 = vmatpush1.msra.mxu0 0.0
    %1967 = vmatprep.subr.mxu0 0.0
    %1968 = vmatpush1.msra.mxu0 0.0
    %1969 = vmatprep.subr.mxu0 0.0
    %1970 = vmatpush1.msra.mxu0 0.0
    %1971 = vmatprep.subr.mxu0 0.0
    %1972 = vmatpush1.msra.mxu0 0.0
    %1973 = vmatprep.subr.mxu0 0.0
    %1974 = vmatpush1.msra.mxu0 0.0
    %1975 = vmatprep.subr.mxu0 0.0
    %1976 = vmatpush1.msra.mxu0 0.0
    %1977 = vmatprep.subr.mxu0 0.0
    %1978 = vmatpush1.msra.mxu0 0.0
    %1979 = vmatprep.subr.mxu0 0.0
    %1980 = vmatpush1.msra.mxu0 0.0
    %1981 = vmatprep.subr.mxu0 0.0
    %1982 = vmatpush1.msra.mxu0 0.0
    %1983 = vmatprep.subr.mxu0 0.0
    %1984 = vmatpush1.msra.mxu0 0.0
    %1985 = vmatprep.subr.mxu0 0.0
    %1986 = vmatpush1.msra.mxu0 0.0
    %1987 = vmatprep.subr.mxu0 0.0
    %1988 = vmatpush1.msra.mxu0 0.0
    %1989 = vmatprep.subr.mxu0 0.0
    %1990 = vmatpush1.msra.mxu0 0.0
    %1991 = vmatprep.subr.mxu0 0.0
    %1992 = vmatpush1.msra.mxu0 0.0
    %1993 = vmatprep.subr.mxu0 0.0
    %1994 = vmatpush1.msra.mxu0 0.0
    %1995 = vmatprep.subr.mxu0 0.0
    %1996 = vmatpush1.msra.mxu0 0.0
    %1997 = vmatprep.subr.mxu0 0.0
    %1998 = vmatpush1.msra.mxu0 0.0
    %1999 = vmatprep.subr.mxu0 0.0
    %2000 = vmatpush1.msra.mxu0 0.0
    %2001 = vmatprep.subr.mxu0 0.0
    %2002 = vmatpush1.msra.mxu0 0.0
    %2003 = vmatprep.subr.mxu0 0.0
    %2004 = vmatpush1.msra.mxu0 0.0
    %2005 = vmatprep.subr.mxu0 0.0
    %2006 = vmatpush1.msra.mxu0 0.0
    %2007 = vmatprep.mubr.f32.mxu0 0.0
    %2008 = vmatmul.mubr.f32.gmra.mrb[0].mxu0 %v1938
    %v2009 = vpop.f32.mrb[0].mxu0
    %v2010 = vadd.f32 0.0, %v2009
    %v2011 = vpop.f32.mrb[0].mxu0
    %2012 = vmatprep.mubr.f32.mxu0 0.0
    %2013 = vmatmul.mubr.f32.gmra.mrb[0].mxu0 %v1941
    %v2014 = vpop.f32.mrb[0].mxu0
    %v2015 = vadd.f32 0.0, %v2014
    %v2016 = vpop.f32.mrb[0].mxu0
    %2017 = vdwg.mxu0
    %v2018 = vadd.f32 %v1897, %v2010
    %v2019 = vadd.f32 %v1902, %v2015
    %v2020 = vld [vmem:[%s931] sm:$0x1]
    %v2022 = vlaneseq
    %v2023 = vshrl.u32 %v2022, 7
    %v2024 = vsub.s32 0, %v2023
    %v2025 = vrot.slane %v2020, %v2024
    %2026 = vrot.lane.b32.xlu0 %v2025, 127
    %v2027 = vpop.permute.xlu0 %2026
    %v2029 = vmul.f32 %v1675, %v2027
    %v2030 = vmul.f32 %v1676, %v2027
    %v2031 = vmul.f32 %v1677, %v2027
    %v2032 = vmul.f32 %v1678, %v2027
    %s2033 = scalar_lea.vmem [#allocation7], 192
    %v2034 = vld [vmem:[%s2033] sm:$0xff]
    %v2035 = vld [vmem:[%s2033 + $0x8] sm:$0xff]
    %2040 = vrot.lane.b32.xlu0 %v2029, 1
    %v2041 = vpop.permute.xlu0 %2040
    %2042 = vrot.lane.b32.xlu0 %v2030, 1
    %v2043 = vpop.permute.xlu0 %2042
    %2044 = vrot.lane.b32.xlu0 %v2031, 1
    %v2045 = vpop.permute.xlu0 %2044
    %2046 = vrot.lane.b32.xlu0 %v2032, 1
    %v2047 = vpop.permute.xlu0 %2046
    %v2048 = vsel %vm960, %v2041, %v2043
    %v2049 = vsel %vm960, %v2045, %v2047
    %v2053 = vsel %vm634, %v2034, 0
    %v2056 = vsel %vm634, %v2035, 0
    %2058 = vmatprep.subr.mxu0 0.0
    %2059 = vmatpush1.msra.mxu0 %v2048
    %2060 = vmatprep.subr.mxu0 0.0
    %2061 = vmatpush1.msra.mxu0 %v2049
    %2062 = vmatprep.subr.mxu0 0.0
    %2063 = vmatpush1.msra.mxu0 0.0
    %2064 = vmatprep.subr.mxu0 0.0
    %2065 = vmatpush1.msra.mxu0 0.0
    %2066 = vmatprep.subr.mxu0 0.0
    %2067 = vmatpush1.msra.mxu0 0.0
    %2068 = vmatprep.subr.mxu0 0.0
    %2069 = vmatpush1.msra.mxu0 0.0
    %2070 = vmatprep.subr.mxu0 0.0
    %2071 = vmatpush1.msra.mxu0 0.0
    %2072 = vmatprep.subr.mxu0 0.0
    %2073 = vmatpush1.msra.mxu0 0.0
    %2074 = vmatprep.subr.mxu0 0.0
    %2075 = vmatpush1.msra.mxu0 0.0
    %2076 = vmatprep.subr.mxu0 0.0
    %2077 = vmatpush1.msra.mxu0 0.0
    %2078 = vmatprep.subr.mxu0 0.0
    %2079 = vmatpush1.msra.mxu0 0.0
    %2080 = vmatprep.subr.mxu0 0.0
    %2081 = vmatpush1.msra.mxu0 0.0
    %2082 = vmatprep.subr.mxu0 0.0
    %2083 = vmatpush1.msra.mxu0 0.0
    %2084 = vmatprep.subr.mxu0 0.0
    %2085 = vmatpush1.msra.mxu0 0.0
    %2086 = vmatprep.subr.mxu0 0.0
    %2087 = vmatpush1.msra.mxu0 0.0
    %2088 = vmatprep.subr.mxu0 0.0
    %2089 = vmatpush1.msra.mxu0 0.0
    %2090 = vmatprep.subr.mxu0 0.0
    %2091 = vmatpush1.msra.mxu0 0.0
    %2092 = vmatprep.subr.mxu0 0.0
    %2093 = vmatpush1.msra.mxu0 0.0
    %2094 = vmatprep.subr.mxu0 0.0
    %2095 = vmatpush1.msra.mxu0 0.0
    %2096 = vmatprep.subr.mxu0 0.0
    %2097 = vmatpush1.msra.mxu0 0.0
    %2098 = vmatprep.subr.mxu0 0.0
    %2099 = vmatpush1.msra.mxu0 0.0
    %2100 = vmatprep.subr.mxu0 0.0
    %2101 = vmatpush1.msra.mxu0 0.0
    %2102 = vmatprep.subr.mxu0 0.0
    %2103 = vmatpush1.msra.mxu0 0.0
    %2104 = vmatprep.subr.mxu0 0.0
    %2105 = vmatpush1.msra.mxu0 0.0
    %2106 = vmatprep.subr.mxu0 0.0
    %2107 = vmatpush1.msra.mxu0 0.0
    %2108 = vmatprep.subr.mxu0 0.0
    %2109 = vmatpush1.msra.mxu0 0.0
    %2110 = vmatprep.subr.mxu0 0.0
    %2111 = vmatpush1.msra.mxu0 0.0
    %2112 = vmatprep.subr.mxu0 0.0
    %2113 = vmatpush1.msra.mxu0 0.0
    %2114 = vmatprep.subr.mxu0 0.0
    %2115 = vmatpush1.msra.mxu0 0.0
    %2116 = vmatprep.subr.mxu0 0.0
    %2117 = vmatpush1.msra.mxu0 0.0
    %2118 = vmatprep.subr.mxu0 0.0
    %2119 = vmatpush1.msra.mxu0 0.0
    %2120 = vmatprep.subr.mxu0 0.0
    %2121 = vmatpush1.msra.mxu0 0.0
    %2122 = vmatprep.mubr.f32.mxu0 0.0
    %2123 = vmatmul.mubr.f32.gmra.mrb[0].mxu0 %v2053
    %v2124 = vpop.f32.mrb[0].mxu0
    %v2125 = vadd.f32 0.0, %v2124
    %v2126 = vpop.f32.mrb[0].mxu0
    %2127 = vmatprep.mubr.f32.mxu0 0.0
    %2128 = vmatmul.mubr.f32.gmra.mrb[0].mxu0 %v2056
    %v2129 = vpop.f32.mrb[0].mxu0
    %v2130 = vadd.f32 0.0, %v2129
    %v2131 = vpop.f32.mrb[0].mxu0
    %2132 = vdwg.mxu0
    %v2133 = vadd.f32 %v2018, %v2125
    %v2134 = vadd.f32 %v2019, %v2130
    %s2135 = scalar_lea.vmem [#allocation7], 208
    %v2136 = vld [vmem:[%s2135] sm:$0xff]
    %v2137 = vld [vmem:[%s2135 + $0x8] sm:$0xff]
    %v2139 = vsel %vm634, %v2136, 0
    %v2142 = vsel %vm634, %v2137, 0
    %2144 = vmatprep.subr.mxu0 0.0
    %2145 = vmatpush1.msra.mxu0 %v1676
    %2146 = vmatprep.subr.mxu0 0.0
    %2147 = vmatpush1.msra.mxu0 %v1678
    %2148 = vmatprep.subr.mxu0 0.0
    %2149 = vmatpush1.msra.mxu0 0.0
    %2150 = vmatprep.subr.mxu0 0.0
    %2151 = vmatpush1.msra.mxu0 0.0
    %2152 = vmatprep.subr.mxu0 0.0
    %2153 = vmatpush1.msra.mxu0 0.0
    %2154 = vmatprep.subr.mxu0 0.0
    %2155 = vmatpush1.msra.mxu0 0.0
    %2156 = vmatprep.subr.mxu0 0.0
    %2157 = vmatpush1.msra.mxu0 0.0
    %2158 = vmatprep.subr.mxu0 0.0
    %2159 = vmatpush1.msra.mxu0 0.0
    %2160 = vmatprep.subr.mxu0 0.0
    %2161 = vmatpush1.msra.mxu0 0.0
    %2162 = vmatprep.subr.mxu0 0.0
    %2163 = vmatpush1.msra.mxu0 0.0
    %2164 = vmatprep.subr.mxu0 0.0
    %2165 = vmatpush1.msra.mxu0 0.0
    %2166 = vmatprep.subr.mxu0 0.0
    %2167 = vmatpush1.msra.mxu0 0.0
    %2168 = vmatprep.subr.mxu0 0.0
    %2169 = vmatpush1.msra.mxu0 0.0
    %2170 = vmatprep.subr.mxu0 0.0
    %2171 = vmatpush1.msra.mxu0 0.0
    %2172 = vmatprep.subr.mxu0 0.0
    %2173 = vmatpush1.msra.mxu0 0.0
    %2174 = vmatprep.subr.mxu0 0.0
    %2175 = vmatpush1.msra.mxu0 0.0
    %2176 = vmatprep.subr.mxu0 0.0
    %2177 = vmatpush1.msra.mxu0 0.0
    %2178 = vmatprep.subr.mxu0 0.0
    %2179 = vmatpush1.msra.mxu0 0.0
    %2180 = vmatprep.subr.mxu0 0.0
    %2181 = vmatpush1.msra.mxu0 0.0
    %2182 = vmatprep.subr.mxu0 0.0
    %2183 = vmatpush1.msra.mxu0 0.0
    %2184 = vmatprep.subr.mxu0 0.0
    %2185 = vmatpush1.msra.mxu0 0.0
    %2186 = vmatprep.subr.mxu0 0.0
    %2187 = vmatpush1.msra.mxu0 0.0
    %2188 = vmatprep.subr.mxu0 0.0
    %2189 = vmatpush1.msra.mxu0 0.0
    %2190 = vmatprep.subr.mxu0 0.0
    %2191 = vmatpush1.msra.mxu0 0.0
    %2192 = vmatprep.subr.mxu0 0.0
    %2193 = vmatpush1.msra.mxu0 0.0
    %2194 = vmatprep.subr.mxu0 0.0
    %2195 = vmatpush1.msra.mxu0 0.0
    %2196 = vmatprep.subr.mxu0 0.0
    %2197 = vmatpush1.msra.mxu0 0.0
    %2198 = vmatprep.subr.mxu0 0.0
    %2199 = vmatpush1.msra.mxu0 0.0
    %2200 = vmatprep.subr.mxu0 0.0
    %2201 = vmatpush1.msra.mxu0 0.0
    %2202 = vmatprep.subr.mxu0 0.0
    %2203 = vmatpush1.msra.mxu0 0.0
    %2204 = vmatprep.subr.mxu0 0.0
    %2205 = vmatpush1.msra.mxu0 0.0
    %2206 = vmatprep.subr.mxu0 0.0
    %2207 = vmatpush1.msra.mxu0 0.0
    %2208 = vmatprep.mubr.f32.mxu0 0.0
    %2209 = vmatmul.mubr.f32.gmra.mrb[0].mxu0 %v2139
    %v2210 = vpop.f32.mrb[0].mxu0
    %v2211 = vadd.f32 0.0, %v2210
    %v2212 = vpop.f32.mrb[0].mxu0
    %2213 = vmatprep.mubr.f32.mxu0 0.0
    %2214 = vmatmul.mubr.f32.gmra.mrb[0].mxu0 %v2142
    %v2215 = vpop.f32.mrb[0].mxu0
    %v2216 = vadd.f32 0.0, %v2215
    %v2217 = vpop.f32.mrb[0].mxu0
    %2218 = vdwg.mxu0
    %v2219 = vadd.f32 %v2133, %v2211
    %v2220 = vadd.f32 %v2134, %v2216
    %v2221 = vld [vmem:[#allocation2 + $0x8] sm:$0xff]
    %v2222 = vld [vmem:[#allocation2 + $0x10] sm:$0xff]
    %v2223 = vld [vmem:[#allocation2 + $0x20] sm:$0xff]
    %v2224 = vld [vmem:[#allocation2 + $0x28] sm:$0xff]
    %v2225 = vld [vmem:[%s1138] sm:$0x1]
    %v2227 = vlaneseq
    %v2228 = vshrl.u32 %v2227, 7
    %v2229 = vsub.s32 0, %v2228
    %v2230 = vrot.slane %v2225, %v2229
    %2231 = vrot.lane.b32.xlu0 %v2230, 1
    %v2232 = vpop.permute.xlu0 %2231
    %v2234 = vmul.f32 %v2221, %v2232
    %v2235 = vmul.f32 %v2222, %v2232
    %v2236 = vmul.f32 %v2223, %v2232
    %v2237 = vmul.f32 %v2224, %v2232
    %s2238 = scalar_lea.vmem [#allocation7], 224
    %v2239 = vld [vmem:[%s2238] sm:$0xff]
    %v2240 = vld [vmem:[%s2238 + $0x8] sm:$0xff]
    %2245 = vrot.lane.b32.xlu0 %v2234, 127
    %v2246 = vpop.permute.xlu0 %2245
    %2247 = vrot.lane.b32.xlu0 %v2235, 127
    %v2248 = vpop.permute.xlu0 %2247
    %2249 = vrot.lane.b32.xlu0 %v2236, 127
    %v2250 = vpop.permute.xlu0 %2249
    %2251 = vrot.lane.b32.xlu0 %v2237, 127
    %v2252 = vpop.permute.xlu0 %2251
    %v2253 = vsel %vm1167, %v2246, %v2248
    %v2254 = vsel %vm1167, %v2250, %v2252
    %v2258 = vsel %vm634, %v2239, 0
    %v2261 = vsel %vm634, %v2240, 0
    %2263 = vmatprep.subr.mxu0 0.0
    %2264 = vmatpush1.msra.mxu0 %v2253
    %2265 = vmatprep.subr.mxu0 0.0
    %2266 = vmatpush1.msra.mxu0 %v2254
    %2267 = vmatprep.subr.mxu0 0.0
    %2268 = vmatpush1.msra.mxu0 0.0
    %2269 = vmatprep.subr.mxu0 0.0
    %2270 = vmatpush1.msra.mxu0 0.0
    %2271 = vmatprep.subr.mxu0 0.0
    %2272 = vmatpush1.msra.mxu0 0.0
    %2273 = vmatprep.subr.mxu0 0.0
    %2274 = vmatpush1.msra.mxu0 0.0
    %2275 = vmatprep.subr.mxu0 0.0
    %2276 = vmatpush1.msra.mxu0 0.0
    %2277 = vmatprep.subr.mxu0 0.0
    %2278 = vmatpush1.msra.mxu0 0.0
    %2279 = vmatprep.subr.mxu0 0.0
    %2280 = vmatpush1.msra.mxu0 0.0
    %2281 = vmatprep.subr.mxu0 0.0
    %2282 = vmatpush1.msra.mxu0 0.0
    %2283 = vmatprep.subr.mxu0 0.0
    %2284 = vmatpush1.msra.mxu0 0.0
    %2285 = vmatprep.subr.mxu0 0.0
    %2286 = vmatpush1.msra.mxu0 0.0
    %2287 = vmatprep.subr.mxu0 0.0
    %2288 = vmatpush1.msra.mxu0 0.0
    %2289 = vmatprep.subr.mxu0 0.0
    %2290 = vmatpush1.msra.mxu0 0.0
    %2291 = vmatprep.subr.mxu0 0.0
    %2292 = vmatpush1.msra.mxu0 0.0
    %2293 = vmatprep.subr.mxu0 0.0
    %2294 = vmatpush1.msra.mxu0 0.0
    %2295 = vmatprep.subr.mxu0 0.0
    %2296 = vmatpush1.msra.mxu0 0.0
    %2297 = vmatprep.subr.mxu0 0.0
    %2298 = vmatpush1.msra.mxu0 0.0
    %2299 = vmatprep.subr.mxu0 0.0
    %2300 = vmatpush1.msra.mxu0 0.0
    %2301 = vmatprep.subr.mxu0 0.0
    %2302 = vmatpush1.msra.mxu0 0.0
    %2303 = vmatprep.subr.mxu0 0.0
    %2304 = vmatpush1.msra.mxu0 0.0
    %2305 = vmatprep.subr.mxu0 0.0
    %2306 = vmatpush1.msra.mxu0 0.0
    %2307 = vmatprep.subr.mxu0 0.0
    %2308 = vmatpush1.msra.mxu0 0.0
    %2309 = vmatprep.subr.mxu0 0.0
    %2310 = vmatpush1.msra.mxu0 0.0
    %2311 = vmatprep.subr.mxu0 0.0
    %2312 = vmatpush1.msra.mxu0 0.0
    %2313 = vmatprep.subr.mxu0 0.0
    %2314 = vmatpush1.msra.mxu0 0.0
    %2315 = vmatprep.subr.mxu0 0.0
    %2316 = vmatpush1.msra.mxu0 0.0
    %2317 = vmatprep.subr.mxu0 0.0
    %2318 = vmatpush1.msra.mxu0 0.0
    %2319 = vmatprep.subr.mxu0 0.0
    %2320 = vmatpush1.msra.mxu0 0.0
    %2321 = vmatprep.subr.mxu0 0.0
    %2322 = vmatpush1.msra.mxu0 0.0
    %2323 = vmatprep.subr.mxu0 0.0
    %2324 = vmatpush1.msra.mxu0 0.0
    %2325 = vmatprep.subr.mxu0 0.0
    %2326 = vmatpush1.msra.mxu0 0.0
    %2327 = vmatprep.mubr.f32.mxu0 0.0
    %2328 = vmatmul.mubr.f32.gmra.mrb[0].mxu0 %v2258
    %v2329 = vpop.f32.mrb[0].mxu0
    %v2330 = vadd.f32 0.0, %v2329
    %v2331 = vpop.f32.mrb[0].mxu0
    %2332 = vmatprep.mubr.f32.mxu0 0.0
    %2333 = vmatmul.mubr.f32.gmra.mrb[0].mxu0 %v2261
    %v2334 = vpop.f32.mrb[0].mxu0
    %v2335 = vadd.f32 0.0, %v2334
    %v2336 = vpop.f32.mrb[0].mxu0
    %2337 = vdwg.mxu0
    %v2338 = vadd.f32 %v2219, %v2330
    %v2339 = vadd.f32 %v2220, %v2335
    %v2340 = vld [vmem:[%s1255] sm:$0x1]
    %v2342 = vlaneseq
    %v2343 = vshrl.u32 %v2342, 7
    %v2344 = vsub.s32 0, %v2343
    %v2345 = vrot.slane %v2340, %v2344
    %2346 = vrot.lane.b32.xlu0 %v2345, 7
    %v2347 = vpop.permute.xlu0 %2346
    %v2349 = vmul.f32 %v2221, %v2347
    %v2350 = vmul.f32 %v2222, %v2347
    %v2351 = vmul.f32 %v2223, %v2347
    %v2352 = vmul.f32 %v2224, %v2347
    %s2353 = scalar_lea.vmem [#allocation7], 240
    %v2354 = vld [vmem:[%s2353] sm:$0xff]
    %v2355 = vld [vmem:[%s2353 + $0x8] sm:$0xff]
    %2360 = vrot.lane.b32.xlu0 %v2349, 121
    %v2361 = vpop.permute.xlu0 %2360
    %2362 = vrot.lane.b32.xlu0 %v2350, 121
    %v2363 = vpop.permute.xlu0 %2362
    %2364 = vrot.lane.b32.xlu0 %v2351, 121
    %v2365 = vpop.permute.xlu0 %2364
    %2366 = vrot.lane.b32.xlu0 %v2352, 121
    %v2367 = vpop.permute.xlu0 %2366
    %v2368 = vsel %vm1284, %v2361, %v2363
    %v2369 = vsel %vm1284, %v2365, %v2367
    %v2373 = vsel %vm634, %v2354, 0
    %v2376 = vsel %vm634, %v2355, 0
    %2378 = vmatprep.subr.mxu0 0.0
    %2379 = vmatpush1.msra.mxu0 %v2368
    %2380 = vmatprep.subr.mxu0 0.0
    %2381 = vmatpush1.msra.mxu0 %v2369
    %2382 = vmatprep.subr.mxu0 0.0
    %2383 = vmatpush1.msra.mxu0 0.0
    %2384 = vmatprep.subr.mxu0 0.0
    %2385 = vmatpush1.msra.mxu0 0.0
    %2386 = vmatprep.subr.mxu0 0.0
    %2387 = vmatpush1.msra.mxu0 0.0
    %2388 = vmatprep.subr.mxu0 0.0
    %2389 = vmatpush1.msra.mxu0 0.0
    %2390 = vmatprep.subr.mxu0 0.0
    %2391 = vmatpush1.msra.mxu0 0.0
    %2392 = vmatprep.subr.mxu0 0.0
    %2393 = vmatpush1.msra.mxu0 0.0
    %2394 = vmatprep.subr.mxu0 0.0
    %2395 = vmatpush1.msra.mxu0 0.0
    %2396 = vmatprep.subr.mxu0 0.0
    %2397 = vmatpush1.msra.mxu0 0.0
    %2398 = vmatprep.subr.mxu0 0.0
    %2399 = vmatpush1.msra.mxu0 0.0
    %2400 = vmatprep.subr.mxu0 0.0
    %2401 = vmatpush1.msra.mxu0 0.0
    %2402 = vmatprep.subr.mxu0 0.0
    %2403 = vmatpush1.msra.mxu0 0.0
    %2404 = vmatprep.subr.mxu0 0.0
    %2405 = vmatpush1.msra.mxu0 0.0
    %2406 = vmatprep.subr.mxu0 0.0
    %2407 = vmatpush1.msra.mxu0 0.0
    %2408 = vmatprep.subr.mxu0 0.0
    %2409 = vmatpush1.msra.mxu0 0.0
    %2410 = vmatprep.subr.mxu0 0.0
    %2411 = vmatpush1.msra.mxu0 0.0
    %2412 = vmatprep.subr.mxu0 0.0
    %2413 = vmatpush1.msra.mxu0 0.0
    %2414 = vmatprep.subr.mxu0 0.0
    %2415 = vmatpush1.msra.mxu0 0.0
    %2416 = vmatprep.subr.mxu0 0.0
    %2417 = vmatpush1.msra.mxu0 0.0
    %2418 = vmatprep.subr.mxu0 0.0
    %2419 = vmatpush1.msra.mxu0 0.0
    %2420 = vmatprep.subr.mxu0 0.0
    %2421 = vmatpush1.msra.mxu0 0.0
    %2422 = vmatprep.subr.mxu0 0.0
    %2423 = vmatpush1.msra.mxu0 0.0
    %2424 = vmatprep.subr.mxu0 0.0
    %2425 = vmatpush1.msra.mxu0 0.0
    %2426 = vmatprep.subr.mxu0 0.0
    %2427 = vmatpush1.msra.mxu0 0.0
    %2428 = vmatprep.subr.mxu0 0.0
    %2429 = vmatpush1.msra.mxu0 0.0
    %2430 = vmatprep.subr.mxu0 0.0
    %2431 = vmatpush1.msra.mxu0 0.0
    %2432 = vmatprep.subr.mxu0 0.0
    %2433 = vmatpush1.msra.mxu0 0.0
    %2434 = vmatprep.subr.mxu0 0.0
    %2435 = vmatpush1.msra.mxu0 0.0
    %2436 = vmatprep.subr.mxu0 0.0
    %2437 = vmatpush1.msra.mxu0 0.0
    %2438 = vmatprep.subr.mxu0 0.0
    %2439 = vmatpush1.msra.mxu0 0.0
    %2440 = vmatprep.subr.mxu0 0.0
    %2441 = vmatpush1.msra.mxu0 0.0
    %2442 = vmatprep.mubr.f32.mxu0 0.0
    %2443 = vmatmul.mubr.f32.gmra.mrb[0].mxu0 %v2373
    %v2444 = vpop.f32.mrb[0].mxu0
    %v2445 = vadd.f32 0.0, %v2444
    %v2446 = vpop.f32.mrb[0].mxu0
    %2447 = vmatprep.mubr.f32.mxu0 0.0
    %2448 = vmatmul.mubr.f32.gmra.mrb[0].mxu0 %v2376
    %v2449 = vpop.f32.mrb[0].mxu0
    %v2450 = vadd.f32 0.0, %v2449
    %v2451 = vpop.f32.mrb[0].mxu0
    %2452 = vdwg.mxu0
    %v2453 = vadd.f32 %v2338, %v2445
    %v2454 = vadd.f32 %v2339, %v2450
    %v2455 = vld [vmem:[%s1372] sm:$0x1]
    %v2457 = vlaneseq
    %v2458 = vshrl.u32 %v2457, 7
    %v2459 = vsub.s32 0, %v2458
    %v2460 = vrot.slane %v2455, %v2459
    %2461 = vrot.lane.b32.xlu0 %v2460, 8
    %v2462 = vpop.permute.xlu0 %2461
    %v2464 = vmul.f32 %v2221, %v2462
    %v2465 = vmul.f32 %v2222, %v2462
    %v2466 = vmul.f32 %v2223, %v2462
    %v2467 = vmul.f32 %v2224, %v2462
    %s2468 = scalar_lea.vmem [#allocation7], 256
    %v2469 = vld [vmem:[%s2468] sm:$0xff]
    %v2470 = vld [vmem:[%s2468 + $0x8] sm:$0xff]
    %2475 = vrot.lane.b32.xlu0 %v2464, 120
    %v2476 = vpop.permute.xlu0 %2475
    %2477 = vrot.lane.b32.xlu0 %v2465, 120
    %v2478 = vpop.permute.xlu0 %2477
    %2479 = vrot.lane.b32.xlu0 %v2466, 120
    %v2480 = vpop.permute.xlu0 %2479
    %2481 = vrot.lane.b32.xlu0 %v2467, 120
    %v2482 = vpop.permute.xlu0 %2481
    %v2483 = vsel %vm1401, %v2476, %v2478
    %v2484 = vsel %vm1401, %v2480, %v2482
    %v2488 = vsel %vm634, %v2469, 0
    %v2491 = vsel %vm634, %v2470, 0
    %2493 = vmatprep.subr.mxu0 0.0
    %2494 = vmatpush1.msra.mxu0 %v2483
    %2495 = vmatprep.subr.mxu0 0.0
    %2496 = vmatpush1.msra.mxu0 %v2484
    %2497 = vmatprep.subr.mxu0 0.0
    %2498 = vmatpush1.msra.mxu0 0.0
    %2499 = vmatprep.subr.mxu0 0.0
    %2500 = vmatpush1.msra.mxu0 0.0
    %2501 = vmatprep.subr.mxu0 0.0
    %2502 = vmatpush1.msra.mxu0 0.0
    %2503 = vmatprep.subr.mxu0 0.0
    %2504 = vmatpush1.msra.mxu0 0.0
    %2505 = vmatprep.subr.mxu0 0.0
    %2506 = vmatpush1.msra.mxu0 0.0
    %2507 = vmatprep.subr.mxu0 0.0
    %2508 = vmatpush1.msra.mxu0 0.0
    %2509 = vmatprep.subr.mxu0 0.0
    %2510 = vmatpush1.msra.mxu0 0.0
    %2511 = vmatprep.subr.mxu0 0.0
    %2512 = vmatpush1.msra.mxu0 0.0
    %2513 = vmatprep.subr.mxu0 0.0
    %2514 = vmatpush1.msra.mxu0 0.0
    %2515 = vmatprep.subr.mxu0 0.0
    %2516 = vmatpush1.msra.mxu0 0.0
    %2517 = vmatprep.subr.mxu0 0.0
    %2518 = vmatpush1.msra.mxu0 0.0
    %2519 = vmatprep.subr.mxu0 0.0
    %2520 = vmatpush1.msra.mxu0 0.0
    %2521 = vmatprep.subr.mxu0 0.0
    %2522 = vmatpush1.msra.mxu0 0.0
    %2523 = vmatprep.subr.mxu0 0.0
    %2524 = vmatpush1.msra.mxu0 0.0
    %2525 = vmatprep.subr.mxu0 0.0
    %2526 = vmatpush1.msra.mxu0 0.0
    %2527 = vmatprep.subr.mxu0 0.0
    %2528 = vmatpush1.msra.mxu0 0.0
    %2529 = vmatprep.subr.mxu0 0.0
    %2530 = vmatpush1.msra.mxu0 0.0
    %2531 = vmatprep.subr.mxu0 0.0
    %2532 = vmatpush1.msra.mxu0 0.0
    %2533 = vmatprep.subr.mxu0 0.0
    %2534 = vmatpush1.msra.mxu0 0.0
    %2535 = vmatprep.subr.mxu0 0.0
    %2536 = vmatpush1.msra.mxu0 0.0
    %2537 = vmatprep.subr.mxu0 0.0
    %2538 = vmatpush1.msra.mxu0 0.0
    %2539 = vmatprep.subr.mxu0 0.0
    %2540 = vmatpush1.msra.mxu0 0.0
    %2541 = vmatprep.subr.mxu0 0.0
    %2542 = vmatpush1.msra.mxu0 0.0
    %2543 = vmatprep.subr.mxu0 0.0
    %2544 = vmatpush1.msra.mxu0 0.0
    %2545 = vmatprep.subr.mxu0 0.0
    %2546 = vmatpush1.msra.mxu0 0.0
    %2547 = vmatprep.subr.mxu0 0.0
    %2548 = vmatpush1.msra.mxu0 0.0
    %2549 = vmatprep.subr.mxu0 0.0
    %2550 = vmatpush1.msra.mxu0 0.0
    %2551 = vmatprep.subr.mxu0 0.0
    %2552 = vmatpush1.msra.mxu0 0.0
    %2553 = vmatprep.subr.mxu0 0.0
    %2554 = vmatpush1.msra.mxu0 0.0
    %2555 = vmatprep.subr.mxu0 0.0
    %2556 = vmatpush1.msra.mxu0 0.0
    %2557 = vmatprep.mubr.f32.mxu0 0.0
    %2558 = vmatmul.mubr.f32.gmra.mrb[0].mxu0 %v2488
    %v2559 = vpop.f32.mrb[0].mxu0
    %v2560 = vadd.f32 0.0, %v2559
    %v2561 = vpop.f32.mrb[0].mxu0
    %2562 = vmatprep.mubr.f32.mxu0 0.0
    %2563 = vmatmul.mubr.f32.gmra.mrb[0].mxu0 %v2491
    %v2564 = vpop.f32.mrb[0].mxu0
    %v2565 = vadd.f32 0.0, %v2564
    %v2566 = vpop.f32.mrb[0].mxu0
    %2567 = vdwg.mxu0
    %v2568 = vadd.f32 %v2453, %v2560
    %v2569 = vadd.f32 %v2454, %v2565
    %v2570 = vld [vmem:[%s1489] sm:$0x1]
    %v2572 = vlaneseq
    %v2573 = vshrl.u32 %v2572, 7
    %v2574 = vsub.s32 0, %v2573
    %v2575 = vrot.slane %v2570, %v2574
    %2576 = vrot.lane.b32.xlu0 %v2575, 9
    %v2577 = vpop.permute.xlu0 %2576
    %v2579 = vmul.f32 %v2221, %v2577
    %v2580 = vmul.f32 %v2222, %v2577
    %v2581 = vmul.f32 %v2223, %v2577
    %v2582 = vmul.f32 %v2224, %v2577
    %s2583 = scalar_lea.vmem [#allocation7], 272
    %v2584 = vld [vmem:[%s2583] sm:$0xff]
    %v2585 = vld [vmem:[%s2583 + $0x8] sm:$0xff]
    %2590 = vrot.lane.b32.xlu0 %v2579, 119
    %v2591 = vpop.permute.xlu0 %2590
    %2592 = vrot.lane.b32.xlu0 %v2580, 119
    %v2593 = vpop.permute.xlu0 %2592
    %2594 = vrot.lane.b32.xlu0 %v2581, 119
    %v2595 = vpop.permute.xlu0 %2594
    %2596 = vrot.lane.b32.xlu0 %v2582, 119
    %v2597 = vpop.permute.xlu0 %2596
    %v2598 = vsel %vm1518, %v2591, %v2593
    %v2599 = vsel %vm1518, %v2595, %v2597
    %v2603 = vsel %vm634, %v2584, 0
    %v2606 = vsel %vm634, %v2585, 0
    %2608 = vmatprep.subr.mxu0 0.0
    %2609 = vmatpush1.msra.mxu0 %v2598
    %2610 = vmatprep.subr.mxu0 0.0
    %2611 = vmatpush1.msra.mxu0 %v2599
    %2612 = vmatprep.subr.mxu0 0.0
    %2613 = vmatpush1.msra.mxu0 0.0
    %2614 = vmatprep.subr.mxu0 0.0
    %2615 = vmatpush1.msra.mxu0 0.0
    %2616 = vmatprep.subr.mxu0 0.0
    %2617 = vmatpush1.msra.mxu0 0.0
    %2618 = vmatprep.subr.mxu0 0.0
    %2619 = vmatpush1.msra.mxu0 0.0
    %2620 = vmatprep.subr.mxu0 0.0
    %2621 = vmatpush1.msra.mxu0 0.0
    %2622 = vmatprep.subr.mxu0 0.0
    %2623 = vmatpush1.msra.mxu0 0.0
    %2624 = vmatprep.subr.mxu0 0.0
    %2625 = vmatpush1.msra.mxu0 0.0
    %2626 = vmatprep.subr.mxu0 0.0
    %2627 = vmatpush1.msra.mxu0 0.0
    %2628 = vmatprep.subr.mxu0 0.0
    %2629 = vmatpush1.msra.mxu0 0.0
    %2630 = vmatprep.subr.mxu0 0.0
    %2631 = vmatpush1.msra.mxu0 0.0
    %2632 = vmatprep.subr.mxu0 0.0
    %2633 = vmatpush1.msra.mxu0 0.0
    %2634 = vmatprep.subr.mxu0 0.0
    %2635 = vmatpush1.msra.mxu0 0.0
    %2636 = vmatprep.subr.mxu0 0.0
    %2637 = vmatpush1.msra.mxu0 0.0
    %2638 = vmatprep.subr.mxu0 0.0
    %2639 = vmatpush1.msra.mxu0 0.0
    %2640 = vmatprep.subr.mxu0 0.0
    %2641 = vmatpush1.msra.mxu0 0.0
    %2642 = vmatprep.subr.mxu0 0.0
    %2643 = vmatpush1.msra.mxu0 0.0
    %2644 = vmatprep.subr.mxu0 0.0
    %2645 = vmatpush1.msra.mxu0 0.0
    %2646 = vmatprep.subr.mxu0 0.0
    %2647 = vmatpush1.msra.mxu0 0.0
    %2648 = vmatprep.subr.mxu0 0.0
    %2649 = vmatpush1.msra.mxu0 0.0
    %2650 = vmatprep.subr.mxu0 0.0
    %2651 = vmatpush1.msra.mxu0 0.0
    %2652 = vmatprep.subr.mxu0 0.0
    %2653 = vmatpush1.msra.mxu0 0.0
    %2654 = vmatprep.subr.mxu0 0.0
    %2655 = vmatpush1.msra.mxu0 0.0
    %2656 = vmatprep.subr.mxu0 0.0
    %2657 = vmatpush1.msra.mxu0 0.0
    %2658 = vmatprep.subr.mxu0 0.0
    %2659 = vmatpush1.msra.mxu0 0.0
    %2660 = vmatprep.subr.mxu0 0.0
    %2661 = vmatpush1.msra.mxu0 0.0
    %2662 = vmatprep.subr.mxu0 0.0
    %2663 = vmatpush1.msra.mxu0 0.0
    %2664 = vmatprep.subr.mxu0 0.0
    %2665 = vmatpush1.msra.mxu0 0.0
    %2666 = vmatprep.subr.mxu0 0.0
    %2667 = vmatpush1.msra.mxu0 0.0
    %2668 = vmatprep.subr.mxu0 0.0
    %2669 = vmatpush1.msra.mxu0 0.0
    %2670 = vmatprep.subr.mxu0 0.0
    %2671 = vmatpush1.msra.mxu0 0.0
    %2672 = vmatprep.mubr.f32.mxu0 0.0
    %2673 = vmatmul.mubr.f32.gmra.mrb[0].mxu0 %v2603
    %v2674 = vpop.f32.mrb[0].mxu0
    %v2675 = vadd.f32 0.0, %v2674
    %v2676 = vpop.f32.mrb[0].mxu0
    %2677 = vmatprep.mubr.f32.mxu0 0.0
    %2678 = vmatmul.mubr.f32.gmra.mrb[0].mxu0 %v2606
    %v2679 = vpop.f32.mrb[0].mxu0
    %v2680 = vadd.f32 0.0, %v2679
    %v2681 = vpop.f32.mrb[0].mxu0
    %2682 = vdwg.mxu0
    %v2683 = vadd.f32 %v2568, %v2675
    %v2684 = vadd.f32 %v2569, %v2680
    %s2685 = scalar_lea.vmem %s4, 16
    %v2686 = vld [vmem:[%s2685] sm:$0xff]
    %v2687 = vld [vmem:[%s2685 + $0x8] sm:$0xff]
    %2689 = vset.pattern.permute.xlu0 0
    %2690 = vperm.xlu0 %2689, %v2686
    %v2691 = vpop.permute.xlu0 %2690
    %2694 = vset.pattern.permute.xlu0 0
    %2695 = vperm.xlu0 %2694, %v2687
    %v2696 = vpop.permute.xlu0 %2695
    %v2698 = vadd.f32 %v2683, %v2691
    %v2699 = vadd.f32 %v2684, %v2696
    %2700 = vadd.xlane.f32.xlu0 %v2698
    %v2701 = vpop.xlane.xlu0 %2700
    %2702 = vadd.xlane.f32.xlu0 %v2699
    %v2703 = vpop.xlane.xlu0 %2702
    %v2704 = vmul.f32 %v2701, %v1624
    %v2705 = vmul.f32 %v2703, %v1624
    %v2706 = vsub.f32 %v2698, %v2704
    %v2707 = vsub.f32 %v2699, %v2705
    %v2708 = vmul.f32 %v2706, %v2706
    %v2709 = vmul.f32 %v2707, %v2707
    %2710 = vadd.xlane.f32.xlu0 %v2708
    %v2711 = vpop.xlane.xlu0 %2710
    %2712 = vadd.xlane.f32.xlu0 %v2709
    %v2713 = vpop.xlane.xlu0 %2712
    %v2714 = vmul.f32 %v2711, %v1624
    %v2715 = vmul.f32 %v2713, %v1624
    %v2716 = vadd.f32 %v2714, 1e-05
    %v2717 = vadd.f32 %v2715, 1e-05
    %v2718 = vrsqrt.pop %v2716
    %v2719 = vrsqrt.pop %v2717
    %v2720 = vmul.f32 %v2706, %v2718
    %v2721 = vmul.f32 %v2707, %v2719
    %s2722 = scalar_lea.vmem %s5, 16
    %v2723 = vld [vmem:[%s2722] sm:$0xff]
    %v2724 = vld [vmem:[%s2722 + $0x8] sm:$0xff]
    %2726 = vset.pattern.permute.xlu0 0
    %2727 = vperm.xlu0 %2726, %v2723
    %v2728 = vpop.permute.xlu0 %2727
    %2731 = vset.pattern.permute.xlu0 0
    %2732 = vperm.xlu0 %2731, %v2724
    %v2733 = vpop.permute.xlu0 %2732
    %v2735 = vmul.f32 %v2720, %v2728
    %v2736 = vmul.f32 %v2721, %v2733
    %s2737 = scalar_lea.vmem %s6, 16
    %v2738 = vld [vmem:[%s2737] sm:$0xff]
    %v2739 = vld [vmem:[%s2737 + $0x8] sm:$0xff]
    %2741 = vset.pattern.permute.xlu0 0
    %2742 = vperm.xlu0 %2741, %v2738
    %v2743 = vpop.permute.xlu0 %2742
    %2746 = vset.pattern.permute.xlu0 0
    %2747 = vperm.xlu0 %2746, %v2739
    %v2748 = vpop.permute.xlu0 %2747
    %v2750 = vadd.f32 %v2735, %v2743
    %v2751 = vadd.f32 %v2736, %v2748
    %v2752 = vmax.f32 %v2750, 0.0
    %v2753 = vmax.f32 %v2751, 0.0
    %2754 = vst [vmem:[#allocation2 + $0x8] sm:$0xff] %v2752
    %2755 = vst [vmem:[#allocation2 + $0x20] sm:$0xff] %v2753
    %v2756 = vld [vmem:[#allocation2] sm:$0xff]
    %v2757 = vld [vmem:[#allocation2 + $0x8] sm:$0xff]
    %v2758 = vld [vmem:[#allocation2 + $0x18] sm:$0xff]
    %v2759 = vld [vmem:[#allocation2 + $0x20] sm:$0xff]
    %v2760 = vld [vmem:[%s9] sm:$0x1]
    %v2762 = vlaneseq
    %v2763 = vshrl.u32 %v2762, 7
    %v2764 = vsub.s32 0, %v2763
    %v2765 = vrot.slane %v2760, %v2764
    %2766 = vrot.lane.b32.xlu0 %v2765, 119
    %v2767 = vpop.permute.xlu0 %2766
    %v2769 = vmul.f32 %v2756, %v2767
    %v2770 = vmul.f32 %v2757, %v2767
    %v2771 = vmul.f32 %v2758, %v2767
    %v2772 = vmul.f32 %v2759, %v2767
    %v2773 = vld [vmem:[%s7] sm:$0xf]
    %v2774 = vld [vmem:[%s600] sm:$0x1]
    %v2776 = vlaneseq
    %v2777 = vshrl.u32 %v2776, 7
    %v2778 = vsub.s32 0, %v2777
    %v2779 = vrot.slane %v2774, %v2778
    %2780 = vrot.lane.b32.xlu0 %v2779, 120
    %v2781 = vpop.permute.xlu0 %2780
    %v2783 = vmul.f32 %v2756, %v2781
    %v2784 = vmul.f32 %v2757, %v2781
    %v2785 = vmul.f32 %v2758, %v2781
    %v2786 = vmul.f32 %v2759, %v2781
    %s2787 = scalar_lea.vmem %s7, 4
    %v2788 = vld [vmem:[%s2787] sm:$0xf]
    %2793 = vrot.lane.b32.xlu0 %v2783, 8
    %v2794 = vpop.permute.xlu0 %2793
    %2795 = vrot.lane.b32.xlu0 %v2784, 8
    %v2796 = vpop.permute.xlu0 %2795
    %2797 = vrot.lane.b32.xlu0 %v2785, 8
    %v2798 = vpop.permute.xlu0 %2797
    %2799 = vrot.lane.b32.xlu0 %v2786, 8
    %v2800 = vpop.permute.xlu0 %2799
    %v2801 = vsel %vm629, %v2794, %v2796
    %v2802 = vsel %vm629, %v2798, %v2800
    %v2806 = vsel %vm634, %v2788, 0
    %2808 = vmatprep.subr.mxu0 0.0
    %2809 = vmatpush1.msra.mxu0 %v2801
    %2810 = vmatprep.subr.mxu0 0.0
    %2811 = vmatpush1.msra.mxu0 %v2802
    %2812 = vmatprep.subr.mxu0 0.0
    %2813 = vmatpush1.msra.mxu0 0.0
    %2814 = vmatprep.subr.mxu0 0.0
    %2815 = vmatpush1.msra.mxu0 0.0
    %2816 = vmatprep.subr.mxu0 0.0
    %2817 = vmatpush1.msra.mxu0 0.0
    %2818 = vmatprep.subr.mxu0 0.0
    %2819 = vmatpush1.msra.mxu0 0.0
    %2820 = vmatprep.subr.mxu0 0.0
    %2821 = vmatpush1.msra.mxu0 0.0
    %2822 = vmatprep.subr.mxu0 0.0
    %2823 = vmatpush1.msra.mxu0 0.0
    %2824 = vmatprep.subr.mxu0 0.0
    %2825 = vmatpush1.msra.mxu0 0.0
    %2826 = vmatprep.subr.mxu0 0.0
    %2827 = vmatpush1.msra.mxu0 0.0
    %2828 = vmatprep.subr.mxu0 0.0
    %2829 = vmatpush1.msra.mxu0 0.0
    %2830 = vmatprep.subr.mxu0 0.0
    %2831 = vmatpush1.msra.mxu0 0.0
    %2832 = vmatprep.subr.mxu0 0.0
    %2833 = vmatpush1.msra.mxu0 0.0
    %2834 = vmatprep.subr.mxu0 0.0
    %2835 = vmatpush1.msra.mxu0 0.0
    %2836 = vmatprep.subr.mxu0 0.0
    %2837 = vmatpush1.msra.mxu0 0.0
    %2838 = vmatprep.subr.mxu0 0.0
    %2839 = vmatpush1.msra.mxu0 0.0
    %2840 = vmatprep.subr.mxu0 0.0
    %2841 = vmatpush1.msra.mxu0 0.0
    %2842 = vmatprep.subr.mxu0 0.0
    %2843 = vmatpush1.msra.mxu0 0.0
    %2844 = vmatprep.subr.mxu0 0.0
    %2845 = vmatpush1.msra.mxu0 0.0
    %2846 = vmatprep.subr.mxu0 0.0
    %2847 = vmatpush1.msra.mxu0 0.0
    %2848 = vmatprep.subr.mxu0 0.0
    %2849 = vmatpush1.msra.mxu0 0.0
    %2850 = vmatprep.subr.mxu0 0.0
    %2851 = vmatpush1.msra.mxu0 0.0
    %2852 = vmatprep.subr.mxu0 0.0
    %2853 = vmatpush1.msra.mxu0 0.0
    %2854 = vmatprep.subr.mxu0 0.0
    %2855 = vmatpush1.msra.mxu0 0.0
    %2856 = vmatprep.subr.mxu0 0.0
    %2857 = vmatpush1.msra.mxu0 0.0
    %2858 = vmatprep.subr.mxu0 0.0
    %2859 = vmatpush1.msra.mxu0 0.0
    %2860 = vmatprep.subr.mxu0 0.0
    %2861 = vmatpush1.msra.mxu0 0.0
    %2862 = vmatprep.subr.mxu0 0.0
    %2863 = vmatpush1.msra.mxu0 0.0
    %2864 = vmatprep.subr.mxu0 0.0
    %2865 = vmatpush1.msra.mxu0 0.0
    %2866 = vmatprep.subr.mxu0 0.0
    %2867 = vmatpush1.msra.mxu0 0.0
    %2868 = vmatprep.subr.mxu0 0.0
    %2869 = vmatpush1.msra.mxu0 0.0
    %2870 = vmatprep.subr.mxu0 0.0
    %2871 = vmatpush1.msra.mxu0 0.0
    %2872 = vmatprep.mubr.f32.mxu0 0.0
    %2873 = vmatmul.mubr.f32.gmra.mrb[0].mxu0 %v2806
    %v2874 = vpop.f32.mrb[0].mxu0
    %v2875 = vadd.f32 0.0, %v2874
    %v2876 = vpop.f32.mrb[0].mxu0
    %2877 = vdwg.mxu0
    %2882 = vrot.lane.b32.xlu0 %v2769, 9
    %v2883 = vpop.permute.xlu0 %2882
    %2884 = vrot.lane.b32.xlu0 %v2770, 9
    %v2885 = vpop.permute.xlu0 %2884
    %2886 = vrot.lane.b32.xlu0 %v2771, 9
    %v2887 = vpop.permute.xlu0 %2886
    %2888 = vrot.lane.b32.xlu0 %v2772, 9
    %v2889 = vpop.permute.xlu0 %2888
    %v2890 = vsel %vm728, %v2883, %v2885
    %v2891 = vsel %vm728, %v2887, %v2889
    %v2895 = vsel %vm634, %v2773, 0
    %2897 = vmatprep.subr.mxu0 0.0
    %2898 = vmatpush1.msra.mxu0 %v2890
    %2899 = vmatprep.subr.mxu0 0.0
    %2900 = vmatpush1.msra.mxu0 %v2891
    %2901 = vmatprep.subr.mxu0 0.0
    %2902 = vmatpush1.msra.mxu0 0.0
    %2903 = vmatprep.subr.mxu0 0.0
    %2904 = vmatpush1.msra.mxu0 0.0
    %2905 = vmatprep.subr.mxu0 0.0
    %2906 = vmatpush1.msra.mxu0 0.0
    %2907 = vmatprep.subr.mxu0 0.0
    %2908 = vmatpush1.msra.mxu0 0.0
    %2909 = vmatprep.subr.mxu0 0.0
    %2910 = vmatpush1.msra.mxu0 0.0
    %2911 = vmatprep.subr.mxu0 0.0
    %2912 = vmatpush1.msra.mxu0 0.0
    %2913 = vmatprep.subr.mxu0 0.0
    %2914 = vmatpush1.msra.mxu0 0.0
    %2915 = vmatprep.subr.mxu0 0.0
    %2916 = vmatpush1.msra.mxu0 0.0
    %2917 = vmatprep.subr.mxu0 0.0
    %2918 = vmatpush1.msra.mxu0 0.0
    %2919 = vmatprep.subr.mxu0 0.0
    %2920 = vmatpush1.msra.mxu0 0.0
    %2921 = vmatprep.subr.mxu0 0.0
    %2922 = vmatpush1.msra.mxu0 0.0
    %2923 = vmatprep.subr.mxu0 0.0
    %2924 = vmatpush1.msra.mxu0 0.0
    %2925 = vmatprep.subr.mxu0 0.0
    %2926 = vmatpush1.msra.mxu0 0.0
    %2927 = vmatprep.subr.mxu0 0.0
    %2928 = vmatpush1.msra.mxu0 0.0
    %2929 = vmatprep.subr.mxu0 0.0
    %2930 = vmatpush1.msra.mxu0 0.0
    %2931 = vmatprep.subr.mxu0 0.0
    %2932 = vmatpush1.msra.mxu0 0.0
    %2933 = vmatprep.subr.mxu0 0.0
    %2934 = vmatpush1.msra.mxu0 0.0
    %2935 = vmatprep.subr.mxu0 0.0
    %2936 = vmatpush1.msra.mxu0 0.0
    %2937 = vmatprep.subr.mxu0 0.0
    %2938 = vmatpush1.msra.mxu0 0.0
    %2939 = vmatprep.subr.mxu0 0.0
    %2940 = vmatpush1.msra.mxu0 0.0
    %2941 = vmatprep.subr.mxu0 0.0
    %2942 = vmatpush1.msra.mxu0 0.0
    %2943 = vmatprep.subr.mxu0 0.0
    %2944 = vmatpush1.msra.mxu0 0.0
    %2945 = vmatprep.subr.mxu0 0.0
    %2946 = vmatpush1.msra.mxu0 0.0
    %2947 = vmatprep.subr.mxu0 0.0
    %2948 = vmatpush1.msra.mxu0 0.0
    %2949 = vmatprep.subr.mxu0 0.0
    %2950 = vmatpush1.msra.mxu0 0.0
    %2951 = vmatprep.subr.mxu0 0.0
    %2952 = vmatpush1.msra.mxu0 0.0
    %2953 = vmatprep.subr.mxu0 0.0
    %2954 = vmatpush1.msra.mxu0 0.0
    %2955 = vmatprep.subr.mxu0 0.0
    %2956 = vmatpush1.msra.mxu0 0.0
    %2957 = vmatprep.subr.mxu0 0.0
    %2958 = vmatpush1.msra.mxu0 0.0
    %2959 = vmatprep.subr.mxu0 0.0
    %2960 = vmatpush1.msra.mxu0 0.0
    %2961 = vmatprep.mubr.f32.mxu0 0.0
    %2962 = vmatmul.mubr.f32.gmra.mrb[0].mxu0 %v2895
    %v2963 = vpop.f32.mrb[0].mxu0
    %v2964 = vadd.f32 %v2875, %v2963
    %v2965 = vpop.f32.mrb[0].mxu0
    %2966 = vdwg.mxu0
    %v2967 = vld [vmem:[%s814] sm:$0x1]
    %v2969 = vlaneseq
    %v2970 = vshrl.u32 %v2969, 7
    %v2971 = vsub.s32 0, %v2970
    %v2972 = vrot.slane %v2967, %v2971
    %2973 = vrot.lane.b32.xlu0 %v2972, 121
    %v2974 = vpop.permute.xlu0 %2973
    %v2976 = vmul.f32 %v2756, %v2974
    %v2977 = vmul.f32 %v2757, %v2974
    %v2978 = vmul.f32 %v2758, %v2974
    %v2979 = vmul.f32 %v2759, %v2974
    %s2980 = scalar_lea.vmem %s7, 8
    %v2981 = vld [vmem:[%s2980] sm:$0xf]
    %2986 = vrot.lane.b32.xlu0 %v2976, 7
    %v2987 = vpop.permute.xlu0 %2986
    %2988 = vrot.lane.b32.xlu0 %v2977, 7
    %v2989 = vpop.permute.xlu0 %2988
    %2990 = vrot.lane.b32.xlu0 %v2978, 7
    %v2991 = vpop.permute.xlu0 %2990
    %2992 = vrot.lane.b32.xlu0 %v2979, 7
    %v2993 = vpop.permute.xlu0 %2992
    %v2994 = vsel %vm843, %v2987, %v2989
    %v2995 = vsel %vm843, %v2991, %v2993
    %v2999 = vsel %vm634, %v2981, 0
    %3001 = vmatprep.subr.mxu0 0.0
    %3002 = vmatpush1.msra.mxu0 %v2994
    %3003 = vmatprep.subr.mxu0 0.0
    %3004 = vmatpush1.msra.mxu0 %v2995
    %3005 = vmatprep.subr.mxu0 0.0
    %3006 = vmatpush1.msra.mxu0 0.0
    %3007 = vmatprep.subr.mxu0 0.0
    %3008 = vmatpush1.msra.mxu0 0.0
    %3009 = vmatprep.subr.mxu0 0.0
    %3010 = vmatpush1.msra.mxu0 0.0
    %3011 = vmatprep.subr.mxu0 0.0
    %3012 = vmatpush1.msra.mxu0 0.0
    %3013 = vmatprep.subr.mxu0 0.0
    %3014 = vmatpush1.msra.mxu0 0.0
    %3015 = vmatprep.subr.mxu0 0.0
    %3016 = vmatpush1.msra.mxu0 0.0
    %3017 = vmatprep.subr.mxu0 0.0
    %3018 = vmatpush1.msra.mxu0 0.0
    %3019 = vmatprep.subr.mxu0 0.0
    %3020 = vmatpush1.msra.mxu0 0.0
    %3021 = vmatprep.subr.mxu0 0.0
    %3022 = vmatpush1.msra.mxu0 0.0
    %3023 = vmatprep.subr.mxu0 0.0
    %3024 = vmatpush1.msra.mxu0 0.0
    %3025 = vmatprep.subr.mxu0 0.0
    %3026 = vmatpush1.msra.mxu0 0.0
    %3027 = vmatprep.subr.mxu0 0.0
    %3028 = vmatpush1.msra.mxu0 0.0
    %3029 = vmatprep.subr.mxu0 0.0
    %3030 = vmatpush1.msra.mxu0 0.0
    %3031 = vmatprep.subr.mxu0 0.0
    %3032 = vmatpush1.msra.mxu0 0.0
    %3033 = vmatprep.subr.mxu0 0.0
    %3034 = vmatpush1.msra.mxu0 0.0
    %3035 = vmatprep.subr.mxu0 0.0
    %3036 = vmatpush1.msra.mxu0 0.0
    %3037 = vmatprep.subr.mxu0 0.0
    %3038 = vmatpush1.msra.mxu0 0.0
    %3039 = vmatprep.subr.mxu0 0.0
    %3040 = vmatpush1.msra.mxu0 0.0
    %3041 = vmatprep.subr.mxu0 0.0
    %3042 = vmatpush1.msra.mxu0 0.0
    %3043 = vmatprep.subr.mxu0 0.0
    %3044 = vmatpush1.msra.mxu0 0.0
    %3045 = vmatprep.subr.mxu0 0.0
    %3046 = vmatpush1.msra.mxu0 0.0
    %3047 = vmatprep.subr.mxu0 0.0
    %3048 = vmatpush1.msra.mxu0 0.0
    %3049 = vmatprep.subr.mxu0 0.0
    %3050 = vmatpush1.msra.mxu0 0.0
    %3051 = vmatprep.subr.mxu0 0.0
    %3052 = vmatpush1.msra.mxu0 0.0
    %3053 = vmatprep.subr.mxu0 0.0
    %3054 = vmatpush1.msra.mxu0 0.0
    %3055 = vmatprep.subr.mxu0 0.0
    %3056 = vmatpush1.msra.mxu0 0.0
    %3057 = vmatprep.subr.mxu0 0.0
    %3058 = vmatpush1.msra.mxu0 0.0
    %3059 = vmatprep.subr.mxu0 0.0
    %3060 = vmatpush1.msra.mxu0 0.0
    %3061 = vmatprep.subr.mxu0 0.0
    %3062 = vmatpush1.msra.mxu0 0.0
    %3063 = vmatprep.subr.mxu0 0.0
    %3064 = vmatpush1.msra.mxu0 0.0
    %3065 = vmatprep.mubr.f32.mxu0 0.0
    %3066 = vmatmul.mubr.f32.gmra.mrb[0].mxu0 %v2999
    %v3067 = vpop.f32.mrb[0].mxu0
    %v3068 = vadd.f32 0.0, %v3067
    %v3069 = vpop.f32.mrb[0].mxu0
    %3070 = vdwg.mxu0
    %v3071 = vadd.f32 %v2964, %v3068
    %v3072 = vld [vmem:[%s931] sm:$0x1]
    %v3074 = vlaneseq
    %v3075 = vshrl.u32 %v3074, 7
    %v3076 = vsub.s32 0, %v3075
    %v3077 = vrot.slane %v3072, %v3076
    %3078 = vrot.lane.b32.xlu0 %v3077, 127
    %v3079 = vpop.permute.xlu0 %3078
    %v3081 = vmul.f32 %v2756, %v3079
    %v3082 = vmul.f32 %v2757, %v3079
    %v3083 = vmul.f32 %v2758, %v3079
    %v3084 = vmul.f32 %v2759, %v3079
    %s3085 = scalar_lea.vmem %s7, 12
    %v3086 = vld [vmem:[%s3085] sm:$0xf]
    %3091 = vrot.lane.b32.xlu0 %v3081, 1
    %v3092 = vpop.permute.xlu0 %3091
    %3093 = vrot.lane.b32.xlu0 %v3082, 1
    %v3094 = vpop.permute.xlu0 %3093
    %3095 = vrot.lane.b32.xlu0 %v3083, 1
    %v3096 = vpop.permute.xlu0 %3095
    %3097 = vrot.lane.b32.xlu0 %v3084, 1
    %v3098 = vpop.permute.xlu0 %3097
    %v3099 = vsel %vm960, %v3092, %v3094
    %v3100 = vsel %vm960, %v3096, %v3098
    %v3104 = vsel %vm634, %v3086, 0
    %3106 = vmatprep.subr.mxu0 0.0
    %3107 = vmatpush1.msra.mxu0 %v3099
    %3108 = vmatprep.subr.mxu0 0.0
    %3109 = vmatpush1.msra.mxu0 %v3100
    %3110 = vmatprep.subr.mxu0 0.0
    %3111 = vmatpush1.msra.mxu0 0.0
    %3112 = vmatprep.subr.mxu0 0.0
    %3113 = vmatpush1.msra.mxu0 0.0
    %3114 = vmatprep.subr.mxu0 0.0
    %3115 = vmatpush1.msra.mxu0 0.0
    %3116 = vmatprep.subr.mxu0 0.0
    %3117 = vmatpush1.msra.mxu0 0.0
    %3118 = vmatprep.subr.mxu0 0.0
    %3119 = vmatpush1.msra.mxu0 0.0
    %3120 = vmatprep.subr.mxu0 0.0
    %3121 = vmatpush1.msra.mxu0 0.0
    %3122 = vmatprep.subr.mxu0 0.0
    %3123 = vmatpush1.msra.mxu0 0.0
    %3124 = vmatprep.subr.mxu0 0.0
    %3125 = vmatpush1.msra.mxu0 0.0
    %3126 = vmatprep.subr.mxu0 0.0
    %3127 = vmatpush1.msra.mxu0 0.0
    %3128 = vmatprep.subr.mxu0 0.0
    %3129 = vmatpush1.msra.mxu0 0.0
    %3130 = vmatprep.subr.mxu0 0.0
    %3131 = vmatpush1.msra.mxu0 0.0
    %3132 = vmatprep.subr.mxu0 0.0
    %3133 = vmatpush1.msra.mxu0 0.0
    %3134 = vmatprep.subr.mxu0 0.0
    %3135 = vmatpush1.msra.mxu0 0.0
    %3136 = vmatprep.subr.mxu0 0.0
    %3137 = vmatpush1.msra.mxu0 0.0
    %3138 = vmatprep.subr.mxu0 0.0
    %3139 = vmatpush1.msra.mxu0 0.0
    %3140 = vmatprep.subr.mxu0 0.0
    %3141 = vmatpush1.msra.mxu0 0.0
    %3142 = vmatprep.subr.mxu0 0.0
    %3143 = vmatpush1.msra.mxu0 0.0
    %3144 = vmatprep.subr.mxu0 0.0
    %3145 = vmatpush1.msra.mxu0 0.0
    %3146 = vmatprep.subr.mxu0 0.0
    %3147 = vmatpush1.msra.mxu0 0.0
    %3148 = vmatprep.subr.mxu0 0.0
    %3149 = vmatpush1.msra.mxu0 0.0
    %3150 = vmatprep.subr.mxu0 0.0
    %3151 = vmatpush1.msra.mxu0 0.0
    %3152 = vmatprep.subr.mxu0 0.0
    %3153 = vmatpush1.msra.mxu0 0.0
    %3154 = vmatprep.subr.mxu0 0.0
    %3155 = vmatpush1.msra.mxu0 0.0
    %3156 = vmatprep.subr.mxu0 0.0
    %3157 = vmatpush1.msra.mxu0 0.0
    %3158 = vmatprep.subr.mxu0 0.0
    %3159 = vmatpush1.msra.mxu0 0.0
    %3160 = vmatprep.subr.mxu0 0.0
    %3161 = vmatpush1.msra.mxu0 0.0
    %3162 = vmatprep.subr.mxu0 0.0
    %3163 = vmatpush1.msra.mxu0 0.0
    %3164 = vmatprep.subr.mxu0 0.0
    %3165 = vmatpush1.msra.mxu0 0.0
    %3166 = vmatprep.subr.mxu0 0.0
    %3167 = vmatpush1.msra.mxu0 0.0
    %3168 = vmatprep.subr.mxu0 0.0
    %3169 = vmatpush1.msra.mxu0 0.0
    %3170 = vmatprep.mubr.f32.mxu0 0.0
    %3171 = vmatmul.mubr.f32.gmra.mrb[0].mxu0 %v3104
    %v3172 = vpop.f32.mrb[0].mxu0
    %v3173 = vadd.f32 0.0, %v3172
    %v3174 = vpop.f32.mrb[0].mxu0
    %3175 = vdwg.mxu0
    %v3176 = vadd.f32 %v3071, %v3173
    %s3177 = scalar_lea.vmem %s7, 16
    %v3178 = vld [vmem:[%s3177] sm:$0xf]
    %v3180 = vsel %vm634, %v3178, 0
    %3182 = vmatprep.subr.mxu0 0.0
    %3183 = vmatpush1.msra.mxu0 %v2757
    %3184 = vmatprep.subr.mxu0 0.0
    %3185 = vmatpush1.msra.mxu0 %v2759
    %3186 = vmatprep.subr.mxu0 0.0
    %3187 = vmatpush1.msra.mxu0 0.0
    %3188 = vmatprep.subr.mxu0 0.0
    %3189 = vmatpush1.msra.mxu0 0.0
    %3190 = vmatprep.subr.mxu0 0.0
    %3191 = vmatpush1.msra.mxu0 0.0
    %3192 = vmatprep.subr.mxu0 0.0
    %3193 = vmatpush1.msra.mxu0 0.0
    %3194 = vmatprep.subr.mxu0 0.0
    %3195 = vmatpush1.msra.mxu0 0.0
    %3196 = vmatprep.subr.mxu0 0.0
    %3197 = vmatpush1.msra.mxu0 0.0
    %3198 = vmatprep.subr.mxu0 0.0
    %3199 = vmatpush1.msra.mxu0 0.0
    %3200 = vmatprep.subr.mxu0 0.0
    %3201 = vmatpush1.msra.mxu0 0.0
    %3202 = vmatprep.subr.mxu0 0.0
    %3203 = vmatpush1.msra.mxu0 0.0
    %3204 = vmatprep.subr.mxu0 0.0
    %3205 = vmatpush1.msra.mxu0 0.0
    %3206 = vmatprep.subr.mxu0 0.0
    %3207 = vmatpush1.msra.mxu0 0.0
    %3208 = vmatprep.subr.mxu0 0.0
    %3209 = vmatpush1.msra.mxu0 0.0
    %3210 = vmatprep.subr.mxu0 0.0
    %3211 = vmatpush1.msra.mxu0 0.0
    %3212 = vmatprep.subr.mxu0 0.0
    %3213 = vmatpush1.msra.mxu0 0.0
    %3214 = vmatprep.subr.mxu0 0.0
    %3215 = vmatpush1.msra.mxu0 0.0
    %3216 = vmatprep.subr.mxu0 0.0
    %3217 = vmatpush1.msra.mxu0 0.0
    %3218 = vmatprep.subr.mxu0 0.0
    %3219 = vmatpush1.msra.mxu0 0.0
    %3220 = vmatprep.subr.mxu0 0.0
    %3221 = vmatpush1.msra.mxu0 0.0
    %3222 = vmatprep.subr.mxu0 0.0
    %3223 = vmatpush1.msra.mxu0 0.0
    %3224 = vmatprep.subr.mxu0 0.0
    %3225 = vmatpush1.msra.mxu0 0.0
    %3226 = vmatprep.subr.mxu0 0.0
    %3227 = vmatpush1.msra.mxu0 0.0
    %3228 = vmatprep.subr.mxu0 0.0
    %3229 = vmatpush1.msra.mxu0 0.0
    %3230 = vmatprep.subr.mxu0 0.0
    %3231 = vmatpush1.msra.mxu0 0.0
    %3232 = vmatprep.subr.mxu0 0.0
    %3233 = vmatpush1.msra.mxu0 0.0
    %3234 = vmatprep.subr.mxu0 0.0
    %3235 = vmatpush1.msra.mxu0 0.0
    %3236 = vmatprep.subr.mxu0 0.0
    %3237 = vmatpush1.msra.mxu0 0.0
    %3238 = vmatprep.subr.mxu0 0.0
    %3239 = vmatpush1.msra.mxu0 0.0
    %3240 = vmatprep.subr.mxu0 0.0
    %3241 = vmatpush1.msra.mxu0 0.0
    %3242 = vmatprep.subr.mxu0 0.0
    %3243 = vmatpush1.msra.mxu0 0.0
    %3244 = vmatprep.subr.mxu0 0.0
    %3245 = vmatpush1.msra.mxu0 0.0
    %3246 = vmatprep.mubr.f32.mxu0 0.0
    %3247 = vmatmul.mubr.f32.gmra.mrb[0].mxu0 %v3180
    %v3248 = vpop.f32.mrb[0].mxu0
    %v3249 = vadd.f32 0.0, %v3248
    %v3250 = vpop.f32.mrb[0].mxu0
    %3251 = vdwg.mxu0
    %v3252 = vadd.f32 %v3176, %v3249
    %v3253 = vld [vmem:[#allocation2 + $0x8] sm:$0xff]
    %v3254 = vld [vmem:[#allocation2 + $0x10] sm:$0xff]
    %v3255 = vld [vmem:[#allocation2 + $0x20] sm:$0xff]
    %v3256 = vld [vmem:[#allocation2 + $0x28] sm:$0xff]
    %v3257 = vld [vmem:[%s1138] sm:$0x1]
    %v3259 = vlaneseq
    %v3260 = vshrl.u32 %v3259, 7
    %v3261 = vsub.s32 0, %v3260
    %v3262 = vrot.slane %v3257, %v3261
    %3263 = vrot.lane.b32.xlu0 %v3262, 1
    %v3264 = vpop.permute.xlu0 %3263
    %v3266 = vmul.f32 %v3253, %v3264
    %v3267 = vmul.f32 %v3254, %v3264
    %v3268 = vmul.f32 %v3255, %v3264
    %v3269 = vmul.f32 %v3256, %v3264
    %s3270 = scalar_lea.vmem %s7, 20
    %v3271 = vld [vmem:[%s3270] sm:$0xf]
    %3276 = vrot.lane.b32.xlu0 %v3266, 127
    %v3277 = vpop.permute.xlu0 %3276
    %3278 = vrot.lane.b32.xlu0 %v3267, 127
    %v3279 = vpop.permute.xlu0 %3278
    %3280 = vrot.lane.b32.xlu0 %v3268, 127
    %v3281 = vpop.permute.xlu0 %3280
    %3282 = vrot.lane.b32.xlu0 %v3269, 127
    %v3283 = vpop.permute.xlu0 %3282
    %v3284 = vsel %vm1167, %v3277, %v3279
    %v3285 = vsel %vm1167, %v3281, %v3283
    %v3289 = vsel %vm634, %v3271, 0
    %3291 = vmatprep.subr.mxu0 0.0
    %3292 = vmatpush1.msra.mxu0 %v3284
    %3293 = vmatprep.subr.mxu0 0.0
    %3294 = vmatpush1.msra.mxu0 %v3285
    %3295 = vmatprep.subr.mxu0 0.0
    %3296 = vmatpush1.msra.mxu0 0.0
    %3297 = vmatprep.subr.mxu0 0.0
    %3298 = vmatpush1.msra.mxu0 0.0
    %3299 = vmatprep.subr.mxu0 0.0
    %3300 = vmatpush1.msra.mxu0 0.0
    %3301 = vmatprep.subr.mxu0 0.0
    %3302 = vmatpush1.msra.mxu0 0.0
    %3303 = vmatprep.subr.mxu0 0.0
    %3304 = vmatpush1.msra.mxu0 0.0
    %3305 = vmatprep.subr.mxu0 0.0
    %3306 = vmatpush1.msra.mxu0 0.0
    %3307 = vmatprep.subr.mxu0 0.0
    %3308 = vmatpush1.msra.mxu0 0.0
    %3309 = vmatprep.subr.mxu0 0.0
    %3310 = vmatpush1.msra.mxu0 0.0
    %3311 = vmatprep.subr.mxu0 0.0
    %3312 = vmatpush1.msra.mxu0 0.0
    %3313 = vmatprep.subr.mxu0 0.0
    %3314 = vmatpush1.msra.mxu0 0.0
    %3315 = vmatprep.subr.mxu0 0.0
    %3316 = vmatpush1.msra.mxu0 0.0
    %3317 = vmatprep.subr.mxu0 0.0
    %3318 = vmatpush1.msra.mxu0 0.0
    %3319 = vmatprep.subr.mxu0 0.0
    %3320 = vmatpush1.msra.mxu0 0.0
    %3321 = vmatprep.subr.mxu0 0.0
    %3322 = vmatpush1.msra.mxu0 0.0
    %3323 = vmatprep.subr.mxu0 0.0
    %3324 = vmatpush1.msra.mxu0 0.0
    %3325 = vmatprep.subr.mxu0 0.0
    %3326 = vmatpush1.msra.mxu0 0.0
    %3327 = vmatprep.subr.mxu0 0.0
    %3328 = vmatpush1.msra.mxu0 0.0
    %3329 = vmatprep.subr.mxu0 0.0
    %3330 = vmatpush1.msra.mxu0 0.0
    %3331 = vmatprep.subr.mxu0 0.0
    %3332 = vmatpush1.msra.mxu0 0.0
    %3333 = vmatprep.subr.mxu0 0.0
    %3334 = vmatpush1.msra.mxu0 0.0
    %3335 = vmatprep.subr.mxu0 0.0
    %3336 = vmatpush1.msra.mxu0 0.0
    %3337 = vmatprep.subr.mxu0 0.0
    %3338 = vmatpush1.msra.mxu0 0.0
    %3339 = vmatprep.subr.mxu0 0.0
    %3340 = vmatpush1.msra.mxu0 0.0
    %3341 = vmatprep.subr.mxu0 0.0
    %3342 = vmatpush1.msra.mxu0 0.0
    %3343 = vmatprep.subr.mxu0 0.0
    %3344 = vmatpush1.msra.mxu0 0.0
    %3345 = vmatprep.subr.mxu0 0.0
    %3346 = vmatpush1.msra.mxu0 0.0
    %3347 = vmatprep.subr.mxu0 0.0
    %3348 = vmatpush1.msra.mxu0 0.0
    %3349 = vmatprep.subr.mxu0 0.0
    %3350 = vmatpush1.msra.mxu0 0.0
    %3351 = vmatprep.subr.mxu0 0.0
    %3352 = vmatpush1.msra.mxu0 0.0
    %3353 = vmatprep.subr.mxu0 0.0
    %3354 = vmatpush1.msra.mxu0 0.0
    %3355 = vmatprep.mubr.f32.mxu0 0.0
    %3356 = vmatmul.mubr.f32.gmra.mrb[0].mxu0 %v3289
    %v3357 = vpop.f32.mrb[0].mxu0
    %v3358 = vadd.f32 0.0, %v3357
    %v3359 = vpop.f32.mrb[0].mxu0
    %3360 = vdwg.mxu0
    %v3361 = vadd.f32 %v3252, %v3358
    %v3362 = vld [vmem:[%s1255] sm:$0x1]
    %v3364 = vlaneseq
    %v3365 = vshrl.u32 %v3364, 7
    %v3366 = vsub.s32 0, %v3365
    %v3367 = vrot.slane %v3362, %v3366
    %3368 = vrot.lane.b32.xlu0 %v3367, 7
    %v3369 = vpop.permute.xlu0 %3368
    %v3371 = vmul.f32 %v3253, %v3369
    %v3372 = vmul.f32 %v3254, %v3369
    %v3373 = vmul.f32 %v3255, %v3369
    %v3374 = vmul.f32 %v3256, %v3369
    %s3375 = scalar_lea.vmem %s7, 24
    %v3376 = vld [vmem:[%s3375] sm:$0xf]
    %3381 = vrot.lane.b32.xlu0 %v3371, 121
    %v3382 = vpop.permute.xlu0 %3381
    %3383 = vrot.lane.b32.xlu0 %v3372, 121
    %v3384 = vpop.permute.xlu0 %3383
    %3385 = vrot.lane.b32.xlu0 %v3373, 121
    %v3386 = vpop.permute.xlu0 %3385
    %3387 = vrot.lane.b32.xlu0 %v3374, 121
    %v3388 = vpop.permute.xlu0 %3387
    %v3389 = vsel %vm1284, %v3382, %v3384
    %v3390 = vsel %vm1284, %v3386, %v3388
    %v3394 = vsel %vm634, %v3376, 0
    %3396 = vmatprep.subr.mxu0 0.0
    %3397 = vmatpush1.msra.mxu0 %v3389
    %3398 = vmatprep.subr.mxu0 0.0
    %3399 = vmatpush1.msra.mxu0 %v3390
    %3400 = vmatprep.subr.mxu0 0.0
    %3401 = vmatpush1.msra.mxu0 0.0
    %3402 = vmatprep.subr.mxu0 0.0
    %3403 = vmatpush1.msra.mxu0 0.0
    %3404 = vmatprep.subr.mxu0 0.0
    %3405 = vmatpush1.msra.mxu0 0.0
    %3406 = vmatprep.subr.mxu0 0.0
    %3407 = vmatpush1.msra.mxu0 0.0
    %3408 = vmatprep.subr.mxu0 0.0
    %3409 = vmatpush1.msra.mxu0 0.0
    %3410 = vmatprep.subr.mxu0 0.0
    %3411 = vmatpush1.msra.mxu0 0.0
    %3412 = vmatprep.subr.mxu0 0.0
    %3413 = vmatpush1.msra.mxu0 0.0
    %3414 = vmatprep.subr.mxu0 0.0
    %3415 = vmatpush1.msra.mxu0 0.0
    %3416 = vmatprep.subr.mxu0 0.0
    %3417 = vmatpush1.msra.mxu0 0.0
    %3418 = vmatprep.subr.mxu0 0.0
    %3419 = vmatpush1.msra.mxu0 0.0
    %3420 = vmatprep.subr.mxu0 0.0
    %3421 = vmatpush1.msra.mxu0 0.0
    %3422 = vmatprep.subr.mxu0 0.0
    %3423 = vmatpush1.msra.mxu0 0.0
    %3424 = vmatprep.subr.mxu0 0.0
    %3425 = vmatpush1.msra.mxu0 0.0
    %3426 = vmatprep.subr.mxu0 0.0
    %3427 = vmatpush1.msra.mxu0 0.0
    %3428 = vmatprep.subr.mxu0 0.0
    %3429 = vmatpush1.msra.mxu0 0.0
    %3430 = vmatprep.subr.mxu0 0.0
    %3431 = vmatpush1.msra.mxu0 0.0
    %3432 = vmatprep.subr.mxu0 0.0
    %3433 = vmatpush1.msra.mxu0 0.0
    %3434 = vmatprep.subr.mxu0 0.0
    %3435 = vmatpush1.msra.mxu0 0.0
    %3436 = vmatprep.subr.mxu0 0.0
    %3437 = vmatpush1.msra.mxu0 0.0
    %3438 = vmatprep.subr.mxu0 0.0
    %3439 = vmatpush1.msra.mxu0 0.0
    %3440 = vmatprep.subr.mxu0 0.0
    %3441 = vmatpush1.msra.mxu0 0.0
    %3442 = vmatprep.subr.mxu0 0.0
    %3443 = vmatpush1.msra.mxu0 0.0
    %3444 = vmatprep.subr.mxu0 0.0
    %3445 = vmatpush1.msra.mxu0 0.0
    %3446 = vmatprep.subr.mxu0 0.0
    %3447 = vmatpush1.msra.mxu0 0.0
    %3448 = vmatprep.subr.mxu0 0.0
    %3449 = vmatpush1.msra.mxu0 0.0
    %3450 = vmatprep.subr.mxu0 0.0
    %3451 = vmatpush1.msra.mxu0 0.0
    %3452 = vmatprep.subr.mxu0 0.0
    %3453 = vmatpush1.msra.mxu0 0.0
    %3454 = vmatprep.subr.mxu0 0.0
    %3455 = vmatpush1.msra.mxu0 0.0
    %3456 = vmatprep.subr.mxu0 0.0
    %3457 = vmatpush1.msra.mxu0 0.0
    %3458 = vmatprep.subr.mxu0 0.0
    %3459 = vmatpush1.msra.mxu0 0.0
    %3460 = vmatprep.mubr.f32.mxu0 0.0
    %3461 = vmatmul.mubr.f32.gmra.mrb[0].mxu0 %v3394
    %v3462 = vpop.f32.mrb[0].mxu0
    %v3463 = vadd.f32 0.0, %v3462
    %v3464 = vpop.f32.mrb[0].mxu0
    %3465 = vdwg.mxu0
    %v3466 = vadd.f32 %v3361, %v3463
    %v3467 = vld [vmem:[%s1372] sm:$0x1]
    %v3469 = vlaneseq
    %v3470 = vshrl.u32 %v3469, 7
    %v3471 = vsub.s32 0, %v3470
    %v3472 = vrot.slane %v3467, %v3471
    %3473 = vrot.lane.b32.xlu0 %v3472, 8
    %v3474 = vpop.permute.xlu0 %3473
    %v3476 = vmul.f32 %v3253, %v3474
    %v3477 = vmul.f32 %v3254, %v3474
    %v3478 = vmul.f32 %v3255, %v3474
    %v3479 = vmul.f32 %v3256, %v3474
    %s3480 = scalar_lea.vmem %s7, 28
    %v3481 = vld [vmem:[%s3480] sm:$0xf]
    %3486 = vrot.lane.b32.xlu0 %v3476, 120
    %v3487 = vpop.permute.xlu0 %3486
    %3488 = vrot.lane.b32.xlu0 %v3477, 120
    %v3489 = vpop.permute.xlu0 %3488
    %3490 = vrot.lane.b32.xlu0 %v3478, 120
    %v3491 = vpop.permute.xlu0 %3490
    %3492 = vrot.lane.b32.xlu0 %v3479, 120
    %v3493 = vpop.permute.xlu0 %3492
    %v3494 = vsel %vm1401, %v3487, %v3489
    %v3495 = vsel %vm1401, %v3491, %v3493
    %v3499 = vsel %vm634, %v3481, 0
    %3501 = vmatprep.subr.mxu0 0.0
    %3502 = vmatpush1.msra.mxu0 %v3494
    %3503 = vmatprep.subr.mxu0 0.0
    %3504 = vmatpush1.msra.mxu0 %v3495
    %3505 = vmatprep.subr.mxu0 0.0
    %3506 = vmatpush1.msra.mxu0 0.0
    %3507 = vmatprep.subr.mxu0 0.0
    %3508 = vmatpush1.msra.mxu0 0.0
    %3509 = vmatprep.subr.mxu0 0.0
    %3510 = vmatpush1.msra.mxu0 0.0
    %3511 = vmatprep.subr.mxu0 0.0
    %3512 = vmatpush1.msra.mxu0 0.0
    %3513 = vmatprep.subr.mxu0 0.0
    %3514 = vmatpush1.msra.mxu0 0.0
    %3515 = vmatprep.subr.mxu0 0.0
    %3516 = vmatpush1.msra.mxu0 0.0
    %3517 = vmatprep.subr.mxu0 0.0
    %3518 = vmatpush1.msra.mxu0 0.0
    %3519 = vmatprep.subr.mxu0 0.0
    %3520 = vmatpush1.msra.mxu0 0.0
    %3521 = vmatprep.subr.mxu0 0.0
    %3522 = vmatpush1.msra.mxu0 0.0
    %3523 = vmatprep.subr.mxu0 0.0
    %3524 = vmatpush1.msra.mxu0 0.0
    %3525 = vmatprep.subr.mxu0 0.0
    %3526 = vmatpush1.msra.mxu0 0.0
    %3527 = vmatprep.subr.mxu0 0.0
    %3528 = vmatpush1.msra.mxu0 0.0
    %3529 = vmatprep.subr.mxu0 0.0
    %3530 = vmatpush1.msra.mxu0 0.0
    %3531 = vmatprep.subr.mxu0 0.0
    %3532 = vmatpush1.msra.mxu0 0.0
    %3533 = vmatprep.subr.mxu0 0.0
    %3534 = vmatpush1.msra.mxu0 0.0
    %3535 = vmatprep.subr.mxu0 0.0
    %3536 = vmatpush1.msra.mxu0 0.0
    %3537 = vmatprep.subr.mxu0 0.0
    %3538 = vmatpush1.msra.mxu0 0.0
    %3539 = vmatprep.subr.mxu0 0.0
    %3540 = vmatpush1.msra.mxu0 0.0
    %3541 = vmatprep.subr.mxu0 0.0
    %3542 = vmatpush1.msra.mxu0 0.0
    %3543 = vmatprep.subr.mxu0 0.0
    %3544 = vmatpush1.msra.mxu0 0.0
    %3545 = vmatprep.subr.mxu0 0.0
    %3546 = vmatpush1.msra.mxu0 0.0
    %3547 = vmatprep.subr.mxu0 0.0
    %3548 = vmatpush1.msra.mxu0 0.0
    %3549 = vmatprep.subr.mxu0 0.0
    %3550 = vmatpush1.msra.mxu0 0.0
    %3551 = vmatprep.subr.mxu0 0.0
    %3552 = vmatpush1.msra.mxu0 0.0
    %3553 = vmatprep.subr.mxu0 0.0
    %3554 = vmatpush1.msra.mxu0 0.0
    %3555 = vmatprep.subr.mxu0 0.0
    %3556 = vmatpush1.msra.mxu0 0.0
    %3557 = vmatprep.subr.mxu0 0.0
    %3558 = vmatpush1.msra.mxu0 0.0
    %3559 = vmatprep.subr.mxu0 0.0
    %3560 = vmatpush1.msra.mxu0 0.0
    %3561 = vmatprep.subr.mxu0 0.0
    %3562 = vmatpush1.msra.mxu0 0.0
    %3563 = vmatprep.subr.mxu0 0.0
    %3564 = vmatpush1.msra.mxu0 0.0
    %3565 = vmatprep.mubr.f32.mxu0 0.0
    %3566 = vmatmul.mubr.f32.gmra.mrb[0].mxu0 %v3499
    %v3567 = vpop.f32.mrb[0].mxu0
    %v3568 = vadd.f32 0.0, %v3567
    %v3569 = vpop.f32.mrb[0].mxu0
    %3570 = vdwg.mxu0
    %v3571 = vadd.f32 %v3466, %v3568
    %v3572 = vld [vmem:[%s1489] sm:$0x1]
    %v3574 = vlaneseq
    %v3575 = vshrl.u32 %v3574, 7
    %v3576 = vsub.s32 0, %v3575
    %v3577 = vrot.slane %v3572, %v3576
    %3578 = vrot.lane.b32.xlu0 %v3577, 9
    %v3579 = vpop.permute.xlu0 %3578
    %v3581 = vmul.f32 %v3253, %v3579
    %v3582 = vmul.f32 %v3254, %v3579
    %v3583 = vmul.f32 %v3255, %v3579
    %v3584 = vmul.f32 %v3256, %v3579
    %s3585 = scalar_lea.vmem %s7, 32
    %v3586 = vld [vmem:[%s3585] sm:$0xf]
    %3591 = vrot.lane.b32.xlu0 %v3581, 119
    %v3592 = vpop.permute.xlu0 %3591
    %3593 = vrot.lane.b32.xlu0 %v3582, 119
    %v3594 = vpop.permute.xlu0 %3593
    %3595 = vrot.lane.b32.xlu0 %v3583, 119
    %v3596 = vpop.permute.xlu0 %3595
    %3597 = vrot.lane.b32.xlu0 %v3584, 119
    %v3598 = vpop.permute.xlu0 %3597
    %v3599 = vsel %vm1518, %v3592, %v3594
    %v3600 = vsel %vm1518, %v3596, %v3598
    %v3604 = vsel %vm634, %v3586, 0
    %3606 = vmatprep.subr.mxu0 0.0
    %3607 = vmatpush1.msra.mxu0 %v3599
    %3608 = vmatprep.subr.mxu0 0.0
    %3609 = vmatpush1.msra.mxu0 %v3600
    %3610 = vmatprep.subr.mxu0 0.0
    %3611 = vmatpush1.msra.mxu0 0.0
    %3612 = vmatprep.subr.mxu0 0.0
    %3613 = vmatpush1.msra.mxu0 0.0
    %3614 = vmatprep.subr.mxu0 0.0
    %3615 = vmatpush1.msra.mxu0 0.0
    %3616 = vmatprep.subr.mxu0 0.0
    %3617 = vmatpush1.msra.mxu0 0.0
    %3618 = vmatprep.subr.mxu0 0.0
    %3619 = vmatpush1.msra.mxu0 0.0
    %3620 = vmatprep.subr.mxu0 0.0
    %3621 = vmatpush1.msra.mxu0 0.0
    %3622 = vmatprep.subr.mxu0 0.0
    %3623 = vmatpush1.msra.mxu0 0.0
    %3624 = vmatprep.subr.mxu0 0.0
    %3625 = vmatpush1.msra.mxu0 0.0
    %3626 = vmatprep.subr.mxu0 0.0
    %3627 = vmatpush1.msra.mxu0 0.0
    %3628 = vmatprep.subr.mxu0 0.0
    %3629 = vmatpush1.msra.mxu0 0.0
    %3630 = vmatprep.subr.mxu0 0.0
    %3631 = vmatpush1.msra.mxu0 0.0
    %3632 = vmatprep.subr.mxu0 0.0
    %3633 = vmatpush1.msra.mxu0 0.0
    %3634 = vmatprep.subr.mxu0 0.0
    %3635 = vmatpush1.msra.mxu0 0.0
    %3636 = vmatprep.subr.mxu0 0.0
    %3637 = vmatpush1.msra.mxu0 0.0
    %3638 = vmatprep.subr.mxu0 0.0
    %3639 = vmatpush1.msra.mxu0 0.0
    %3640 = vmatprep.subr.mxu0 0.0
    %3641 = vmatpush1.msra.mxu0 0.0
    %3642 = vmatprep.subr.mxu0 0.0
    %3643 = vmatpush1.msra.mxu0 0.0
    %3644 = vmatprep.subr.mxu0 0.0
    %3645 = vmatpush1.msra.mxu0 0.0
    %3646 = vmatprep.subr.mxu0 0.0
    %3647 = vmatpush1.msra.mxu0 0.0
    %3648 = vmatprep.subr.mxu0 0.0
    %3649 = vmatpush1.msra.mxu0 0.0
    %3650 = vmatprep.subr.mxu0 0.0
    %3651 = vmatpush1.msra.mxu0 0.0
    %3652 = vmatprep.subr.mxu0 0.0
    %3653 = vmatpush1.msra.mxu0 0.0
    %3654 = vmatprep.subr.mxu0 0.0
    %3655 = vmatpush1.msra.mxu0 0.0
    %3656 = vmatprep.subr.mxu0 0.0
    %3657 = vmatpush1.msra.mxu0 0.0
    %3658 = vmatprep.subr.mxu0 0.0
    %3659 = vmatpush1.msra.mxu0 0.0
    %3660 = vmatprep.subr.mxu0 0.0
    %3661 = vmatpush1.msra.mxu0 0.0
    %3662 = vmatprep.subr.mxu0 0.0
    %3663 = vmatpush1.msra.mxu0 0.0
    %3664 = vmatprep.subr.mxu0 0.0
    %3665 = vmatpush1.msra.mxu0 0.0
    %3666 = vmatprep.subr.mxu0 0.0
    %3667 = vmatpush1.msra.mxu0 0.0
    %3668 = vmatprep.subr.mxu0 0.0
    %3669 = vmatpush1.msra.mxu0 0.0
    %3670 = vmatprep.mubr.f32.mxu0 0.0
    %3671 = vmatmul.mubr.f32.gmra.mrb[0].mxu0 %v3604
    %v3672 = vpop.f32.mrb[0].mxu0
    %v3673 = vadd.f32 0.0, %v3672
    %v3674 = vpop.f32.mrb[0].mxu0
    %3675 = vdwg.mxu0
    %v3676 = vadd.f32 %v3571, %v3673
    %v3677 = vld [vmem:[%s8] sm:$0xf]
    %3679 = vset.pattern.permute.xlu0 0
    %3680 = vperm.xlu0 %3679, %v3677
    %v3681 = vpop.permute.xlu0 %3680
    %v3683 = vadd.f32 %v3676, %v3681
    %3684 = vst [vmem:[%s10] sm:$0xf] %v3683
    // Predicated region
    $region54: #{decoder_forward.1} parent=1 // pred_check
      _
    $region55: #{decoder_forward.1} parent=1 // pred_check_branch
      %3686 = sbr.rel (0) target = $region57
    $region56: #{decoder_forward.1} parent=1 // pred_region
      _
    $region57: #{decoder_forward.1} parent=1 // pred_fallthru
      _
    // Predicated region
    $region58: #{decoder_forward.1} parent=1 // pred_check
      _
    $region59: #{decoder_forward.1} parent=1 // pred_check_branch
      %3688 = sbr.rel (0) target = $region61
    $region60: #{decoder_forward.1} parent=1 // pred_region
      _
    $region61: #{decoder_forward.1} parent=1 // pred_fallthru
      _
    %3689 = vsyncpa [#allocation4], 1
    %3690 = vsyncpa [#allocation8], 1
    %3691 = vsyncpa [#allocation5], 1

</llo_original>
